<compile_context>
chip_gen: v5e
topology: v5e:2x2
jax: 0.10.0
libtpu: 0.0.40
codegen_flags: <defaults>
</compile_context>

<pallas_src>
import functools

import numpy as np
import jax
import jax.numpy as jnp
from jax.experimental import pallas as pl
from jax.experimental.pallas import tpu as pltpu


# ----------------------------- the fused kernel -----------------------------

def _osblock_kernel(x_ref, wcds_ref, sh1_ref, shds_ref,
                    Bw_ref, shdw_ref,
                    gw1_ref, gb1_ref, gw2_ref, gb2_ref,
                    wc3_ref, pool_ref, gamma_ref, beta_ref,
                    o_ref, *, T, H, WCm, eps):
    f32 = jnp.float32
    x = x_ref[0]                                         # (H, W*Cin), lane-dense

    # conv1 (1x1 + folded BN + ReLU) and downsample (1x1 + folded BN) fused:
    # one matmul over the shared input, then a vreg-aligned lane split.
    xw = jnp.dot(x, wcds_ref[...], preferred_element_type=f32)   # (H, WCm + WCo)
    x1 = jnp.maximum(xw[:, :WCm] + sh1_ref[...], 0.0)            # (H, WCm)
    idn = xw[:, WCm:] + shds_ref[...]                            # (H, WCo)

    gw1 = gw1_ref[...]                                   # (Cr, W*mid)  (GAP 1/HW folded in)
    gb1 = gb1_ref[...]                                   # (Cr, 1)
    gw2 = gw2_ref[...]                                   # (Cr, W*mid)
    gb2 = gb2_ref[...]                                   # (1,  W*mid)
    zrow = jnp.zeros((1, WCm), f32)                      # zero halo row (hoisted)

    # T multi-scale streams; shared ChannelGate; accumulator lives in registers.
    acc = jnp.zeros_like(x1)
    li = 0
    for t in range(1, T + 1):
        h = x1
        for _ in range(t):
            # Fused LightConv3x3 (1x1 pw -> dw 3x3 -> BN -> ReLU):
            # one matmul yields the three vertical-tap partials; the vertical
            # halo is a cheap sublane shift with zero edge padding (no MXU).
            z = jnp.dot(h, Bw_ref[li], preferred_element_type=f32)   # (H, 3*WCm)
            zt = z[:, :WCm]              # kh = 0 tap -> rows shifted down
            zm = z[:, WCm:2 * WCm]       # kh = 1 (center)
            zb = z[:, 2 * WCm:]          # kh = 2 tap -> rows shifted up
            y = (zm
                 + jnp.concatenate([zrow, zt[:H - 1, :]], axis=0)
                 + jnp.concatenate([zb[1:, :], zrow], axis=0))
            h = jnp.maximum(y + shdw_ref[li:li + 1, :], 0.0)         # BN shift + ReLU
            li += 1
        # ChannelGate: GAP -> fc1 -> ReLU -> fc2 -> sigmoid -> scale the stream.
        pooled = jnp.sum(h, axis=0, keepdims=True)                   # (1, W*mid)
        v1 = jnp.maximum(jnp.sum(pooled * gw1, axis=1, keepdims=True) + gb1, 0.0)
        g = jax.nn.sigmoid(jnp.sum(v1 * gw2, axis=0, keepdims=True) + gb2)
        acc = acc + h * g

    # conv3 (1x1, no BN)
    x3 = jnp.dot(acc, wc3_ref[...], preferred_element_type=f32)      # (H, W*cout)

    # InstanceNorm2d(affine): one-pass E[x], E[x^2]; both pooled with ONE matmul.
    srow = jnp.sum(x3, axis=0, keepdims=True)                        # (1, W*cout)
    sq = jnp.sum(x3 * x3, axis=0, keepdims=True)                     # (1, W*cout)
    stats = jnp.dot(jnp.concatenate([srow, sq], axis=0), pool_ref[...],
                    preferred_element_type=f32)                      # (2, W*cout)
    m = stats[0:1, :]
    var = stats[1:2, :] - m * m
    y = (x3 - m) * jax.lax.rsqrt(var + eps)
    y = y * gamma_ref[...] + beta_ref[...]
    o_ref[0] = jnp.maximum(y + idn, 0.0)                             # residual + ReLU


# ----------------------------- host-side weight folding -----------------------------

def prepare_lane_params(P, H, W, Cin, mid, cout, T):
    """Fold BN + re-layout all weights into lane-dense / block-banded form (done once)."""
    f = lambda a: np.asarray(a, np.float32)
    eyeW = np.eye(W, dtype=np.float32)
    hw = float(H * W)

    # conv1 and downsample share the input: fuse column-wise into one weight slab.
    wc1 = np.kron(eyeW, f(P['conv1']['w']) * f(P['conv1']['scale']))     # (W*Cin, W*mid)
    wds = np.kron(eyeW, f(P['ds']['w']) * f(P['ds']['scale']))           # (W*Cin, W*cout)
    wcds = np.concatenate([wc1, wds], axis=1)                            # (W*Cin, W*(mid+cout))
    sh1 = np.tile(f(P['conv1']['shift']).reshape(-1), W)[None, :]        # (1, W*mid)
    shds = np.tile(f(P['ds']['shift']).reshape(-1), W)[None, :]          # (1, W*cout)

    # Each LightConv3x3: pw(1x1) + dw(3x3) + BN scale -> three banded (W*mid, W*mid)
    # matrices (one per vertical tap), concatenated column-wise -> one matmul/layer.
    Bs, shdw = [], []
    for stream in P['streams']:
        for layer in stream:
            wpw = f(layer['pw_w'])                        # (mid, mid)  [ci, c]
            taps = f(layer['dw_w']).reshape(3, 3, mid)    # (kh, kw, c)
            sc = f(layer['scale']).reshape(-1)            # (mid,)
            per_kh = []
            for kh in range(3):
                Bk = np.zeros((W * mid, W * mid), np.float32)
                for kw in range(3):
                    shift = np.eye(W, k=1 - kw, dtype=np.float32)   # w_in = w_out + (kw-1)
                    Bk += np.kron(shift, wpw * (taps[kh, kw] * sc)[None, :])
                per_kh.append(Bk)
            Bs.append(np.concatenate(per_kh, axis=1))     # (W*mid, 3*W*mid)
            shdw.append(np.tile(f(layer['shift']).reshape(-1), W))
    Bw = np.stack(Bs)                                    # (n_layers, W*mid, 3*W*mid)
    shdw = np.stack(shdw)                                # (n_layers, W*mid)

    # ChannelGate: fold GAP (1/HW) into fc1; lane-tile fc2 and biases.
    gw1 = np.tile(f(P['gate']['w1']), (1, W)) / hw       # (Cr, W*mid)
    gb1 = f(P['gate']['b1']).reshape(-1, 1)              # (Cr, 1)
    gw2 = np.tile(f(P['gate']['w2']), (1, W))            # (Cr, W*mid)
    gb2 = np.tile(f(P['gate']['b2']).reshape(-1), W)[None, :]   # (1, W*mid)

    # conv3, InstanceNorm channel-pooling matrix + affine params.
    wc3 = np.kron(eyeW, f(P['conv3']['w']))                              # (W*mid, W*cout)
    pool = np.kron(np.ones((W, W), np.float32), np.eye(cout, dtype=np.float32)) / hw
    gamma = np.tile(f(P['in']['gamma']).reshape(-1), W)[None, :]
    beta = np.tile(f(P['in']['beta']).reshape(-1), W)[None, :]

    as_j = jnp.asarray
    return dict(wcds=as_j(wcds), sh1=as_j(sh1), shds=as_j(shds),
                Bw=as_j(Bw), shdw=as_j(shdw),
                gw1=as_j(gw1), gb1=as_j(gb1), gw2=as_j(gw2), gb2=as_j(gb2),
                wc3=as_j(wc3), pool=as_j(pool), gamma=as_j(gamma), beta=as_j(beta))


# ----------------------------- forward wrapper -----------------------------

def osblock_inin_forward(x_nchw, LP, *, T, mid, cout, eps=1e-5):
    N, Cin, H, W = x_nchw.shape
    # NCHW -> lane-dense (N, H, W*Cin); lane index = w*Cin + ci  (layout plumbing only)
    x = jnp.transpose(x_nchw, (0, 2, 3, 1)).reshape(N, H, W * Cin).astype(jnp.float32)
    WCi, WCm, WCo = W * Cin, W * mid, W * cout
    n_layers = LP['shdw'].shape[0]
    cr = LP['gw1'].shape[0]

    out = pl.pallas_call(
        functools.partial(_osblock_kernel, T=T, H=H, WCm=WCm, eps=eps),
        out_shape=jax.ShapeDtypeStruct((N, H, WCo), jnp.float32),
        grid=(N,),
        in_specs=[
            pl.BlockSpec((1, H, WCi), lambda n: (n, 0, 0)),              # x (per sample)
            pl.BlockSpec((WCi, WCm + WCo), lambda n: (0, 0)),            # fused conv1|downsample
            pl.BlockSpec((1, WCm), lambda n: (0, 0)),                    # conv1 BN shift
            pl.BlockSpec((1, WCo), lambda n: (0, 0)),                    # downsample BN shift
            pl.BlockSpec((n_layers, WCm, 3 * WCm), lambda n: (0, 0, 0)),  # fused LightConv weights
            pl.BlockSpec((n_layers, WCm), lambda n: (0, 0)),             # LightConv BN shifts
            pl.BlockSpec((cr, WCm), lambda n: (0, 0)),                   # gate fc1 (folded GAP)
            pl.BlockSpec((cr, 1), lambda n: (0, 0)),                     # gate b1
            pl.BlockSpec((cr, WCm), lambda n: (0, 0)),                   # gate fc2
            pl.BlockSpec((1, WCm), lambda n: (0, 0)),                    # gate b2
            pl.BlockSpec((WCm, WCo), lambda n: (0, 0)),                  # conv3
            pl.BlockSpec((WCo, WCo), lambda n: (0, 0)),                  # IN pooling matrix
            pl.BlockSpec((1, WCo), lambda n: (0, 0)),                    # IN gamma
            pl.BlockSpec((1, WCo), lambda n: (0, 0)),                    # IN beta
        ],
        out_specs=pl.BlockSpec((1, H, WCo), lambda n: (n, 0, 0)),
        compiler_params=pltpu.CompilerParams(dimension_semantics=("parallel",)),
    )(x, LP['wcds'], LP['sh1'], LP['shds'], LP['Bw'], LP['shdw'],
      LP['gw1'], LP['gb1'], LP['gw2'], LP['gb2'],
      LP['wc3'], LP['pool'], LP['gamma'], LP['beta'])

    return jnp.transpose(out.reshape(N, H, W, cout), (0, 3, 1, 2))     # back to NCHW


# ----------------------------- params & pure-JAX reference -----------------------------

def make_params(key, cin, cout, mid, T, cr):
    keys = iter(jax.random.split(key, 256))

    def w(shape, s=0.2):
        return (s * jax.random.normal(next(keys), shape)).astype(jnp.float32)

    def folded_bn(c):
        gamma = 1.0 + 0.1 * jax.random.normal(next(keys), (c,))
        beta = 0.1 * jax.random.normal(next(keys), (c,))
        mu = 0.1 * jax.random.normal(next(keys), (c,))
        var = jax.random.uniform(next(keys), (c,), minval=0.5, maxval=1.5)
        scale = gamma / jnp.sqrt(var + 1e-5)
        shift = beta - mu * scale
        return scale.reshape(1, c).astype(jnp.float32), shift.reshape(1, c).astype(jnp.float32)

    P = {}
    s1, sh1 = folded_bn(mid)
    P['conv1'] = dict(w=w((cin, mid)), scale=s1, shift=sh1)
    streams = []
    for t in range(1, T + 1):
        layers = []
        for _ in range(t):
            s2, sh2 = folded_bn(mid)
            layers.append(dict(pw_w=w((mid, mid)), dw_w=w((9, mid)), scale=s2, shift=sh2))
        streams.append(layers)
    P['streams'] = streams
    P['gate'] = dict(w1=w((cr, mid)), b1=w((cr, 1)), w2=w((cr, mid)), b2=w((1, mid)))
    P['conv3'] = dict(w=w((mid, cout)))
    sd, shd = folded_bn(cout)
    P['ds'] = dict(w=w((cin, cout)), scale=sd, shift=shd)
    P['in'] = dict(gamma=(1.0 + 0.1 * jax.random.normal(next(keys), (1, cout))).astype(jnp.float32),
                   beta=(0.1 * jax.random.normal(next(keys), (1, cout))).astype(jnp.float32))
    return P


def reference_forward(x_nchw, P):
    """Pure-JAX (NHWC) reference mirroring the PyTorch forward semantics."""
    x = jnp.transpose(x_nchw, (0, 2, 3, 1)).astype(jnp.float32)
    identity = x

    def r_pw(h, wt, scale, shift, relu):
        y = jnp.einsum('nhwc,cd->nhwd', h, wt) * scale + shift
        return jnp.maximum(y, 0.0) if relu else y

    def r_dw(h, w9c, scale, shift):
        H, W = h.shape[1], h.shape[2]
        hp = jnp.pad(h, ((0, 0), (1, 1), (1, 1), (0, 0)))
        a = jnp.zeros_like(h)
        for dh in range(3):
            for dw in range(3):
                a = a + hp[:, dh:dh + H, dw:dw + W, :] * w9c[dh * 3 + dw]
        return jnp.maximum(a * scale + shift, 0.0)

    def r_gate(h, gp):
        m = jnp.mean(h, axis=(1, 2))
        v1 = jnp.maximum(m @ gp['w1'].T + gp['b1'][:, 0], 0.0)
        g = jax.nn.sigmoid(v1 @ gp['w2'] + gp['b2'][0])
        return h * g[:, None, None, :]

    x1 = r_pw(x, P['conv1']['w'], P['conv1']['scale'], P['conv1']['shift'], True)
    x2 = jnp.zeros_like(x1)
    for stream in P['streams']:
        h = x1
        for layer in stream:
            h = r_pw(h, layer['pw_w'], 1.0, 0.0, False)
            h = r_dw(h, layer['dw_w'], layer['scale'], layer['shift'])
        x2 = x2 + r_gate(h, P['gate'])
    x3 = jnp.einsum('nhwc,cd->nhwd', x2, P['conv3']['w'])
    idn = r_pw(identity, P['ds']['w'], P['ds']['scale'], P['ds']['shift'], False)
    m = jnp.mean(x3, axis=(1, 2), keepdims=True)
    v = jnp.mean((x3 - m) ** 2, axis=(1, 2), keepdims=True)
    y = (x3 - m) / jnp.sqrt(v + 1e-5) * P['in']['gamma'] + P['in']['beta']
    out = jnp.maximum(y + idn, 0.0)
    return jnp.transpose(out, (0, 3, 1, 2))


# ----------------------------- main -----------------------------

if __name__ == "__main__":
    # OSBlockINin(in_channels=16, out_channels=64, reduction=4, T=4)
    # -> mid_channels = 16, ChannelGate(reduction=16) hidden size = 1
    in_channels, out_channels = 16, 64
    reduction, T = 4, 4
    mid = out_channels // reduction
    cr = max(mid // 16, 1)
    H = W = 8                                  # W*mid = 128, W*cout = 512 -> lane-dense

    key = jax.random.PRNGKey(0)
    kx, kp = jax.random.split(key)
    x = jax.random.normal(kx, (2, in_channels, H, W), jnp.float32)   # NCHW like PyTorch
    P = make_params(kp, in_channels, out_channels, mid, T, cr)
    LP = prepare_lane_params(P, H, W, in_channels, mid, out_channels, T)

    fwd = jax.jit(functools.partial(osblock_inin_forward, T=T, mid=mid, cout=out_channels))
    out = jax.block_until_ready(fwd(x, LP))
    assert out.shape == (2, out_channels, H, W)

    ref = reference_forward(x, P)
    np.testing.assert_allclose(np.asarray(out), np.asarray(ref), rtol=2e-3, atol=2e-3)
    print("KERNEL_OK")
</pallas_src>

<mosaic_0001>
module attributes {stable_mosaic.version = 11 : i64} {
  func.func @_osblock_kernel(%arg0: i32, %arg1: memref<1x8x128xf32, #tpu.memory_space<vmem>>, %arg2: memref<128x640xf32, #tpu.memory_space<vmem>>, %arg3: memref<1x128xf32, #tpu.memory_space<vmem>>, %arg4: memref<1x512xf32, #tpu.memory_space<vmem>>, %arg5: memref<10x128x384xf32, #tpu.memory_space<vmem>>, %arg6: memref<10x128xf32, #tpu.memory_space<vmem>>, %arg7: memref<1x128xf32, #tpu.memory_space<vmem>>, %arg8: memref<1x1xf32, #tpu.memory_space<vmem>>, %arg9: memref<1x128xf32, #tpu.memory_space<vmem>>, %arg10: memref<1x128xf32, #tpu.memory_space<vmem>>, %arg11: memref<128x512xf32, #tpu.memory_space<vmem>>, %arg12: memref<512x512xf32, #tpu.memory_space<vmem>>, %arg13: memref<1x512xf32, #tpu.memory_space<vmem>>, %arg14: memref<1x512xf32, #tpu.memory_space<vmem>>, %arg15: memref<1x8x512xf32, #tpu.memory_space<vmem>>) attributes {dimension_semantics = [#tpu.dimension_semantics<parallel>], iteration_bounds = array<i64: 2>, scalar_prefetch = 0 : i64, scratch_operands = 0 : i64, tpu.core_type = #tpu.core_type<tc>, window_params = [{transform_indices = @transform_0, window_bounds = array<i64: 1, 8, 128>}, {pipeline_mode = #tpu.pipeline_mode<synchronous>, transform_indices = @transform_1, window_bounds = array<i64: 128, 640>}, {pipeline_mode = #tpu.pipeline_mode<synchronous>, transform_indices = @transform_2, window_bounds = array<i64: 1, 128>}, {pipeline_mode = #tpu.pipeline_mode<synchronous>, transform_indices = @transform_3, window_bounds = array<i64: 1, 512>}, {pipeline_mode = #tpu.pipeline_mode<synchronous>, transform_indices = @transform_4, window_bounds = array<i64: 10, 128, 384>}, {pipeline_mode = #tpu.pipeline_mode<synchronous>, transform_indices = @transform_5, window_bounds = array<i64: 10, 128>}, {pipeline_mode = #tpu.pipeline_mode<synchronous>, transform_indices = @transform_6, window_bounds = array<i64: 1, 128>}, {pipeline_mode = #tpu.pipeline_mode<synchronous>, transform_indices = @transform_7, window_bounds = array<i64: 1, 1>}, {pipeline_mode = #tpu.pipeline_mode<synchronous>, transform_indices = @transform_8, window_bounds = array<i64: 1, 128>}, {pipeline_mode = #tpu.pipeline_mode<synchronous>, transform_indices = @transform_9, window_bounds = array<i64: 1, 128>}, {pipeline_mode = #tpu.pipeline_mode<synchronous>, transform_indices = @transform_10, window_bounds = array<i64: 128, 512>}, {pipeline_mode = #tpu.pipeline_mode<synchronous>, transform_indices = @transform_11, window_bounds = array<i64: 512, 512>}, {pipeline_mode = #tpu.pipeline_mode<synchronous>, transform_indices = @transform_12, window_bounds = array<i64: 1, 512>}, {pipeline_mode = #tpu.pipeline_mode<synchronous>, transform_indices = @transform_13, window_bounds = array<i64: 1, 512>}, {transform_indices = @transform_14, window_bounds = array<i64: 1, 8, 512>}]} {
    %c0 = arith.constant 0 : index
    %c0_0 = arith.constant 0 : index
    %c0_1 = arith.constant 0 : index
    %0 = vector.load %arg1[%c0, %c0_0, %c0_1] : memref<1x8x128xf32, #tpu.memory_space<vmem>>, vector<1x8x128xf32>
    %1 = vector.shape_cast %0 : vector<1x8x128xf32> to vector<8x128xf32>
    %c0_2 = arith.constant 0 : index
    %c0_3 = arith.constant 0 : index
    %2 = vector.load %arg2[%c0_2, %c0_3] : memref<128x640xf32, #tpu.memory_space<vmem>>, vector<128x640xf32>
    %cst = arith.constant dense<0.000000e+00> : vector<8x640xf32>
    %3 = tpu.matmul %1, %2, %cst {dimension_numbers = #tpu.dot_dimension_numbers<[1], [0], [0], [1], [0, 0, 1, 1], [], []>} : vector<8x128xf32>, vector<128x640xf32>, vector<8x640xf32> -> vector<8x640xf32>
    %4 = vector.extract_strided_slice %3 {offsets = [0, 0], sizes = [8, 128], strides = [1, 1]} : vector<8x640xf32> to vector<8x128xf32>
    %c0_4 = arith.constant 0 : index
    %c0_5 = arith.constant 0 : index
    %5 = vector.load %arg3[%c0_4, %c0_5] : memref<1x128xf32, #tpu.memory_space<vmem>>, vector<1x128xf32>
    %6 = vector.broadcast %5 : vector<1x128xf32> to vector<8x128xf32>
    %7 = arith.addf %4, %6 : vector<8x128xf32>
    %cst_6 = arith.constant 0.000000e+00 : f32
    %8 = vector.broadcast %cst_6 : f32 to vector<8x128xf32>
    %9 = arith.maximumf %7, %8 : vector<8x128xf32>
    %10 = vector.extract_strided_slice %3 {offsets = [0, 128], sizes = [8, 512], strides = [1, 1]} : vector<8x640xf32> to vector<8x512xf32>
    %c0_7 = arith.constant 0 : index
    %c0_8 = arith.constant 0 : index
    %11 = vector.load %arg4[%c0_7, %c0_8] : memref<1x512xf32, #tpu.memory_space<vmem>>, vector<1x512xf32>
    %12 = vector.broadcast %11 : vector<1x512xf32> to vector<8x512xf32>
    %13 = arith.addf %10, %12 : vector<8x512xf32>
    %c0_9 = arith.constant 0 : index
    %c0_10 = arith.constant 0 : index
    %14 = vector.load %arg7[%c0_9, %c0_10] : memref<1x128xf32, #tpu.memory_space<vmem>>, vector<1x128xf32>
    %c0_11 = arith.constant 0 : index
    %c0_12 = arith.constant 0 : index
    %15 = vector.load %arg8[%c0_11, %c0_12] : memref<1x1xf32, #tpu.memory_space<vmem>>, vector<1x1xf32>
    %c0_13 = arith.constant 0 : index
    %c0_14 = arith.constant 0 : index
    %16 = vector.load %arg9[%c0_13, %c0_14] : memref<1x128xf32, #tpu.memory_space<vmem>>, vector<1x128xf32>
    %c0_15 = arith.constant 0 : index
    %c0_16 = arith.constant 0 : index
    %17 = vector.load %arg10[%c0_15, %c0_16] : memref<1x128xf32, #tpu.memory_space<vmem>>, vector<1x128xf32>
    %cst_17 = arith.constant 0.000000e+00 : f32
    %18 = vector.broadcast %cst_17 : f32 to vector<1x128xf32>
    %cst_18 = arith.constant 0.000000e+00 : f32
    %19 = vector.broadcast %cst_18 : f32 to vector<8x128xf32>
    %c0_19 = arith.constant 0 : index
    %c0_20 = arith.constant 0 : index
    %c0_21 = arith.constant 0 : index
    %20 = vector.load %arg5[%c0_19, %c0_20, %c0_21] : memref<10x128x384xf32, #tpu.memory_space<vmem>>, vector<1x128x384xf32>
    %21 = vector.shape_cast %20 : vector<1x128x384xf32> to vector<128x384xf32>
    %cst_22 = arith.constant dense<0.000000e+00> : vector<8x384xf32>
    %22 = tpu.matmul %9, %21, %cst_22 {dimension_numbers = #tpu.dot_dimension_numbers<[1], [0], [0], [1], [0, 0, 1, 1], [], []>} : vector<8x128xf32>, vector<128x384xf32>, vector<8x384xf32> -> vector<8x384xf32>
    %23 = vector.extract_strided_slice %22 {offsets = [0, 0], sizes = [8, 128], strides = [1, 1]} : vector<8x384xf32> to vector<8x128xf32>
    %24 = vector.extract_strided_slice %22 {offsets = [0, 128], sizes = [8, 128], strides = [1, 1]} : vector<8x384xf32> to vector<8x128xf32>
    %25 = vector.extract_strided_slice %22 {offsets = [0, 256], sizes = [8, 128], strides = [1, 1]} : vector<8x384xf32> to vector<8x128xf32>
    %26 = vector.extract_strided_slice %23 {offsets = [0, 0], sizes = [7, 128], strides = [1, 1]} : vector<8x128xf32> to vector<7x128xf32>
    %27 = tpu.concatenate %18, %26 in 0 : vector<1x128xf32>, vector<7x128xf32> -> vector<8x128xf32>
    %28 = arith.addf %24, %27 : vector<8x128xf32>
    %29 = vector.extract_strided_slice %25 {offsets = [1, 0], sizes = [7, 128], strides = [1, 1]} : vector<8x128xf32> to vector<7x128xf32>
    %30 = tpu.concatenate %29, %18 in 0 : vector<7x128xf32>, vector<1x128xf32> -> vector<8x128xf32>
    %31 = arith.addf %28, %30 : vector<8x128xf32>
    %c0_23 = arith.constant 0 : index
    %c0_24 = arith.constant 0 : index
    %32 = vector.load %arg6[%c0_23, %c0_24] : memref<10x128xf32, #tpu.memory_space<vmem>>, vector<1x128xf32>
    %33 = vector.broadcast %32 : vector<1x128xf32> to vector<8x128xf32>
    %34 = arith.addf %31, %33 : vector<8x128xf32>
    %cst_25 = arith.constant 0.000000e+00 : f32
    %35 = vector.broadcast %cst_25 : f32 to vector<8x128xf32>
    %36 = arith.maximumf %34, %35 : vector<8x128xf32>
    %cst_26 = arith.constant dense<0.000000e+00> : vector<128xf32>
    %37 = vector.multi_reduction <add>, %36, %cst_26 [0] : vector<8x128xf32> to vector<128xf32>
    %38 = vector.shape_cast %37 : vector<128xf32> to vector<1x128xf32>
    %39 = arith.mulf %38, %14 : vector<1x128xf32>
    %cst_27 = arith.constant dense<0.000000e+00> : vector<1xf32>
    %40 = vector.multi_reduction <add>, %39, %cst_27 [1] : vector<1x128xf32> to vector<1xf32>
    %41 = vector.shape_cast %40 : vector<1xf32> to vector<1x1xf32>
    %42 = arith.addf %41, %15 : vector<1x1xf32>
    %cst_28 = arith.constant 0.000000e+00 : f32
    %43 = vector.broadcast %cst_28 : f32 to vector<1x1xf32>
    %44 = arith.maximumf %42, %43 : vector<1x1xf32>
    %45 = vector.broadcast %44 : vector<1x1xf32> to vector<1x128xf32>
    %46 = arith.mulf %45, %16 : vector<1x128xf32>
    %cst_29 = arith.constant dense<0.000000e+00> : vector<128xf32>
    %47 = vector.multi_reduction <add>, %46, %cst_29 [0] : vector<1x128xf32> to vector<128xf32>
    %48 = vector.shape_cast %47 : vector<128xf32> to vector<1x128xf32>
    %49 = arith.addf %48, %17 : vector<1x128xf32>
    %50 = arith.negf %49 : vector<1x128xf32>
    %51 = math.exp %50 : vector<1x128xf32>
    %cst_30 = arith.constant 1.000000e+00 : f32
    %52 = vector.broadcast %cst_30 : f32 to vector<1x128xf32>
    %53 = arith.addf %52, %51 : vector<1x128xf32>
    %54 = arith.divf %52, %53 : vector<1x128xf32>
    %55 = vector.broadcast %54 : vector<1x128xf32> to vector<8x128xf32>
    %56 = arith.mulf %36, %55 : vector<8x128xf32>
    %57 = arith.addf %19, %56 : vector<8x128xf32>
    %c1 = arith.constant 1 : index
    %c0_31 = arith.constant 0 : index
    %c0_32 = arith.constant 0 : index
    %58 = vector.load %arg5[%c1, %c0_31, %c0_32] : memref<10x128x384xf32, #tpu.memory_space<vmem>>, vector<1x128x384xf32>
    %59 = vector.shape_cast %58 : vector<1x128x384xf32> to vector<128x384xf32>
    %cst_33 = arith.constant dense<0.000000e+00> : vector<8x384xf32>
    %60 = tpu.matmul %9, %59, %cst_33 {dimension_numbers = #tpu.dot_dimension_numbers<[1], [0], [0], [1], [0, 0, 1, 1], [], []>} : vector<8x128xf32>, vector<128x384xf32>, vector<8x384xf32> -> vector<8x384xf32>
    %61 = vector.extract_strided_slice %60 {offsets = [0, 0], sizes = [8, 128], strides = [1, 1]} : vector<8x384xf32> to vector<8x128xf32>
    %62 = vector.extract_strided_slice %60 {offsets = [0, 128], sizes = [8, 128], strides = [1, 1]} : vector<8x384xf32> to vector<8x128xf32>
    %63 = vector.extract_strided_slice %60 {offsets = [0, 256], sizes = [8, 128], strides = [1, 1]} : vector<8x384xf32> to vector<8x128xf32>
    %64 = vector.extract_strided_slice %61 {offsets = [0, 0], sizes = [7, 128], strides = [1, 1]} : vector<8x128xf32> to vector<7x128xf32>
    %65 = tpu.concatenate %18, %64 in 0 : vector<1x128xf32>, vector<7x128xf32> -> vector<8x128xf32>
    %66 = arith.addf %62, %65 : vector<8x128xf32>
    %67 = vector.extract_strided_slice %63 {offsets = [1, 0], sizes = [7, 128], strides = [1, 1]} : vector<8x128xf32> to vector<7x128xf32>
    %68 = tpu.concatenate %67, %18 in 0 : vector<7x128xf32>, vector<1x128xf32> -> vector<8x128xf32>
    %69 = arith.addf %66, %68 : vector<8x128xf32>
    %c1_34 = arith.constant 1 : index
    %c0_35 = arith.constant 0 : index
    %70 = vector.load %arg6[%c1_34, %c0_35] : memref<10x128xf32, #tpu.memory_space<vmem>>, vector<1x128xf32>
    %71 = vector.broadcast %70 : vector<1x128xf32> to vector<8x128xf32>
    %72 = arith.addf %69, %71 : vector<8x128xf32>
    %cst_36 = arith.constant 0.000000e+00 : f32
    %73 = vector.broadcast %cst_36 : f32 to vector<8x128xf32>
    %74 = arith.maximumf %72, %73 : vector<8x128xf32>
    %c2 = arith.constant 2 : index
    %c0_37 = arith.constant 0 : index
    %c0_38 = arith.constant 0 : index
    %75 = vector.load %arg5[%c2, %c0_37, %c0_38] : memref<10x128x384xf32, #tpu.memory_space<vmem>>, vector<1x128x384xf32>
    %76 = vector.shape_cast %75 : vector<1x128x384xf32> to vector<128x384xf32>
    %cst_39 = arith.constant dense<0.000000e+00> : vector<8x384xf32>
    %77 = tpu.matmul %74, %76, %cst_39 {dimension_numbers = #tpu.dot_dimension_numbers<[1], [0], [0], [1], [0, 0, 1, 1], [], []>} : vector<8x128xf32>, vector<128x384xf32>, vector<8x384xf32> -> vector<8x384xf32>
    %78 = vector.extract_strided_slice %77 {offsets = [0, 0], sizes = [8, 128], strides = [1, 1]} : vector<8x384xf32> to vector<8x128xf32>
    %79 = vector.extract_strided_slice %77 {offsets = [0, 128], sizes = [8, 128], strides = [1, 1]} : vector<8x384xf32> to vector<8x128xf32>
    %80 = vector.extract_strided_slice %77 {offsets = [0, 256], sizes = [8, 128], strides = [1, 1]} : vector<8x384xf32> to vector<8x128xf32>
    %81 = vector.extract_strided_slice %78 {offsets = [0, 0], sizes = [7, 128], strides = [1, 1]} : vector<8x128xf32> to vector<7x128xf32>
    %82 = tpu.concatenate %18, %81 in 0 : vector<1x128xf32>, vector<7x128xf32> -> vector<8x128xf32>
    %83 = arith.addf %79, %82 : vector<8x128xf32>
    %84 = vector.extract_strided_slice %80 {offsets = [1, 0], sizes = [7, 128], strides = [1, 1]} : vector<8x128xf32> to vector<7x128xf32>
    %85 = tpu.concatenate %84, %18 in 0 : vector<7x128xf32>, vector<1x128xf32> -> vector<8x128xf32>
    %86 = arith.addf %83, %85 : vector<8x128xf32>
    %c2_40 = arith.constant 2 : index
    %c0_41 = arith.constant 0 : index
    %87 = vector.load %arg6[%c2_40, %c0_41] : memref<10x128xf32, #tpu.memory_space<vmem>>, vector<1x128xf32>
    %88 = vector.broadcast %87 : vector<1x128xf32> to vector<8x128xf32>
    %89 = arith.addf %86, %88 : vector<8x128xf32>
    %cst_42 = arith.constant 0.000000e+00 : f32
    %90 = vector.broadcast %cst_42 : f32 to vector<8x128xf32>
    %91 = arith.maximumf %89, %90 : vector<8x128xf32>
    %cst_43 = arith.constant dense<0.000000e+00> : vector<128xf32>
    %92 = vector.multi_reduction <add>, %91, %cst_43 [0] : vector<8x128xf32> to vector<128xf32>
    %93 = vector.shape_cast %92 : vector<128xf32> to vector<1x128xf32>
    %94 = arith.mulf %93, %14 : vector<1x128xf32>
    %cst_44 = arith.constant dense<0.000000e+00> : vector<1xf32>
    %95 = vector.multi_reduction <add>, %94, %cst_44 [1] : vector<1x128xf32> to vector<1xf32>
    %96 = vector.shape_cast %95 : vector<1xf32> to vector<1x1xf32>
    %97 = arith.addf %96, %15 : vector<1x1xf32>
    %cst_45 = arith.constant 0.000000e+00 : f32
    %98 = vector.broadcast %cst_45 : f32 to vector<1x1xf32>
    %99 = arith.maximumf %97, %98 : vector<1x1xf32>
    %100 = vector.broadcast %99 : vector<1x1xf32> to vector<1x128xf32>
    %101 = arith.mulf %100, %16 : vector<1x128xf32>
    %cst_46 = arith.constant dense<0.000000e+00> : vector<128xf32>
    %102 = vector.multi_reduction <add>, %101, %cst_46 [0] : vector<1x128xf32> to vector<128xf32>
    %103 = vector.shape_cast %102 : vector<128xf32> to vector<1x128xf32>
    %104 = arith.addf %103, %17 : vector<1x128xf32>
    %105 = arith.negf %104 : vector<1x128xf32>
    %106 = math.exp %105 : vector<1x128xf32>
    %cst_47 = arith.constant 1.000000e+00 : f32
    %107 = vector.broadcast %cst_47 : f32 to vector<1x128xf32>
    %108 = arith.addf %107, %106 : vector<1x128xf32>
    %109 = arith.divf %107, %108 : vector<1x128xf32>
    %110 = vector.broadcast %109 : vector<1x128xf32> to vector<8x128xf32>
    %111 = arith.mulf %91, %110 : vector<8x128xf32>
    %112 = arith.addf %57, %111 : vector<8x128xf32>
    %c3 = arith.constant 3 : index
    %c0_48 = arith.constant 0 : index
    %c0_49 = arith.constant 0 : index
    %113 = vector.load %arg5[%c3, %c0_48, %c0_49] : memref<10x128x384xf32, #tpu.memory_space<vmem>>, vector<1x128x384xf32>
    %114 = vector.shape_cast %113 : vector<1x128x384xf32> to vector<128x384xf32>
    %cst_50 = arith.constant dense<0.000000e+00> : vector<8x384xf32>
    %115 = tpu.matmul %9, %114, %cst_50 {dimension_numbers = #tpu.dot_dimension_numbers<[1], [0], [0], [1], [0, 0, 1, 1], [], []>} : vector<8x128xf32>, vector<128x384xf32>, vector<8x384xf32> -> vector<8x384xf32>
    %116 = vector.extract_strided_slice %115 {offsets = [0, 0], sizes = [8, 128], strides = [1, 1]} : vector<8x384xf32> to vector<8x128xf32>
    %117 = vector.extract_strided_slice %115 {offsets = [0, 128], sizes = [8, 128], strides = [1, 1]} : vector<8x384xf32> to vector<8x128xf32>
    %118 = vector.extract_strided_slice %115 {offsets = [0, 256], sizes = [8, 128], strides = [1, 1]} : vector<8x384xf32> to vector<8x128xf32>
    %119 = vector.extract_strided_slice %116 {offsets = [0, 0], sizes = [7, 128], strides = [1, 1]} : vector<8x128xf32> to vector<7x128xf32>
    %120 = tpu.concatenate %18, %119 in 0 : vector<1x128xf32>, vector<7x128xf32> -> vector<8x128xf32>
    %121 = arith.addf %117, %120 : vector<8x128xf32>
    %122 = vector.extract_strided_slice %118 {offsets = [1, 0], sizes = [7, 128], strides = [1, 1]} : vector<8x128xf32> to vector<7x128xf32>
    %123 = tpu.concatenate %122, %18 in 0 : vector<7x128xf32>, vector<1x128xf32> -> vector<8x128xf32>
    %124 = arith.addf %121, %123 : vector<8x128xf32>
    %c3_51 = arith.constant 3 : index
    %c0_52 = arith.constant 0 : index
    %125 = vector.load %arg6[%c3_51, %c0_52] : memref<10x128xf32, #tpu.memory_space<vmem>>, vector<1x128xf32>
    %126 = vector.broadcast %125 : vector<1x128xf32> to vector<8x128xf32>
    %127 = arith.addf %124, %126 : vector<8x128xf32>
    %cst_53 = arith.constant 0.000000e+00 : f32
    %128 = vector.broadcast %cst_53 : f32 to vector<8x128xf32>
    %129 = arith.maximumf %127, %128 : vector<8x128xf32>
    %c4 = arith.constant 4 : index
    %c0_54 = arith.constant 0 : index
    %c0_55 = arith.constant 0 : index
    %130 = vector.load %arg5[%c4, %c0_54, %c0_55] : memref<10x128x384xf32, #tpu.memory_space<vmem>>, vector<1x128x384xf32>
    %131 = vector.shape_cast %130 : vector<1x128x384xf32> to vector<128x384xf32>
    %cst_56 = arith.constant dense<0.000000e+00> : vector<8x384xf32>
    %132 = tpu.matmul %129, %131, %cst_56 {dimension_numbers = #tpu.dot_dimension_numbers<[1], [0], [0], [1], [0, 0, 1, 1], [], []>} : vector<8x128xf32>, vector<128x384xf32>, vector<8x384xf32> -> vector<8x384xf32>
    %133 = vector.extract_strided_slice %132 {offsets = [0, 0], sizes = [8, 128], strides = [1, 1]} : vector<8x384xf32> to vector<8x128xf32>
    %134 = vector.extract_strided_slice %132 {offsets = [0, 128], sizes = [8, 128], strides = [1, 1]} : vector<8x384xf32> to vector<8x128xf32>
    %135 = vector.extract_strided_slice %132 {offsets = [0, 256], sizes = [8, 128], strides = [1, 1]} : vector<8x384xf32> to vector<8x128xf32>
    %136 = vector.extract_strided_slice %133 {offsets = [0, 0], sizes = [7, 128], strides = [1, 1]} : vector<8x128xf32> to vector<7x128xf32>
    %137 = tpu.concatenate %18, %136 in 0 : vector<1x128xf32>, vector<7x128xf32> -> vector<8x128xf32>
    %138 = arith.addf %134, %137 : vector<8x128xf32>
    %139 = vector.extract_strided_slice %135 {offsets = [1, 0], sizes = [7, 128], strides = [1, 1]} : vector<8x128xf32> to vector<7x128xf32>
    %140 = tpu.concatenate %139, %18 in 0 : vector<7x128xf32>, vector<1x128xf32> -> vector<8x128xf32>
    %141 = arith.addf %138, %140 : vector<8x128xf32>
    %c4_57 = arith.constant 4 : index
    %c0_58 = arith.constant 0 : index
    %142 = vector.load %arg6[%c4_57, %c0_58] : memref<10x128xf32, #tpu.memory_space<vmem>>, vector<1x128xf32>
    %143 = vector.broadcast %142 : vector<1x128xf32> to vector<8x128xf32>
    %144 = arith.addf %141, %143 : vector<8x128xf32>
    %cst_59 = arith.constant 0.000000e+00 : f32
    %145 = vector.broadcast %cst_59 : f32 to vector<8x128xf32>
    %146 = arith.maximumf %144, %145 : vector<8x128xf32>
    %c5 = arith.constant 5 : index
    %c0_60 = arith.constant 0 : index
    %c0_61 = arith.constant 0 : index
    %147 = vector.load %arg5[%c5, %c0_60, %c0_61] : memref<10x128x384xf32, #tpu.memory_space<vmem>>, vector<1x128x384xf32>
    %148 = vector.shape_cast %147 : vector<1x128x384xf32> to vector<128x384xf32>
    %cst_62 = arith.constant dense<0.000000e+00> : vector<8x384xf32>
    %149 = tpu.matmul %146, %148, %cst_62 {dimension_numbers = #tpu.dot_dimension_numbers<[1], [0], [0], [1], [0, 0, 1, 1], [], []>} : vector<8x128xf32>, vector<128x384xf32>, vector<8x384xf32> -> vector<8x384xf32>
    %150 = vector.extract_strided_slice %149 {offsets = [0, 0], sizes = [8, 128], strides = [1, 1]} : vector<8x384xf32> to vector<8x128xf32>
    %151 = vector.extract_strided_slice %149 {offsets = [0, 128], sizes = [8, 128], strides = [1, 1]} : vector<8x384xf32> to vector<8x128xf32>
    %152 = vector.extract_strided_slice %149 {offsets = [0, 256], sizes = [8, 128], strides = [1, 1]} : vector<8x384xf32> to vector<8x128xf32>
    %153 = vector.extract_strided_slice %150 {offsets = [0, 0], sizes = [7, 128], strides = [1, 1]} : vector<8x128xf32> to vector<7x128xf32>
    %154 = tpu.concatenate %18, %153 in 0 : vector<1x128xf32>, vector<7x128xf32> -> vector<8x128xf32>
    %155 = arith.addf %151, %154 : vector<8x128xf32>
    %156 = vector.extract_strided_slice %152 {offsets = [1, 0], sizes = [7, 128], strides = [1, 1]} : vector<8x128xf32> to vector<7x128xf32>
    %157 = tpu.concatenate %156, %18 in 0 : vector<7x128xf32>, vector<1x128xf32> -> vector<8x128xf32>
    %158 = arith.addf %155, %157 : vector<8x128xf32>
    %c5_63 = arith.constant 5 : index
    %c0_64 = arith.constant 0 : index
    %159 = vector.load %arg6[%c5_63, %c0_64] : memref<10x128xf32, #tpu.memory_space<vmem>>, vector<1x128xf32>
    %160 = vector.broadcast %159 : vector<1x128xf32> to vector<8x128xf32>
    %161 = arith.addf %158, %160 : vector<8x128xf32>
    %cst_65 = arith.constant 0.000000e+00 : f32
    %162 = vector.broadcast %cst_65 : f32 to vector<8x128xf32>
    %163 = arith.maximumf %161, %162 : vector<8x128xf32>
    %cst_66 = arith.constant dense<0.000000e+00> : vector<128xf32>
    %164 = vector.multi_reduction <add>, %163, %cst_66 [0] : vector<8x128xf32> to vector<128xf32>
    %165 = vector.shape_cast %164 : vector<128xf32> to vector<1x128xf32>
    %166 = arith.mulf %165, %14 : vector<1x128xf32>
    %cst_67 = arith.constant dense<0.000000e+00> : vector<1xf32>
    %167 = vector.multi_reduction <add>, %166, %cst_67 [1] : vector<1x128xf32> to vector<1xf32>
    %168 = vector.shape_cast %167 : vector<1xf32> to vector<1x1xf32>
    %169 = arith.addf %168, %15 : vector<1x1xf32>
    %cst_68 = arith.constant 0.000000e+00 : f32
    %170 = vector.broadcast %cst_68 : f32 to vector<1x1xf32>
    %171 = arith.maximumf %169, %170 : vector<1x1xf32>
    %172 = vector.broadcast %171 : vector<1x1xf32> to vector<1x128xf32>
    %173 = arith.mulf %172, %16 : vector<1x128xf32>
    %cst_69 = arith.constant dense<0.000000e+00> : vector<128xf32>
    %174 = vector.multi_reduction <add>, %173, %cst_69 [0] : vector<1x128xf32> to vector<128xf32>
    %175 = vector.shape_cast %174 : vector<128xf32> to vector<1x128xf32>
    %176 = arith.addf %175, %17 : vector<1x128xf32>
    %177 = arith.negf %176 : vector<1x128xf32>
    %178 = math.exp %177 : vector<1x128xf32>
    %cst_70 = arith.constant 1.000000e+00 : f32
    %179 = vector.broadcast %cst_70 : f32 to vector<1x128xf32>
    %180 = arith.addf %179, %178 : vector<1x128xf32>
    %181 = arith.divf %179, %180 : vector<1x128xf32>
    %182 = vector.broadcast %181 : vector<1x128xf32> to vector<8x128xf32>
    %183 = arith.mulf %163, %182 : vector<8x128xf32>
    %184 = arith.addf %112, %183 : vector<8x128xf32>
    %c6 = arith.constant 6 : index
    %c0_71 = arith.constant 0 : index
    %c0_72 = arith.constant 0 : index
    %185 = vector.load %arg5[%c6, %c0_71, %c0_72] : memref<10x128x384xf32, #tpu.memory_space<vmem>>, vector<1x128x384xf32>
    %186 = vector.shape_cast %185 : vector<1x128x384xf32> to vector<128x384xf32>
    %cst_73 = arith.constant dense<0.000000e+00> : vector<8x384xf32>
    %187 = tpu.matmul %9, %186, %cst_73 {dimension_numbers = #tpu.dot_dimension_numbers<[1], [0], [0], [1], [0, 0, 1, 1], [], []>} : vector<8x128xf32>, vector<128x384xf32>, vector<8x384xf32> -> vector<8x384xf32>
    %188 = vector.extract_strided_slice %187 {offsets = [0, 0], sizes = [8, 128], strides = [1, 1]} : vector<8x384xf32> to vector<8x128xf32>
    %189 = vector.extract_strided_slice %187 {offsets = [0, 128], sizes = [8, 128], strides = [1, 1]} : vector<8x384xf32> to vector<8x128xf32>
    %190 = vector.extract_strided_slice %187 {offsets = [0, 256], sizes = [8, 128], strides = [1, 1]} : vector<8x384xf32> to vector<8x128xf32>
    %191 = vector.extract_strided_slice %188 {offsets = [0, 0], sizes = [7, 128], strides = [1, 1]} : vector<8x128xf32> to vector<7x128xf32>
    %192 = tpu.concatenate %18, %191 in 0 : vector<1x128xf32>, vector<7x128xf32> -> vector<8x128xf32>
    %193 = arith.addf %189, %192 : vector<8x128xf32>
    %194 = vector.extract_strided_slice %190 {offsets = [1, 0], sizes = [7, 128], strides = [1, 1]} : vector<8x128xf32> to vector<7x128xf32>
    %195 = tpu.concatenate %194, %18 in 0 : vector<7x128xf32>, vector<1x128xf32> -> vector<8x128xf32>
    %196 = arith.addf %193, %195 : vector<8x128xf32>
    %c6_74 = arith.constant 6 : index
    %c0_75 = arith.constant 0 : index
    %197 = vector.load %arg6[%c6_74, %c0_75] : memref<10x128xf32, #tpu.memory_space<vmem>>, vector<1x128xf32>
    %198 = vector.broadcast %197 : vector<1x128xf32> to vector<8x128xf32>
    %199 = arith.addf %196, %198 : vector<8x128xf32>
    %cst_76 = arith.constant 0.000000e+00 : f32
    %200 = vector.broadcast %cst_76 : f32 to vector<8x128xf32>
    %201 = arith.maximumf %199, %200 : vector<8x128xf32>
    %c7 = arith.constant 7 : index
    %c0_77 = arith.constant 0 : index
    %c0_78 = arith.constant 0 : index
    %202 = vector.load %arg5[%c7, %c0_77, %c0_78] : memref<10x128x384xf32, #tpu.memory_space<vmem>>, vector<1x128x384xf32>
    %203 = vector.shape_cast %202 : vector<1x128x384xf32> to vector<128x384xf32>
    %cst_79 = arith.constant dense<0.000000e+00> : vector<8x384xf32>
    %204 = tpu.matmul %201, %203, %cst_79 {dimension_numbers = #tpu.dot_dimension_numbers<[1], [0], [0], [1], [0, 0, 1, 1], [], []>} : vector<8x128xf32>, vector<128x384xf32>, vector<8x384xf32> -> vector<8x384xf32>
    %205 = vector.extract_strided_slice %204 {offsets = [0, 0], sizes = [8, 128], strides = [1, 1]} : vector<8x384xf32> to vector<8x128xf32>
    %206 = vector.extract_strided_slice %204 {offsets = [0, 128], sizes = [8, 128], strides = [1, 1]} : vector<8x384xf32> to vector<8x128xf32>
    %207 = vector.extract_strided_slice %204 {offsets = [0, 256], sizes = [8, 128], strides = [1, 1]} : vector<8x384xf32> to vector<8x128xf32>
    %208 = vector.extract_strided_slice %205 {offsets = [0, 0], sizes = [7, 128], strides = [1, 1]} : vector<8x128xf32> to vector<7x128xf32>
    %209 = tpu.concatenate %18, %208 in 0 : vector<1x128xf32>, vector<7x128xf32> -> vector<8x128xf32>
    %210 = arith.addf %206, %209 : vector<8x128xf32>
    %211 = vector.extract_strided_slice %207 {offsets = [1, 0], sizes = [7, 128], strides = [1, 1]} : vector<8x128xf32> to vector<7x128xf32>
    %212 = tpu.concatenate %211, %18 in 0 : vector<7x128xf32>, vector<1x128xf32> -> vector<8x128xf32>
    %213 = arith.addf %210, %212 : vector<8x128xf32>
    %c7_80 = arith.constant 7 : index
    %c0_81 = arith.constant 0 : index
    %214 = vector.load %arg6[%c7_80, %c0_81] : memref<10x128xf32, #tpu.memory_space<vmem>>, vector<1x128xf32>
    %215 = vector.broadcast %214 : vector<1x128xf32> to vector<8x128xf32>
    %216 = arith.addf %213, %215 : vector<8x128xf32>
    %cst_82 = arith.constant 0.000000e+00 : f32
    %217 = vector.broadcast %cst_82 : f32 to vector<8x128xf32>
    %218 = arith.maximumf %216, %217 : vector<8x128xf32>
    %c8 = arith.constant 8 : index
    %c0_83 = arith.constant 0 : index
    %c0_84 = arith.constant 0 : index
    %219 = vector.load %arg5[%c8, %c0_83, %c0_84] : memref<10x128x384xf32, #tpu.memory_space<vmem>>, vector<1x128x384xf32>
    %220 = vector.shape_cast %219 : vector<1x128x384xf32> to vector<128x384xf32>
    %cst_85 = arith.constant dense<0.000000e+00> : vector<8x384xf32>
    %221 = tpu.matmul %218, %220, %cst_85 {dimension_numbers = #tpu.dot_dimension_numbers<[1], [0], [0], [1], [0, 0, 1, 1], [], []>} : vector<8x128xf32>, vector<128x384xf32>, vector<8x384xf32> -> vector<8x384xf32>
    %222 = vector.extract_strided_slice %221 {offsets = [0, 0], sizes = [8, 128], strides = [1, 1]} : vector<8x384xf32> to vector<8x128xf32>
    %223 = vector.extract_strided_slice %221 {offsets = [0, 128], sizes = [8, 128], strides = [1, 1]} : vector<8x384xf32> to vector<8x128xf32>
    %224 = vector.extract_strided_slice %221 {offsets = [0, 256], sizes = [8, 128], strides = [1, 1]} : vector<8x384xf32> to vector<8x128xf32>
    %225 = vector.extract_strided_slice %222 {offsets = [0, 0], sizes = [7, 128], strides = [1, 1]} : vector<8x128xf32> to vector<7x128xf32>
    %226 = tpu.concatenate %18, %225 in 0 : vector<1x128xf32>, vector<7x128xf32> -> vector<8x128xf32>
    %227 = arith.addf %223, %226 : vector<8x128xf32>
    %228 = vector.extract_strided_slice %224 {offsets = [1, 0], sizes = [7, 128], strides = [1, 1]} : vector<8x128xf32> to vector<7x128xf32>
    %229 = tpu.concatenate %228, %18 in 0 : vector<7x128xf32>, vector<1x128xf32> -> vector<8x128xf32>
    %230 = arith.addf %227, %229 : vector<8x128xf32>
    %c8_86 = arith.constant 8 : index
    %c0_87 = arith.constant 0 : index
    %231 = vector.load %arg6[%c8_86, %c0_87] : memref<10x128xf32, #tpu.memory_space<vmem>>, vector<1x128xf32>
    %232 = vector.broadcast %231 : vector<1x128xf32> to vector<8x128xf32>
    %233 = arith.addf %230, %232 : vector<8x128xf32>
    %cst_88 = arith.constant 0.000000e+00 : f32
    %234 = vector.broadcast %cst_88 : f32 to vector<8x128xf32>
    %235 = arith.maximumf %233, %234 : vector<8x128xf32>
    %c9 = arith.constant 9 : index
    %c0_89 = arith.constant 0 : index
    %c0_90 = arith.constant 0 : index
    %236 = vector.load %arg5[%c9, %c0_89, %c0_90] : memref<10x128x384xf32, #tpu.memory_space<vmem>>, vector<1x128x384xf32>
    %237 = vector.shape_cast %236 : vector<1x128x384xf32> to vector<128x384xf32>
    %cst_91 = arith.constant dense<0.000000e+00> : vector<8x384xf32>
    %238 = tpu.matmul %235, %237, %cst_91 {dimension_numbers = #tpu.dot_dimension_numbers<[1], [0], [0], [1], [0, 0, 1, 1], [], []>} : vector<8x128xf32>, vector<128x384xf32>, vector<8x384xf32> -> vector<8x384xf32>
    %239 = vector.extract_strided_slice %238 {offsets = [0, 0], sizes = [8, 128], strides = [1, 1]} : vector<8x384xf32> to vector<8x128xf32>
    %240 = vector.extract_strided_slice %238 {offsets = [0, 128], sizes = [8, 128], strides = [1, 1]} : vector<8x384xf32> to vector<8x128xf32>
    %241 = vector.extract_strided_slice %238 {offsets = [0, 256], sizes = [8, 128], strides = [1, 1]} : vector<8x384xf32> to vector<8x128xf32>
    %242 = vector.extract_strided_slice %239 {offsets = [0, 0], sizes = [7, 128], strides = [1, 1]} : vector<8x128xf32> to vector<7x128xf32>
    %243 = tpu.concatenate %18, %242 in 0 : vector<1x128xf32>, vector<7x128xf32> -> vector<8x128xf32>
    %244 = arith.addf %240, %243 : vector<8x128xf32>
    %245 = vector.extract_strided_slice %241 {offsets = [1, 0], sizes = [7, 128], strides = [1, 1]} : vector<8x128xf32> to vector<7x128xf32>
    %246 = tpu.concatenate %245, %18 in 0 : vector<7x128xf32>, vector<1x128xf32> -> vector<8x128xf32>
    %247 = arith.addf %244, %246 : vector<8x128xf32>
    %c9_92 = arith.constant 9 : index
    %c0_93 = arith.constant 0 : index
    %248 = vector.load %arg6[%c9_92, %c0_93] : memref<10x128xf32, #tpu.memory_space<vmem>>, vector<1x128xf32>
    %249 = vector.broadcast %248 : vector<1x128xf32> to vector<8x128xf32>
    %250 = arith.addf %247, %249 : vector<8x128xf32>
    %cst_94 = arith.constant 0.000000e+00 : f32
    %251 = vector.broadcast %cst_94 : f32 to vector<8x128xf32>
    %252 = arith.maximumf %250, %251 : vector<8x128xf32>
    %cst_95 = arith.constant dense<0.000000e+00> : vector<128xf32>
    %253 = vector.multi_reduction <add>, %252, %cst_95 [0] : vector<8x128xf32> to vector<128xf32>
    %254 = vector.shape_cast %253 : vector<128xf32> to vector<1x128xf32>
    %255 = arith.mulf %254, %14 : vector<1x128xf32>
    %cst_96 = arith.constant dense<0.000000e+00> : vector<1xf32>
    %256 = vector.multi_reduction <add>, %255, %cst_96 [1] : vector<1x128xf32> to vector<1xf32>
    %257 = vector.shape_cast %256 : vector<1xf32> to vector<1x1xf32>
    %258 = arith.addf %257, %15 : vector<1x1xf32>
    %cst_97 = arith.constant 0.000000e+00 : f32
    %259 = vector.broadcast %cst_97 : f32 to vector<1x1xf32>
    %260 = arith.maximumf %258, %259 : vector<1x1xf32>
    %261 = vector.broadcast %260 : vector<1x1xf32> to vector<1x128xf32>
    %262 = arith.mulf %261, %16 : vector<1x128xf32>
    %cst_98 = arith.constant dense<0.000000e+00> : vector<128xf32>
    %263 = vector.multi_reduction <add>, %262, %cst_98 [0] : vector<1x128xf32> to vector<128xf32>
    %264 = vector.shape_cast %263 : vector<128xf32> to vector<1x128xf32>
    %265 = arith.addf %264, %17 : vector<1x128xf32>
    %266 = arith.negf %265 : vector<1x128xf32>
    %267 = math.exp %266 : vector<1x128xf32>
    %cst_99 = arith.constant 1.000000e+00 : f32
    %268 = vector.broadcast %cst_99 : f32 to vector<1x128xf32>
    %269 = arith.addf %268, %267 : vector<1x128xf32>
    %270 = arith.divf %268, %269 : vector<1x128xf32>
    %271 = vector.broadcast %270 : vector<1x128xf32> to vector<8x128xf32>
    %272 = arith.mulf %252, %271 : vector<8x128xf32>
    %273 = arith.addf %184, %272 : vector<8x128xf32>
    %c0_100 = arith.constant 0 : index
    %c0_101 = arith.constant 0 : index
    %274 = vector.load %arg11[%c0_100, %c0_101] : memref<128x512xf32, #tpu.memory_space<vmem>>, vector<128x512xf32>
    %cst_102 = arith.constant dense<0.000000e+00> : vector<8x512xf32>
    %275 = tpu.matmul %273, %274, %cst_102 {dimension_numbers = #tpu.dot_dimension_numbers<[1], [0], [0], [1], [0, 0, 1, 1], [], []>} : vector<8x128xf32>, vector<128x512xf32>, vector<8x512xf32> -> vector<8x512xf32>
    %cst_103 = arith.constant dense<0.000000e+00> : vector<512xf32>
    %276 = vector.multi_reduction <add>, %275, %cst_103 [0] : vector<8x512xf32> to vector<512xf32>
    %277 = vector.shape_cast %276 : vector<512xf32> to vector<1x512xf32>
    %278 = arith.mulf %275, %275 : vector<8x512xf32>
    %cst_104 = arith.constant dense<0.000000e+00> : vector<512xf32>
    %279 = vector.multi_reduction <add>, %278, %cst_104 [0] : vector<8x512xf32> to vector<512xf32>
    %280 = vector.shape_cast %279 : vector<512xf32> to vector<1x512xf32>
    %281 = tpu.concatenate %277, %280 in 0 : vector<1x512xf32>, vector<1x512xf32> -> vector<2x512xf32>
    %c0_105 = arith.constant 0 : index
    %c0_106 = arith.constant 0 : index
    %282 = vector.load %arg12[%c0_105, %c0_106] : memref<512x512xf32, #tpu.memory_space<vmem>>, vector<512x512xf32>
    %cst_107 = arith.constant dense<0.000000e+00> : vector<2x512xf32>
    %283 = tpu.matmul %281, %282, %cst_107 {dimension_numbers = #tpu.dot_dimension_numbers<[1], [0], [0], [1], [0, 0, 1, 1], [], []>} : vector<2x512xf32>, vector<512x512xf32>, vector<2x512xf32> -> vector<2x512xf32>
    %284 = vector.extract_strided_slice %283 {offsets = [0, 0], sizes = [1, 512], strides = [1, 1]} : vector<2x512xf32> to vector<1x512xf32>
    %285 = vector.extract_strided_slice %283 {offsets = [1, 0], sizes = [1, 512], strides = [1, 1]} : vector<2x512xf32> to vector<1x512xf32>
    %286 = arith.mulf %284, %284 : vector<1x512xf32>
    %287 = arith.subf %285, %286 : vector<1x512xf32>
    %288 = vector.broadcast %284 : vector<1x512xf32> to vector<8x512xf32>
    %289 = arith.subf %275, %288 : vector<8x512xf32>
    %cst_108 = arith.constant 9.99999974E-6 : f32
    %290 = vector.broadcast %cst_108 : f32 to vector<1x512xf32>
    %291 = arith.addf %287, %290 : vector<1x512xf32>
    %292 = math.rsqrt %291 : vector<1x512xf32>
    %293 = vector.broadcast %292 : vector<1x512xf32> to vector<8x512xf32>
    %294 = arith.mulf %289, %293 : vector<8x512xf32>
    %c0_109 = arith.constant 0 : index
    %c0_110 = arith.constant 0 : index
    %295 = vector.load %arg13[%c0_109, %c0_110] : memref<1x512xf32, #tpu.memory_space<vmem>>, vector<1x512xf32>
    %296 = vector.broadcast %295 : vector<1x512xf32> to vector<8x512xf32>
    %297 = arith.mulf %294, %296 : vector<8x512xf32>
    %c0_111 = arith.constant 0 : index
    %c0_112 = arith.constant 0 : index
    %298 = vector.load %arg14[%c0_111, %c0_112] : memref<1x512xf32, #tpu.memory_space<vmem>>, vector<1x512xf32>
    %299 = vector.broadcast %298 : vector<1x512xf32> to vector<8x512xf32>
    %300 = arith.addf %297, %299 : vector<8x512xf32>
    %301 = arith.addf %300, %13 : vector<8x512xf32>
    %cst_113 = arith.constant 0.000000e+00 : f32
    %302 = vector.broadcast %cst_113 : f32 to vector<8x512xf32>
    %303 = arith.maximumf %301, %302 : vector<8x512xf32>
    %c0_114 = arith.constant 0 : index
    %c0_115 = arith.constant 0 : index
    %c0_116 = arith.constant 0 : index
    %304 = vector.load %arg15[%c0_114, %c0_115, %c0_116] : memref<1x8x512xf32, #tpu.memory_space<vmem>>, vector<1x8x512xf32>
    %305 = vector.shape_cast %304 : vector<1x8x512xf32> to vector<8x512xf32>
    %306 = vector.shape_cast %303 : vector<8x512xf32> to vector<1x8x512xf32>
    tpu.vector_store %arg15[%c0_114, %c0_115, %c0_116], %306 {strides = array<i32>} : memref<1x8x512xf32, #tpu.memory_space<vmem>>, vector<1x8x512xf32>,
    return
  }
  func.func @transform_0(%arg0: i32) -> (i32, i32, i32) {
    %c0_i32 = arith.constant 0 : i32
    %c0_i32_0 = arith.constant 0 : i32
    %c0_i32_1 = arith.constant 0 : i32
    return %arg0, %c0_i32, %c0_i32_0 : i32, i32, i32
  }
  func.func @transform_1(%arg0: i32) -> (i32, i32) {
    %c0_i32 = arith.constant 0 : i32
    %c0_i32_0 = arith.constant 0 : i32
    %c0_i32_1 = arith.constant 0 : i32
    return %c0_i32, %c0_i32_0 : i32, i32
  }
  func.func @transform_2(%arg0: i32) -> (i32, i32) {
    %c0_i32 = arith.constant 0 : i32
    %c0_i32_0 = arith.constant 0 : i32
    %c0_i32_1 = arith.constant 0 : i32
    return %c0_i32, %c0_i32_0 : i32, i32
  }
  func.func @transform_3(%arg0: i32) -> (i32, i32) {
    %c0_i32 = arith.constant 0 : i32
    %c0_i32_0 = arith.constant 0 : i32
    %c0_i32_1 = arith.constant 0 : i32
    return %c0_i32, %c0_i32_0 : i32, i32
  }
  func.func @transform_4(%arg0: i32) -> (i32, i32, i32) {
    %c0_i32 = arith.constant 0 : i32
    %c0_i32_0 = arith.constant 0 : i32
    %c0_i32_1 = arith.constant 0 : i32
    %c0_i32_2 = arith.constant 0 : i32
    return %c0_i32, %c0_i32_0, %c0_i32_1 : i32, i32, i32
  }
  func.func @transform_5(%arg0: i32) -> (i32, i32) {
    %c0_i32 = arith.constant 0 : i32
    %c0_i32_0 = arith.constant 0 : i32
    %c0_i32_1 = arith.constant 0 : i32
    return %c0_i32, %c0_i32_0 : i32, i32
  }
  func.func @transform_6(%arg0: i32) -> (i32, i32) {
    %c0_i32 = arith.constant 0 : i32
    %c0_i32_0 = arith.constant 0 : i32
    %c0_i32_1 = arith.constant 0 : i32
    return %c0_i32, %c0_i32_0 : i32, i32
  }
  func.func @transform_7(%arg0: i32) -> (i32, i32) {
    %c0_i32 = arith.constant 0 : i32
    %c0_i32_0 = arith.constant 0 : i32
    %c0_i32_1 = arith.constant 0 : i32
    return %c0_i32, %c0_i32_0 : i32, i32
  }
  func.func @transform_8(%arg0: i32) -> (i32, i32) {
    %c0_i32 = arith.constant 0 : i32
    %c0_i32_0 = arith.constant 0 : i32
    %c0_i32_1 = arith.constant 0 : i32
    return %c0_i32, %c0_i32_0 : i32, i32
  }
  func.func @transform_9(%arg0: i32) -> (i32, i32) {
    %c0_i32 = arith.constant 0 : i32
    %c0_i32_0 = arith.constant 0 : i32
    %c0_i32_1 = arith.constant 0 : i32
    return %c0_i32, %c0_i32_0 : i32, i32
  }
  func.func @transform_10(%arg0: i32) -> (i32, i32) {
    %c0_i32 = arith.constant 0 : i32
    %c0_i32_0 = arith.constant 0 : i32
    %c0_i32_1 = arith.constant 0 : i32
    return %c0_i32, %c0_i32_0 : i32, i32
  }
  func.func @transform_11(%arg0: i32) -> (i32, i32) {
    %c0_i32 = arith.constant 0 : i32
    %c0_i32_0 = arith.constant 0 : i32
    %c0_i32_1 = arith.constant 0 : i32
    return %c0_i32, %c0_i32_0 : i32, i32
  }
  func.func @transform_12(%arg0: i32) -> (i32, i32) {
    %c0_i32 = arith.constant 0 : i32
    %c0_i32_0 = arith.constant 0 : i32
    %c0_i32_1 = arith.constant 0 : i32
    return %c0_i32, %c0_i32_0 : i32, i32
  }
  func.func @transform_13(%arg0: i32) -> (i32, i32) {
    %c0_i32 = arith.constant 0 : i32
    %c0_i32_0 = arith.constant 0 : i32
    %c0_i32_1 = arith.constant 0 : i32
    return %c0_i32, %c0_i32_0 : i32, i32
  }
  func.func @transform_14(%arg0: i32) -> (i32, i32, i32) {
    %c0_i32 = arith.constant 0 : i32
    %c0_i32_0 = arith.constant 0 : i32
    %c0_i32_1 = arith.constant 0 : i32
    return %arg0, %c0_i32, %c0_i32_0 : i32, i32, i32
  }
}

</mosaic_0001>

<llo_original>
// kernel: osblock_inin_forward.1
$region0: #{osblock_inin_forward.1}
  #allocation0 [shape = 'u32[]', space=smem, size = 0x4, offset = 0x4, fixed_abs, tag = 'smem constant byte address 0x4 - core index']
  #allocation1 [shape = 'u32[72,128]{1,0:T(1,128)}', space=vmem, size = 0x9000, scoped, tag = 'internal scratch']
  #allocation2 [shape = 'f32[1,1]{1,0:T(1,128)S(1)}', space=vmem, size = 0x200, scoped, tag = 'scoped memory for osblock_inin_forward.1']
  %s0 = inlined_call_operand.vmem [shape: f32[2,8,128], index: 0, kind: input, shape index: {}]
  %s1 = inlined_call_operand.hbm [shape: f32[128,640], index: 1, kind: input, shape index: {}]
  %s2 = inlined_call_operand.hbm [shape: f32[1,128], index: 2, kind: input, shape index: {}]
  %s3 = inlined_call_operand.hbm [shape: f32[1,512], index: 3, kind: input, shape index: {}]
  %s4 = inlined_call_operand.hbm [shape: f32[10,128,384], index: 4, kind: input, shape index: {}]
  %s5 = inlined_call_operand.hbm [shape: f32[10,128], index: 5, kind: input, shape index: {}]
  %s6 = inlined_call_operand.hbm [shape: f32[1,128], index: 6, kind: input, shape index: {}]
  %s7 = inlined_call_operand.<no memory space> [shape: f32[1,1], index: 7, kind: input, shape index: {}]
  %s8 = inlined_call_operand.hbm [shape: f32[1,128], index: 8, kind: input, shape index: {}]
  %s9 = inlined_call_operand.hbm [shape: f32[1,128], index: 9, kind: input, shape index: {}]
  %s10 = inlined_call_operand.hbm [shape: f32[128,512], index: 10, kind: input, shape index: {}]
  %s11 = inlined_call_operand.hbm [shape: f32[512,512], index: 11, kind: input, shape index: {}]
  %s12 = inlined_call_operand.hbm [shape: f32[1,512], index: 12, kind: input, shape index: {}]
  %s13 = inlined_call_operand.hbm [shape: f32[1,512], index: 13, kind: input, shape index: {}]
  %s14 = inlined_call_operand.vmem [shape: f32[2,8,512], index: 14, kind: output, shape index: {}]
  %s15 = sld [smem:[#allocation0]]
  $region137: #{osblock_inin_forward.1} parent=0
    _
  %s17 = ssub.s32 1, %s15
  %s18 = scalar_select 0, %s17, %s15
  %v19 = vstv %s7
  %20 = vst [vmem:[#allocation2] sm:$0x1] %v19
  $region1: #{osblock_inin_forward.1} parent=0
    #allocation3 [shape = 'u8[327680]{0}', space=vmem, size = 0x50000, scoped, tag = 'input window, operand 1, single buffered']
    #allocation4 [shape = 's32[2]{0}', space=sflag, size = 0x8, scoped, tag = 'scoped memory for osblock_inin_forward.1']
    #allocation5 [shape = 'u8[512]{0}', space=vmem, size = 0x400, scoped, tag = 'input window, operand 2, single buffered']
    #allocation6 [shape = 's32[1]{0}', space=sflag, size = 0x4, scoped, tag = 'scoped memory for osblock_inin_forward.1']
    #allocation7 [shape = 'u8[2048]{0}', space=vmem, size = 0x800, scoped, tag = 'input window, operand 3, single buffered']
    #allocation8 [shape = 'u8[1966080]{0}', space=vmem, size = 0x1e0000, scoped, tag = 'input window, operand 4, single buffered']
    #allocation9 [shape = 's32[1]{0}', space=sflag, size = 0x4, scoped, tag = 'scoped memory for osblock_inin_forward.1']
    #allocation10 [shape = 'u8[8192]{0}', space=vmem, size = 0x2000, scoped, tag = 'input window, operand 5, single buffered']
    #allocation11 [shape = 'u8[512]{0}', space=vmem, size = 0x400, scoped, tag = 'input window, operand 6, single buffered']
    #allocation12 [shape = 's32[1]{0}', space=sflag, size = 0x4, scoped, tag = 'scoped memory for osblock_inin_forward.1']
    #allocation13 [shape = 'u8[512]{0}', space=vmem, size = 0x400, scoped, tag = 'input window, operand 8, single buffered']
    #allocation14 [shape = 'u8[512]{0}', space=vmem, size = 0x400, scoped, tag = 'input window, operand 9, single buffered']
    #allocation15 [shape = 's32[1]{0}', space=sflag, size = 0x4, scoped, tag = 'scoped memory for osblock_inin_forward.1']
    #allocation16 [shape = 'u8[262144]{0}', space=vmem, size = 0x40000, scoped, tag = 'input window, operand 10, single buffered']
    #allocation17 [shape = 'u8[1048576]{0}', space=vmem, size = 0x100000, scoped, tag = 'input window, operand 11, single buffered']
    #allocation18 [shape = 's32[1]{0}', space=sflag, size = 0x4, scoped, tag = 'scoped memory for osblock_inin_forward.1']
    #allocation19 [shape = 'u8[2048]{0}', space=vmem, size = 0x800, scoped, tag = 'input window, operand 12, single buffered']
    #allocation20 [shape = 'u8[2048]{0}', space=vmem, size = 0x800, scoped, tag = 'input window, operand 13, single buffered']
    #allocation21 [shape = 's32[1]{0}', space=sflag, size = 0x4, scoped, tag = 'scoped memory for osblock_inin_forward.1']
    %21 = vsyncpa [#allocation4], 0
    %22 = vsyncpa [#allocation6], 0
    %23 = vsyncpa [#allocation9], 0
    %24 = vsyncpa [#allocation12], 0
    %25 = vsyncpa [#allocation15], 0
    %26 = vsyncpa [#allocation18], 0
    %27 = vsyncpa [#allocation21], 0
    loop: start=0, step=1, limit=4
    $region2: #{osblock_inin_forward.1} parent=1 // loop_pre_header
      _
    $region3: #{osblock_inin_forward.1} parent=1 // loop_header
      %s29 = sphi 0, %s33
      %p30 = scmp.ge.s32.totalorder %s29, 4
      %s39 = sphi 0, %s41
      %s42 = sphi 0, %s39
      %s43 = sphi 0, %s42
      %s59 = sphi 0, %s43
      %s63 = sphi 0, %s63
      %s65 = sphi 0, %s63
      %s66 = sphi 0, %s65
      %s80 = sphi 0, %s66
      %s84 = sphi 0, %s84
      %s86 = sphi 0, %s84
      %s87 = sphi 0, %s86
      %s101 = sphi 0, %s87
      %s105 = sphi 0, %s105
      %s107 = sphi 0, %s105
      %s108 = sphi 0, %s107
      %s122 = sphi 0, %s108
      %s126 = sphi 0, %s126
      %s128 = sphi 0, %s126
      %s129 = sphi 0, %s128
      %s143 = sphi 0, %s129
      %s147 = sphi 0, %s147
      %s149 = sphi 0, %s147
      %s150 = sphi 0, %s149
      %s164 = sphi 0, %s150
      %s168 = sphi 0, %s168
      %s170 = sphi 0, %s168
      %s171 = sphi 0, %s170
      %s185 = sphi 0, %s171
      %s189 = sphi 0, %s189
      %s191 = sphi 0, %s189
      %s192 = sphi 0, %s191
      %s206 = sphi 0, %s192
      %s210 = sphi 0, %s210
      %s212 = sphi 0, %s210
      %s213 = sphi 0, %s212
      %s227 = sphi 0, %s213
      %s231 = sphi 0, %s231
      %s233 = sphi 0, %s231
      %s234 = sphi 0, %s233
      %s248 = sphi 0, %s234
      %s252 = sphi 0, %s252
      %s254 = sphi 0, %s252
      %s255 = sphi 0, %s254
      %s269 = sphi 0, %s255
      %s273 = sphi 0, %s273
      %s275 = sphi 0, %s273
      %s276 = sphi 0, %s275
      %s290 = sphi 0, %s276
      %s294 = sphi 0, %s294
      %s296 = sphi 0, %s294
      %s297 = sphi 0, %s296
      %s311 = sphi 0, %s297
      %s315 = sphi 0, %s315
      %s317 = sphi 0, %s315
      %s318 = sphi 0, %s317
      %s332 = sphi 0, %s318
      %s338 = sphi 0, %s340
      %s341 = sphi 0, %s338
      %s342 = sphi 0, %s341
      %s358 = sphi 0, %s342
    $region4: #{osblock_inin_forward.1} parent=1 // loop_header_branch
      %32 = sbr.rel (%p30) target = $region8
    $region5: #{osblock_inin_forward.1} parent=1 // loop_body
      %s34 = ssub.s32 %s29, 1
      %s35 = ssub.s32 %s29, 2
      %s36 = sadd.s32 %s29, 1
      %s37 = ssub.s32 %s29, %s36
      %p38 = scmp.eq.s32.totalorder %s37, 0
      %s40 = sadd.s32 %s39, 1
      %s41 = scalar_select %p38, %s39, %s40
      %p44 = pneg %p38
      %p45 = scmp.eq.s32.totalorder %s29, 1
      %p46 = por %p44, %p45
      %p47 = scmp.ne.s32.totalorder %s39, %s42
      %p48 = scmp.eq.s32.totalorder %s29, 0
      %p49 = por %p47, %p48
      %p50 = scmp.ne.s32.totalorder %s39, %s42
      %p51 = scmp.eq.s32.totalorder %s34, 1
      %p52 = por %p50, %p51
      %p53 = scmp.ne.s32.totalorder %s42, %s43
      %p54 = scmp.eq.s32.totalorder %s34, 0
      %p55 = por %p53, %p54
      %p56 = scmp.ne.s32.totalorder %s42, %s43
      %p57 = scmp.eq.s32.totalorder %s35, 1
      %p58 = por %p56, %p57
      %p60 = scmp.ne.s32.totalorder %s43, %s59
      %p61 = scmp.eq.s32.totalorder %s35, 0
      %p62 = por %p60, %p61
      %s64 = sadd.s32 %s63, 1
      %p67 = scmp.eq.s32.totalorder %s29, 1
      %p68 = scmp.ne.s32.totalorder %s63, %s65
      %p69 = scmp.eq.s32.totalorder %s29, 0
      %p70 = por %p68, %p69
      %p71 = scmp.ne.s32.totalorder %s63, %s65
      %p72 = scmp.eq.s32.totalorder %s34, 1
      %p73 = por %p71, %p72
      %p74 = scmp.ne.s32.totalorder %s65, %s66
      %p75 = scmp.eq.s32.totalorder %s34, 0
      %p76 = por %p74, %p75
      %p77 = scmp.ne.s32.totalorder %s65, %s66
      %p78 = scmp.eq.s32.totalorder %s35, 1
      %p79 = por %p77, %p78
      %p81 = scmp.ne.s32.totalorder %s66, %s80
      %p82 = scmp.eq.s32.totalorder %s35, 0
      %p83 = por %p81, %p82
      %s85 = sadd.s32 %s84, 1
      %p88 = scmp.eq.s32.totalorder %s29, 1
      %p89 = scmp.ne.s32.totalorder %s84, %s86
      %p90 = scmp.eq.s32.totalorder %s29, 0
      %p91 = por %p89, %p90
      %p92 = scmp.ne.s32.totalorder %s84, %s86
      %p93 = scmp.eq.s32.totalorder %s34, 1
      %p94 = por %p92, %p93
      %p95 = scmp.ne.s32.totalorder %s86, %s87
      %p96 = scmp.eq.s32.totalorder %s34, 0
      %p97 = por %p95, %p96
      %p98 = scmp.ne.s32.totalorder %s86, %s87
      %p99 = scmp.eq.s32.totalorder %s35, 1
      %p100 = por %p98, %p99
      %p102 = scmp.ne.s32.totalorder %s87, %s101
      %p103 = scmp.eq.s32.totalorder %s35, 0
      %p104 = por %p102, %p103
      %s106 = sadd.s32 %s105, 1
      %p109 = scmp.eq.s32.totalorder %s29, 1
      %p110 = scmp.ne.s32.totalorder %s105, %s107
      %p111 = scmp.eq.s32.totalorder %s29, 0
      %p112 = por %p110, %p111
      %p113 = scmp.ne.s32.totalorder %s105, %s107
      %p114 = scmp.eq.s32.totalorder %s34, 1
      %p115 = por %p113, %p114
      %p116 = scmp.ne.s32.totalorder %s107, %s108
      %p117 = scmp.eq.s32.totalorder %s34, 0
      %p118 = por %p116, %p117
      %p119 = scmp.ne.s32.totalorder %s107, %s108
      %p120 = scmp.eq.s32.totalorder %s35, 1
      %p121 = por %p119, %p120
      %p123 = scmp.ne.s32.totalorder %s108, %s122
      %p124 = scmp.eq.s32.totalorder %s35, 0
      %p125 = por %p123, %p124
      %s127 = sadd.s32 %s126, 1
      %p130 = scmp.eq.s32.totalorder %s29, 1
      %p131 = scmp.ne.s32.totalorder %s126, %s128
      %p132 = scmp.eq.s32.totalorder %s29, 0
      %p133 = por %p131, %p132
      %p134 = scmp.ne.s32.totalorder %s126, %s128
      %p135 = scmp.eq.s32.totalorder %s34, 1
      %p136 = por %p134, %p135
      %p137 = scmp.ne.s32.totalorder %s128, %s129
      %p138 = scmp.eq.s32.totalorder %s34, 0
      %p139 = por %p137, %p138
      %p140 = scmp.ne.s32.totalorder %s128, %s129
      %p141 = scmp.eq.s32.totalorder %s35, 1
      %p142 = por %p140, %p141
      %p144 = scmp.ne.s32.totalorder %s129, %s143
      %p145 = scmp.eq.s32.totalorder %s35, 0
      %p146 = por %p144, %p145
      %s148 = sadd.s32 %s147, 1
      %p151 = scmp.eq.s32.totalorder %s29, 1
      %p152 = scmp.ne.s32.totalorder %s147, %s149
      %p153 = scmp.eq.s32.totalorder %s29, 0
      %p154 = por %p152, %p153
      %p155 = scmp.ne.s32.totalorder %s147, %s149
      %p156 = scmp.eq.s32.totalorder %s34, 1
      %p157 = por %p155, %p156
      %p158 = scmp.ne.s32.totalorder %s149, %s150
      %p159 = scmp.eq.s32.totalorder %s34, 0
      %p160 = por %p158, %p159
      %p161 = scmp.ne.s32.totalorder %s149, %s150
      %p162 = scmp.eq.s32.totalorder %s35, 1
      %p163 = por %p161, %p162
      %p165 = scmp.ne.s32.totalorder %s150, %s164
      %p166 = scmp.eq.s32.totalorder %s35, 0
      %p167 = por %p165, %p166
      %s169 = sadd.s32 %s168, 1
      %p172 = scmp.eq.s32.totalorder %s29, 1
      %p173 = scmp.ne.s32.totalorder %s168, %s170
      %p174 = scmp.eq.s32.totalorder %s29, 0
      %p175 = por %p173, %p174
      %p176 = scmp.ne.s32.totalorder %s168, %s170
      %p177 = scmp.eq.s32.totalorder %s34, 1
      %p178 = por %p176, %p177
      %p179 = scmp.ne.s32.totalorder %s170, %s171
      %p180 = scmp.eq.s32.totalorder %s34, 0
      %p181 = por %p179, %p180
      %p182 = scmp.ne.s32.totalorder %s170, %s171
      %p183 = scmp.eq.s32.totalorder %s35, 1
      %p184 = por %p182, %p183
      %p186 = scmp.ne.s32.totalorder %s171, %s185
      %p187 = scmp.eq.s32.totalorder %s35, 0
      %p188 = por %p186, %p187
      %s190 = sadd.s32 %s189, 1
      %p193 = scmp.eq.s32.totalorder %s29, 1
      %p194 = scmp.ne.s32.totalorder %s189, %s191
      %p195 = scmp.eq.s32.totalorder %s29, 0
      %p196 = por %p194, %p195
      %p197 = scmp.ne.s32.totalorder %s189, %s191
      %p198 = scmp.eq.s32.totalorder %s34, 1
      %p199 = por %p197, %p198
      %p200 = scmp.ne.s32.totalorder %s191, %s192
      %p201 = scmp.eq.s32.totalorder %s34, 0
      %p202 = por %p200, %p201
      %p203 = scmp.ne.s32.totalorder %s191, %s192
      %p204 = scmp.eq.s32.totalorder %s35, 1
      %p205 = por %p203, %p204
      %p207 = scmp.ne.s32.totalorder %s192, %s206
      %p208 = scmp.eq.s32.totalorder %s35, 0
      %p209 = por %p207, %p208
      %s211 = sadd.s32 %s210, 1
      %p214 = scmp.eq.s32.totalorder %s29, 1
      %p215 = scmp.ne.s32.totalorder %s210, %s212
      %p216 = scmp.eq.s32.totalorder %s29, 0
      %p217 = por %p215, %p216
      %p218 = scmp.ne.s32.totalorder %s210, %s212
      %p219 = scmp.eq.s32.totalorder %s34, 1
      %p220 = por %p218, %p219
      %p221 = scmp.ne.s32.totalorder %s212, %s213
      %p222 = scmp.eq.s32.totalorder %s34, 0
      %p223 = por %p221, %p222
      %p224 = scmp.ne.s32.totalorder %s212, %s213
      %p225 = scmp.eq.s32.totalorder %s35, 1
      %p226 = por %p224, %p225
      %p228 = scmp.ne.s32.totalorder %s213, %s227
      %p229 = scmp.eq.s32.totalorder %s35, 0
      %p230 = por %p228, %p229
      %s232 = sadd.s32 %s231, 1
      %p235 = scmp.eq.s32.totalorder %s29, 1
      %p236 = scmp.ne.s32.totalorder %s231, %s233
      %p237 = scmp.eq.s32.totalorder %s29, 0
      %p238 = por %p236, %p237
      %p239 = scmp.ne.s32.totalorder %s231, %s233
      %p240 = scmp.eq.s32.totalorder %s34, 1
      %p241 = por %p239, %p240
      %p242 = scmp.ne.s32.totalorder %s233, %s234
      %p243 = scmp.eq.s32.totalorder %s34, 0
      %p244 = por %p242, %p243
      %p245 = scmp.ne.s32.totalorder %s233, %s234
      %p246 = scmp.eq.s32.totalorder %s35, 1
      %p247 = por %p245, %p246
      %p249 = scmp.ne.s32.totalorder %s234, %s248
      %p250 = scmp.eq.s32.totalorder %s35, 0
      %p251 = por %p249, %p250
      %s253 = sadd.s32 %s252, 1
      %p256 = scmp.eq.s32.totalorder %s29, 1
      %p257 = scmp.ne.s32.totalorder %s252, %s254
      %p258 = scmp.eq.s32.totalorder %s29, 0
      %p259 = por %p257, %p258
      %p260 = scmp.ne.s32.totalorder %s252, %s254
      %p261 = scmp.eq.s32.totalorder %s34, 1
      %p262 = por %p260, %p261
      %p263 = scmp.ne.s32.totalorder %s254, %s255
      %p264 = scmp.eq.s32.totalorder %s34, 0
      %p265 = por %p263, %p264
      %p266 = scmp.ne.s32.totalorder %s254, %s255
      %p267 = scmp.eq.s32.totalorder %s35, 1
      %p268 = por %p266, %p267
      %p270 = scmp.ne.s32.totalorder %s255, %s269
      %p271 = scmp.eq.s32.totalorder %s35, 0
      %p272 = por %p270, %p271
      %s274 = sadd.s32 %s273, 1
      %p277 = scmp.eq.s32.totalorder %s29, 1
      %p278 = scmp.ne.s32.totalorder %s273, %s275
      %p279 = scmp.eq.s32.totalorder %s29, 0
      %p280 = por %p278, %p279
      %p281 = scmp.ne.s32.totalorder %s273, %s275
      %p282 = scmp.eq.s32.totalorder %s34, 1
      %p283 = por %p281, %p282
      %p284 = scmp.ne.s32.totalorder %s275, %s276
      %p285 = scmp.eq.s32.totalorder %s34, 0
      %p286 = por %p284, %p285
      %p287 = scmp.ne.s32.totalorder %s275, %s276
      %p288 = scmp.eq.s32.totalorder %s35, 1
      %p289 = por %p287, %p288
      %p291 = scmp.ne.s32.totalorder %s276, %s290
      %p292 = scmp.eq.s32.totalorder %s35, 0
      %p293 = por %p291, %p292
      %s295 = sadd.s32 %s294, 1
      %p298 = scmp.eq.s32.totalorder %s29, 1
      %p299 = scmp.ne.s32.totalorder %s294, %s296
      %p300 = scmp.eq.s32.totalorder %s29, 0
      %p301 = por %p299, %p300
      %p302 = scmp.ne.s32.totalorder %s294, %s296
      %p303 = scmp.eq.s32.totalorder %s34, 1
      %p304 = por %p302, %p303
      %p305 = scmp.ne.s32.totalorder %s296, %s297
      %p306 = scmp.eq.s32.totalorder %s34, 0
      %p307 = por %p305, %p306
      %p308 = scmp.ne.s32.totalorder %s296, %s297
      %p309 = scmp.eq.s32.totalorder %s35, 1
      %p310 = por %p308, %p309
      %p312 = scmp.ne.s32.totalorder %s297, %s311
      %p313 = scmp.eq.s32.totalorder %s35, 0
      %p314 = por %p312, %p313
      %s316 = sadd.s32 %s315, 1
      %p319 = scmp.eq.s32.totalorder %s29, 1
      %p320 = scmp.ne.s32.totalorder %s315, %s317
      %p321 = scmp.eq.s32.totalorder %s29, 0
      %p322 = por %p320, %p321
      %p323 = scmp.ne.s32.totalorder %s315, %s317
      %p324 = scmp.eq.s32.totalorder %s34, 1
      %p325 = por %p323, %p324
      %p326 = scmp.ne.s32.totalorder %s317, %s318
      %p327 = scmp.eq.s32.totalorder %s34, 0
      %p328 = por %p326, %p327
      %p329 = scmp.ne.s32.totalorder %s317, %s318
      %p330 = scmp.eq.s32.totalorder %s35, 1
      %p331 = por %p329, %p330
      %p333 = scmp.ne.s32.totalorder %s318, %s332
      %p334 = scmp.eq.s32.totalorder %s35, 0
      %p335 = por %p333, %p334
      %s336 = ssub.s32 %s29, %s36
      %p337 = scmp.eq.s32.totalorder %s336, 0
      %s339 = sadd.s32 %s338, 1
      %s340 = scalar_select %p337, %s338, %s339
      %p343 = pneg %p337
      %p344 = scmp.eq.s32.totalorder %s29, 1
      %p345 = por %p343, %p344
      %p346 = scmp.ne.s32.totalorder %s338, %s341
      %p347 = scmp.eq.s32.totalorder %s29, 0
      %p348 = por %p346, %p347
      %p349 = scmp.ne.s32.totalorder %s338, %s341
      %p350 = scmp.eq.s32.totalorder %s34, 1
      %p351 = por %p349, %p350
      %p352 = scmp.ne.s32.totalorder %s341, %s342
      %p353 = scmp.eq.s32.totalorder %s34, 0
      %p354 = por %p352, %p353
      %p355 = scmp.ne.s32.totalorder %s341, %s342
      %p356 = scmp.eq.s32.totalorder %s35, 1
      %p357 = por %p355, %p356
      %p359 = scmp.ne.s32.totalorder %s342, %s358
      %p360 = scmp.eq.s32.totalorder %s35, 0
      %p361 = por %p359, %p360
      %p362 = scmp.le.s32.totalorder 1, %s29
      %p363 = scmp.lt.s32.totalorder %s29, 3
      %p364 = pnand %p362, %p363
      %p365 = pneg %p364
      // Predicated region
      $region9: #{osblock_inin_forward.1} parent=5 // pred_check
        _
      $region10: #{osblock_inin_forward.1} parent=5 // pred_check_branch
        %367 = sbr.rel (%p364) target = $region12
      $region11: #{osblock_inin_forward.1} parent=5 // pred_region
        %s368 = ssub.s32 %s29, 1
        // Predicated region
        $region13: #{osblock_inin_forward.1} parent=11 // pred_check
          %p369 = pneg %p76
        $region14: #{osblock_inin_forward.1} parent=11 // pred_check_branch
          %371 = sbr.rel (%p369) target = $region16
        $region15: #{osblock_inin_forward.1} parent=11 // pred_region
          %373 = vsyncadd [#allocation4], 0
          %s374 = sshll.u32 %s1, 4
          %s375 = int_to_ptr.hbm [resolvable:$true] %s374
          %s376 = sshll.u32 [#allocation3], 4
          %s377 = int_to_ptr.vmem [resolvable:$true] %s376
          %382 = dma.hbm_to_vmem [thread:$0]  %s375, 10240, %s377, [#allocation4], 640, 640, 40
        $region16: #{osblock_inin_forward.1} parent=11 // pred_fallthru
          _
        // Predicated region
        $region17: #{osblock_inin_forward.1} parent=11 // pred_check
          %p383 = pneg %p97
        $region18: #{osblock_inin_forward.1} parent=11 // pred_check_branch
          %385 = sbr.rel (%p383) target = $region20
        $region19: #{osblock_inin_forward.1} parent=11 // pred_region
          %387 = vsyncadd [#allocation6], 0
          %s389 = sshll.u32 %s2, 4
          %s390 = int_to_ptr.hbm [resolvable:$true] %s389
          %s391 = sshll.u32 [#allocation5], 4
          %s392 = int_to_ptr.vmem [resolvable:$true] %s391
          %394 = dma.hbm_to_vmem [thread:$0]  %s390, 16, %s392, [#allocation6]
        $region20: #{osblock_inin_forward.1} parent=11 // pred_fallthru
          _
        // Predicated region
        $region21: #{osblock_inin_forward.1} parent=11 // pred_check
          %p395 = pneg %p118
        $region22: #{osblock_inin_forward.1} parent=11 // pred_check_branch
          %397 = sbr.rel (%p395) target = $region24
        $region23: #{osblock_inin_forward.1} parent=11 // pred_region
          %399 = vsyncadd [#allocation6], 0
          %s401 = sshll.u32 %s3, 4
          %s402 = int_to_ptr.hbm [resolvable:$true] %s401
          %s403 = sshll.u32 [#allocation7], 4
          %s404 = int_to_ptr.vmem [resolvable:$true] %s403
          %406 = dma.hbm_to_vmem [thread:$0]  %s402, 64, %s404, [#allocation6]
        $region24: #{osblock_inin_forward.1} parent=11 // pred_fallthru
          _
        // Predicated region
        $region25: #{osblock_inin_forward.1} parent=11 // pred_check
          %p407 = pneg %p139
        $region26: #{osblock_inin_forward.1} parent=11 // pred_check_branch
          %409 = sbr.rel (%p407) target = $region28
        $region27: #{osblock_inin_forward.1} parent=11 // pred_region
          %411 = vsyncadd [#allocation9], 0
          %s412 = sshll.u32 %s4, 4
          %s413 = int_to_ptr.hbm [resolvable:$true] %s412
          %s414 = sshll.u32 [#allocation8], 4
          %s415 = int_to_ptr.vmem [resolvable:$true] %s414
          %420 = dma.hbm_to_vmem [thread:$0]  %s413, 61440, %s415, [#allocation9], 384, 384, 24
        $region28: #{osblock_inin_forward.1} parent=11 // pred_fallthru
          _
        // Predicated region
        $region29: #{osblock_inin_forward.1} parent=11 // pred_check
          %p421 = pneg %p160
        $region30: #{osblock_inin_forward.1} parent=11 // pred_check_branch
          %423 = sbr.rel (%p421) target = $region32
        $region31: #{osblock_inin_forward.1} parent=11 // pred_region
          %425 = vsyncadd [#allocation9], 0
          %s426 = sshll.u32 %s5, 4
          %s427 = int_to_ptr.hbm [resolvable:$true] %s426
          %s428 = sshll.u32 [#allocation10], 4
          %s429 = int_to_ptr.vmem [resolvable:$true] %s428
          %434 = dma.hbm_to_vmem [thread:$0]  %s427, 256, %s429, [#allocation9], 128, 128, 8
        $region32: #{osblock_inin_forward.1} parent=11 // pred_fallthru
          _
        // Predicated region
        $region33: #{osblock_inin_forward.1} parent=11 // pred_check
          %p435 = pneg %p181
        $region34: #{osblock_inin_forward.1} parent=11 // pred_check_branch
          %437 = sbr.rel (%p435) target = $region36
        $region35: #{osblock_inin_forward.1} parent=11 // pred_region
          %439 = vsyncadd [#allocation12], 0
          %s441 = sshll.u32 %s6, 4
          %s442 = int_to_ptr.hbm [resolvable:$true] %s441
          %s443 = sshll.u32 [#allocation11], 4
          %s444 = int_to_ptr.vmem [resolvable:$true] %s443
          %446 = dma.hbm_to_vmem [thread:$0]  %s442, 16, %s444, [#allocation12]
        $region36: #{osblock_inin_forward.1} parent=11 // pred_fallthru
          _
        // Predicated region
        $region37: #{osblock_inin_forward.1} parent=11 // pred_check
          %p447 = pneg %p202
        $region38: #{osblock_inin_forward.1} parent=11 // pred_check_branch
          %449 = sbr.rel (%p447) target = $region40
        $region39: #{osblock_inin_forward.1} parent=11 // pred_region
          _
        $region40: #{osblock_inin_forward.1} parent=11 // pred_fallthru
          _
        // Predicated region
        $region41: #{osblock_inin_forward.1} parent=11 // pred_check
          %p450 = pneg %p223
        $region42: #{osblock_inin_forward.1} parent=11 // pred_check_branch
          %452 = sbr.rel (%p450) target = $region44
        $region43: #{osblock_inin_forward.1} parent=11 // pred_region
          %454 = vsyncadd [#allocation12], 0
          %s456 = sshll.u32 %s8, 4
          %s457 = int_to_ptr.hbm [resolvable:$true] %s456
          %s458 = sshll.u32 [#allocation13], 4
          %s459 = int_to_ptr.vmem [resolvable:$true] %s458
          %461 = dma.hbm_to_vmem [thread:$0]  %s457, 16, %s459, [#allocation12]
        $region44: #{osblock_inin_forward.1} parent=11 // pred_fallthru
          _
        // Predicated region
        $region45: #{osblock_inin_forward.1} parent=11 // pred_check
          %p462 = pneg %p244
        $region46: #{osblock_inin_forward.1} parent=11 // pred_check_branch
          %464 = sbr.rel (%p462) target = $region48
        $region47: #{osblock_inin_forward.1} parent=11 // pred_region
          %466 = vsyncadd [#allocation15], 0
          %s468 = sshll.u32 %s9, 4
          %s469 = int_to_ptr.hbm [resolvable:$true] %s468
          %s470 = sshll.u32 [#allocation14], 4
          %s471 = int_to_ptr.vmem [resolvable:$true] %s470
          %473 = dma.hbm_to_vmem [thread:$0]  %s469, 16, %s471, [#allocation15]
        $region48: #{osblock_inin_forward.1} parent=11 // pred_fallthru
          _
        // Predicated region
        $region49: #{osblock_inin_forward.1} parent=11 // pred_check
          %p474 = pneg %p265
        $region50: #{osblock_inin_forward.1} parent=11 // pred_check_branch
          %476 = sbr.rel (%p474) target = $region52
        $region51: #{osblock_inin_forward.1} parent=11 // pred_region
          %478 = vsyncadd [#allocation15], 0
          %s479 = sshll.u32 %s10, 4
          %s480 = int_to_ptr.hbm [resolvable:$true] %s479
          %s481 = sshll.u32 [#allocation16], 4
          %s482 = int_to_ptr.vmem [resolvable:$true] %s481
          %487 = dma.hbm_to_vmem [thread:$0]  %s480, 8192, %s482, [#allocation15], 512, 512, 32
        $region52: #{osblock_inin_forward.1} parent=11 // pred_fallthru
          _
        // Predicated region
        $region53: #{osblock_inin_forward.1} parent=11 // pred_check
          %p488 = pneg %p286
        $region54: #{osblock_inin_forward.1} parent=11 // pred_check_branch
          %490 = sbr.rel (%p488) target = $region56
        $region55: #{osblock_inin_forward.1} parent=11 // pred_region
          %492 = vsyncadd [#allocation18], 0
          %s493 = sshll.u32 %s11, 4
          %s494 = int_to_ptr.hbm [resolvable:$true] %s493
          %s495 = sshll.u32 [#allocation17], 4
          %s496 = int_to_ptr.vmem [resolvable:$true] %s495
          %501 = dma.hbm_to_vmem [thread:$0]  %s494, 32768, %s496, [#allocation18], 512, 512, 32
        $region56: #{osblock_inin_forward.1} parent=11 // pred_fallthru
          _
        // Predicated region
        $region57: #{osblock_inin_forward.1} parent=11 // pred_check
          %p502 = pneg %p307
        $region58: #{osblock_inin_forward.1} parent=11 // pred_check_branch
          %504 = sbr.rel (%p502) target = $region60
        $region59: #{osblock_inin_forward.1} parent=11 // pred_region
          %506 = vsyncadd [#allocation18], 0
          %s508 = sshll.u32 %s12, 4
          %s509 = int_to_ptr.hbm [resolvable:$true] %s508
          %s510 = sshll.u32 [#allocation19], 4
          %s511 = int_to_ptr.vmem [resolvable:$true] %s510
          %513 = dma.hbm_to_vmem [thread:$0]  %s509, 64, %s511, [#allocation18]
        $region60: #{osblock_inin_forward.1} parent=11 // pred_fallthru
          _
        // Predicated region
        $region61: #{osblock_inin_forward.1} parent=11 // pred_check
          %p514 = pneg %p328
        $region62: #{osblock_inin_forward.1} parent=11 // pred_check_branch
          %516 = sbr.rel (%p514) target = $region64
        $region63: #{osblock_inin_forward.1} parent=11 // pred_region
          %518 = vsyncadd [#allocation21], 0
          %s520 = sshll.u32 %s13, 4
          %s521 = int_to_ptr.hbm [resolvable:$true] %s520
          %s522 = sshll.u32 [#allocation20], 4
          %s523 = int_to_ptr.vmem [resolvable:$true] %s522
          %525 = dma.hbm_to_vmem [thread:$0]  %s521, 64, %s523, [#allocation21]
        $region64: #{osblock_inin_forward.1} parent=11 // pred_fallthru
          _
      $region12: #{osblock_inin_forward.1} parent=5 // pred_fallthru
        _
      %p526 = scmp.lt.s32.totalorder %s29, 2
      // Predicated region
      $region65: #{osblock_inin_forward.1} parent=5 // pred_check
        %p527 = pneg %p526
      $region66: #{osblock_inin_forward.1} parent=5 // pred_check_branch
        %529 = sbr.rel (%p527) target = $region68
      $region67: #{osblock_inin_forward.1} parent=5 // pred_region
        // Predicated region
        $region69: #{osblock_inin_forward.1} parent=67 // pred_check
          %p530 = pneg %p49
        $region70: #{osblock_inin_forward.1} parent=67 // pred_check_branch
          %532 = sbr.rel (%p530) target = $region72
        $region71: #{osblock_inin_forward.1} parent=67 // pred_region
          %p533 = scmp.lt.s32.totalorder %s29, 1
          %s534 = scalar_select %p533, %s29, 1
          %s535 = smul.addr %s534, 8
          %s536 = scalar_lea.vmem %s0, %s535
        $region72: #{osblock_inin_forward.1} parent=67 // pred_fallthru
          _
      $region68: #{osblock_inin_forward.1} parent=5 // pred_fallthru
        _
      %p537 = scmp.le.s32.totalorder 1, %s29
      %p538 = scmp.lt.s32.totalorder %s29, 3
      %p539 = pnand %p537, %p538
      %p540 = pneg %p539
      // Predicated region
      $region73: #{osblock_inin_forward.1} parent=5 // pred_check
        _
      $region74: #{osblock_inin_forward.1} parent=5 // pred_check_branch
        %542 = sbr.rel (%p539) target = $region76
      $region75: #{osblock_inin_forward.1} parent=5 // pred_region
        %s543 = ssub.s32 %s29, 1
        // Predicated region
        $region77: #{osblock_inin_forward.1} parent=75 // pred_check
          %p544 = pneg %p76
        $region78: #{osblock_inin_forward.1} parent=75 // pred_check_branch
          %546 = sbr.rel (%p544) target = $region80
        $region79: #{osblock_inin_forward.1} parent=75 // pred_region
          %548 = dma.done [#allocation4], 10240
        $region80: #{osblock_inin_forward.1} parent=75 // pred_fallthru
          _
        // Predicated region
        $region81: #{osblock_inin_forward.1} parent=75 // pred_check
          %p549 = pneg %p97
        $region82: #{osblock_inin_forward.1} parent=75 // pred_check_branch
          %551 = sbr.rel (%p549) target = $region84
        $region83: #{osblock_inin_forward.1} parent=75 // pred_region
          %553 = dma.done [#allocation6], 16
        $region84: #{osblock_inin_forward.1} parent=75 // pred_fallthru
          _
        // Predicated region
        $region85: #{osblock_inin_forward.1} parent=75 // pred_check
          %p554 = pneg %p118
        $region86: #{osblock_inin_forward.1} parent=75 // pred_check_branch
          %556 = sbr.rel (%p554) target = $region88
        $region87: #{osblock_inin_forward.1} parent=75 // pred_region
          %558 = dma.done [#allocation6], 64
        $region88: #{osblock_inin_forward.1} parent=75 // pred_fallthru
          _
        // Predicated region
        $region89: #{osblock_inin_forward.1} parent=75 // pred_check
          %p559 = pneg %p139
        $region90: #{osblock_inin_forward.1} parent=75 // pred_check_branch
          %561 = sbr.rel (%p559) target = $region92
        $region91: #{osblock_inin_forward.1} parent=75 // pred_region
          %563 = dma.done [#allocation9], 61440
        $region92: #{osblock_inin_forward.1} parent=75 // pred_fallthru
          _
        // Predicated region
        $region93: #{osblock_inin_forward.1} parent=75 // pred_check
          %p564 = pneg %p160
        $region94: #{osblock_inin_forward.1} parent=75 // pred_check_branch
          %566 = sbr.rel (%p564) target = $region96
        $region95: #{osblock_inin_forward.1} parent=75 // pred_region
          %568 = dma.done [#allocation9], 256
        $region96: #{osblock_inin_forward.1} parent=75 // pred_fallthru
          _
        // Predicated region
        $region97: #{osblock_inin_forward.1} parent=75 // pred_check
          %p569 = pneg %p181
        $region98: #{osblock_inin_forward.1} parent=75 // pred_check_branch
          %571 = sbr.rel (%p569) target = $region100
        $region99: #{osblock_inin_forward.1} parent=75 // pred_region
          %573 = dma.done [#allocation12], 16
        $region100: #{osblock_inin_forward.1} parent=75 // pred_fallthru
          _
        // Predicated region
        $region101: #{osblock_inin_forward.1} parent=75 // pred_check
          %p574 = pneg %p223
        $region102: #{osblock_inin_forward.1} parent=75 // pred_check_branch
          %576 = sbr.rel (%p574) target = $region104
        $region103: #{osblock_inin_forward.1} parent=75 // pred_region
          %578 = dma.done [#allocation12], 16
        $region104: #{osblock_inin_forward.1} parent=75 // pred_fallthru
          _
        // Predicated region
        $region105: #{osblock_inin_forward.1} parent=75 // pred_check
          %p579 = pneg %p244
        $region106: #{osblock_inin_forward.1} parent=75 // pred_check_branch
          %581 = sbr.rel (%p579) target = $region108
        $region107: #{osblock_inin_forward.1} parent=75 // pred_region
          %583 = dma.done [#allocation15], 16
        $region108: #{osblock_inin_forward.1} parent=75 // pred_fallthru
          _
        // Predicated region
        $region109: #{osblock_inin_forward.1} parent=75 // pred_check
          %p584 = pneg %p265
        $region110: #{osblock_inin_forward.1} parent=75 // pred_check_branch
          %586 = sbr.rel (%p584) target = $region112
        $region111: #{osblock_inin_forward.1} parent=75 // pred_region
          %588 = dma.done [#allocation15], 8192
        $region112: #{osblock_inin_forward.1} parent=75 // pred_fallthru
          _
        // Predicated region
        $region113: #{osblock_inin_forward.1} parent=75 // pred_check
          %p589 = pneg %p286
        $region114: #{osblock_inin_forward.1} parent=75 // pred_check_branch
          %591 = sbr.rel (%p589) target = $region116
        $region115: #{osblock_inin_forward.1} parent=75 // pred_region
          %593 = dma.done [#allocation18], 32768
        $region116: #{osblock_inin_forward.1} parent=75 // pred_fallthru
          _
        // Predicated region
        $region117: #{osblock_inin_forward.1} parent=75 // pred_check
          %p594 = pneg %p307
        $region118: #{osblock_inin_forward.1} parent=75 // pred_check_branch
          %596 = sbr.rel (%p594) target = $region120
        $region119: #{osblock_inin_forward.1} parent=75 // pred_region
          %598 = dma.done [#allocation18], 64
        $region120: #{osblock_inin_forward.1} parent=75 // pred_fallthru
          _
        // Predicated region
        $region121: #{osblock_inin_forward.1} parent=75 // pred_check
          %p599 = pneg %p328
        $region122: #{osblock_inin_forward.1} parent=75 // pred_check_branch
          %601 = sbr.rel (%p599) target = $region124
        $region123: #{osblock_inin_forward.1} parent=75 // pred_region
          %603 = dma.done [#allocation21], 64
        $region124: #{osblock_inin_forward.1} parent=75 // pred_fallthru
          _
        %p604 = scmp.lt.s32.totalorder %s34, 1
        %s605 = scalar_select %p604, %s34, 1
        %s606 = smul.addr %s605, 8
        %s607 = scalar_lea.vmem %s0, %s606
        %p608 = pneg %p55
        %p609 = pneg %p52
        %p610 = pneg %p76
        %p611 = pneg %p73
        %p612 = pneg %p97
        %p613 = pneg %p94
        %p614 = pneg %p118
        %p615 = pneg %p115
        %p616 = pneg %p139
        %p617 = pneg %p136
        %p618 = pneg %p160
        %p619 = pneg %p157
        %p620 = pneg %p181
        %p621 = pneg %p178
        %p622 = pneg %p202
        %p623 = pneg %p199
        %p624 = pneg %p223
        %p625 = pneg %p220
        %p626 = pneg %p244
        %p627 = pneg %p241
        %p628 = pneg %p265
        %p629 = pneg %p262
        %p630 = pneg %p286
        %p631 = pneg %p283
        %p632 = pneg %p307
        %p633 = pneg %p304
        %p634 = pneg %p328
        %p635 = pneg %p325
        %p636 = pneg %p354
        %p637 = pneg %p351
        %p638 = scmp.lt.s32.totalorder %s34, 1
        %s639 = scalar_select %p638, %s34, 1
        %s640 = smul.addr %s639, 4
        %s641 = smul.addr %s640, 8
        %s642 = scalar_lea.vmem %s14, %s641
        %p643 = scmp.lt.s32.totalorder %s34, 1
        %s644 = scalar_select %p643, %s34, 1
        %s645 = smul.addr %s644, 8
        %s646 = scalar_lea.vmem %s0, %s645
        %p647 = scmp.lt.s32.totalorder %s34, 1
        %s648 = scalar_select %p647, %s34, 1
        %s649 = smul.addr %s648, 4
        %s650 = smul.addr %s649, 8
        %s651 = scalar_lea.vmem %s14, %s650
        %v652 = vld [vmem:[%s646] sm:$0xff]
        %v653 = vld [vmem:[#allocation3] sm:$0xff]
        %v654 = vld [vmem:[#allocation3 + $0x8] sm:$0xff]
        %v655 = vld [vmem:[#allocation3 + $0x10] sm:$0xff]
        %v656 = vld [vmem:[#allocation3 + $0x18] sm:$0xff]
        %v657 = vld [vmem:[#allocation3 + $0x20] sm:$0xff]
        %v658 = vld [vmem:[#allocation3 + $0x28] sm:$0xff]
        %v659 = vld [vmem:[#allocation3 + $0x30] sm:$0xff]
        %v660 = vld [vmem:[#allocation3 + $0x38] sm:$0xff]
        %v661 = vld [vmem:[#allocation3 + $0x40] sm:$0xff]
        %v662 = vld [vmem:[#allocation3 + $0x48] sm:$0xff]
        %v663 = vld [vmem:[#allocation3 + $0x50] sm:$0xff]
        %v664 = vld [vmem:[#allocation3 + $0x58] sm:$0xff]
        %v665 = vld [vmem:[#allocation3 + $0x60] sm:$0xff]
        %v666 = vld [vmem:[#allocation3 + $0x68] sm:$0xff]
        %v667 = vld [vmem:[#allocation3 + $0x70] sm:$0xff]
        %v668 = vld [vmem:[#allocation3 + $0x78] sm:$0xff]
        %v669 = vld [vmem:[#allocation3 + $0x80] sm:$0xff]
        %v670 = vld [vmem:[#allocation3 + $0x88] sm:$0xff]
        %v671 = vld [vmem:[#allocation3 + $0x90] sm:$0xff]
        %v672 = vld [vmem:[#allocation3 + $0x98] sm:$0xff]
        %v673 = vld [vmem:[#allocation3 + $0xa0] sm:$0xff]
        %v674 = vld [vmem:[#allocation3 + $0xa8] sm:$0xff]
        %v675 = vld [vmem:[#allocation3 + $0xb0] sm:$0xff]
        %v676 = vld [vmem:[#allocation3 + $0xb8] sm:$0xff]
        %v677 = vld [vmem:[#allocation3 + $0xc0] sm:$0xff]
        %v678 = vld [vmem:[#allocation3 + $0xc8] sm:$0xff]
        %v679 = vld [vmem:[#allocation3 + $0xd0] sm:$0xff]
        %v680 = vld [vmem:[#allocation3 + $0xd8] sm:$0xff]
        %v681 = vld [vmem:[#allocation3 + $0xe0] sm:$0xff]
        %v682 = vld [vmem:[#allocation3 + $0xe8] sm:$0xff]
        %v683 = vld [vmem:[#allocation3 + $0xf0] sm:$0xff]
        %v684 = vld [vmem:[#allocation3 + $0xf8] sm:$0xff]
        %v685 = vld [vmem:[#allocation3 + $0x100] sm:$0xff]
        %v686 = vld [vmem:[#allocation3 + $0x108] sm:$0xff]
        %v687 = vld [vmem:[#allocation3 + $0x110] sm:$0xff]
        %v688 = vld [vmem:[#allocation3 + $0x118] sm:$0xff]
        %v689 = vld [vmem:[#allocation3 + $0x120] sm:$0xff]
        %v690 = vld [vmem:[#allocation3 + $0x128] sm:$0xff]
        %v691 = vld [vmem:[#allocation3 + $0x130] sm:$0xff]
        %v692 = vld [vmem:[#allocation3 + $0x138] sm:$0xff]
        %v693 = vld [vmem:[#allocation3 + $0x140] sm:$0xff]
        %v694 = vld [vmem:[#allocation3 + $0x148] sm:$0xff]
        %v695 = vld [vmem:[#allocation3 + $0x150] sm:$0xff]
        %v696 = vld [vmem:[#allocation3 + $0x158] sm:$0xff]
        %v697 = vld [vmem:[#allocation3 + $0x160] sm:$0xff]
        %v698 = vld [vmem:[#allocation3 + $0x168] sm:$0xff]
        %v699 = vld [vmem:[#allocation3 + $0x170] sm:$0xff]
        %v700 = vld [vmem:[#allocation3 + $0x178] sm:$0xff]
        %v701 = vld [vmem:[#allocation3 + $0x180] sm:$0xff]
        %v702 = vld [vmem:[#allocation3 + $0x188] sm:$0xff]
        %v703 = vld [vmem:[#allocation3 + $0x190] sm:$0xff]
        %v704 = vld [vmem:[#allocation3 + $0x198] sm:$0xff]
        %v705 = vld [vmem:[#allocation3 + $0x1a0] sm:$0xff]
        %v706 = vld [vmem:[#allocation3 + $0x1a8] sm:$0xff]
        %v707 = vld [vmem:[#allocation3 + $0x1b0] sm:$0xff]
        %v708 = vld [vmem:[#allocation3 + $0x1b8] sm:$0xff]
        %v709 = vld [vmem:[#allocation3 + $0x1c0] sm:$0xff]
        %v710 = vld [vmem:[#allocation3 + $0x1c8] sm:$0xff]
        %v711 = vld [vmem:[#allocation3 + $0x1d0] sm:$0xff]
        %v712 = vld [vmem:[#allocation3 + $0x1d8] sm:$0xff]
        %v713 = vld [vmem:[#allocation3 + $0x1e0] sm:$0xff]
        %v714 = vld [vmem:[#allocation3 + $0x1e8] sm:$0xff]
        %v715 = vld [vmem:[#allocation3 + $0x1f0] sm:$0xff]
        %v716 = vld [vmem:[#allocation3 + $0x1f8] sm:$0xff]
        %v717 = vld [vmem:[#allocation3 + $0x200] sm:$0xff]
        %v718 = vld [vmem:[#allocation3 + $0x208] sm:$0xff]
        %v719 = vld [vmem:[#allocation3 + $0x210] sm:$0xff]
        %v720 = vld [vmem:[#allocation3 + $0x218] sm:$0xff]
        %v721 = vld [vmem:[#allocation3 + $0x220] sm:$0xff]
        %v722 = vld [vmem:[#allocation3 + $0x228] sm:$0xff]
        %v723 = vld [vmem:[#allocation3 + $0x230] sm:$0xff]
        %v724 = vld [vmem:[#allocation3 + $0x238] sm:$0xff]
        %v725 = vld [vmem:[#allocation3 + $0x240] sm:$0xff]
        %v726 = vld [vmem:[#allocation3 + $0x248] sm:$0xff]
        %v727 = vld [vmem:[#allocation3 + $0x250] sm:$0xff]
        %v728 = vld [vmem:[#allocation3 + $0x258] sm:$0xff]
        %v729 = vld [vmem:[#allocation3 + $0x260] sm:$0xff]
        %v730 = vld [vmem:[#allocation3 + $0x268] sm:$0xff]
        %v731 = vld [vmem:[#allocation3 + $0x270] sm:$0xff]
        %v732 = vld [vmem:[#allocation3 + $0x278] sm:$0xff]
        %733 = vmatpush.msra.mxu0 %v728
        %734 = vmatpush.msra.mxu0 %v723
        %735 = vmatpush.msra.mxu0 %v718
        %736 = vmatpush.msra.mxu0 %v713
        %737 = vmatpush.msra.mxu0 %v708
        %738 = vmatpush.msra.mxu0 %v703
        %739 = vmatpush.msra.mxu0 %v698
        %740 = vmatpush.msra.mxu0 %v693
        %741 = vmatpush.msra.mxu0 %v688
        %742 = vmatpush.msra.mxu0 %v683
        %743 = vmatpush.msra.mxu0 %v678
        %744 = vmatpush.msra.mxu0 %v673
        %745 = vmatpush.msra.mxu0 %v668
        %746 = vmatpush.msra.mxu0 %v663
        %747 = vmatpush.msra.mxu0 %v658
        %748 = vmatpush.msra.mxu0 %v653
        %749 = vmatmul.f32.gmra.mxu0 %v652
        %v750 = vpop.f32.mrf.mxu0
        %v751 = vadd.f32 0.0, %v750
        %752 = vdwg.mxu0
        %753 = vmatpush.msra.mxu0 %v729
        %754 = vmatpush.msra.mxu0 %v724
        %755 = vmatpush.msra.mxu0 %v719
        %756 = vmatpush.msra.mxu0 %v714
        %757 = vmatpush.msra.mxu0 %v709
        %758 = vmatpush.msra.mxu0 %v704
        %759 = vmatpush.msra.mxu0 %v699
        %760 = vmatpush.msra.mxu0 %v694
        %761 = vmatpush.msra.mxu0 %v689
        %762 = vmatpush.msra.mxu0 %v684
        %763 = vmatpush.msra.mxu0 %v679
        %764 = vmatpush.msra.mxu0 %v674
        %765 = vmatpush.msra.mxu0 %v669
        %766 = vmatpush.msra.mxu0 %v664
        %767 = vmatpush.msra.mxu0 %v659
        %768 = vmatpush.msra.mxu0 %v654
        %769 = vmatmul.f32.gmra.mxu0 %v652
        %v770 = vpop.f32.mrf.mxu0
        %v771 = vadd.f32 0.0, %v770
        %772 = vdwg.mxu0
        %773 = vmatpush.msra.mxu0 %v730
        %774 = vmatpush.msra.mxu0 %v725
        %775 = vmatpush.msra.mxu0 %v720
        %776 = vmatpush.msra.mxu0 %v715
        %777 = vmatpush.msra.mxu0 %v710
        %778 = vmatpush.msra.mxu0 %v705
        %779 = vmatpush.msra.mxu0 %v700
        %780 = vmatpush.msra.mxu0 %v695
        %781 = vmatpush.msra.mxu0 %v690
        %782 = vmatpush.msra.mxu0 %v685
        %783 = vmatpush.msra.mxu0 %v680
        %784 = vmatpush.msra.mxu0 %v675
        %785 = vmatpush.msra.mxu0 %v670
        %786 = vmatpush.msra.mxu0 %v665
        %787 = vmatpush.msra.mxu0 %v660
        %788 = vmatpush.msra.mxu0 %v655
        %789 = vmatmul.f32.gmra.mxu0 %v652
        %v790 = vpop.f32.mrf.mxu0
        %v791 = vadd.f32 0.0, %v790
        %792 = vdwg.mxu0
        %793 = vmatpush.msra.mxu0 %v731
        %794 = vmatpush.msra.mxu0 %v726
        %795 = vmatpush.msra.mxu0 %v721
        %796 = vmatpush.msra.mxu0 %v716
        %797 = vmatpush.msra.mxu0 %v711
        %798 = vmatpush.msra.mxu0 %v706
        %799 = vmatpush.msra.mxu0 %v701
        %800 = vmatpush.msra.mxu0 %v696
        %801 = vmatpush.msra.mxu0 %v691
        %802 = vmatpush.msra.mxu0 %v686
        %803 = vmatpush.msra.mxu0 %v681
        %804 = vmatpush.msra.mxu0 %v676
        %805 = vmatpush.msra.mxu0 %v671
        %806 = vmatpush.msra.mxu0 %v666
        %807 = vmatpush.msra.mxu0 %v661
        %808 = vmatpush.msra.mxu0 %v656
        %809 = vmatmul.f32.gmra.mxu0 %v652
        %v810 = vpop.f32.mrf.mxu0
        %v811 = vadd.f32 0.0, %v810
        %812 = vdwg.mxu0
        %813 = vmatpush.msra.mxu0 %v732
        %814 = vmatpush.msra.mxu0 %v727
        %815 = vmatpush.msra.mxu0 %v722
        %816 = vmatpush.msra.mxu0 %v717
        %817 = vmatpush.msra.mxu0 %v712
        %818 = vmatpush.msra.mxu0 %v707
        %819 = vmatpush.msra.mxu0 %v702
        %820 = vmatpush.msra.mxu0 %v697
        %821 = vmatpush.msra.mxu0 %v692
        %822 = vmatpush.msra.mxu0 %v687
        %823 = vmatpush.msra.mxu0 %v682
        %824 = vmatpush.msra.mxu0 %v677
        %825 = vmatpush.msra.mxu0 %v672
        %826 = vmatpush.msra.mxu0 %v667
        %827 = vmatpush.msra.mxu0 %v662
        %828 = vmatpush.msra.mxu0 %v657
        %829 = vmatmul.f32.gmra.mxu0 %v652
        %v830 = vpop.f32.mrf.mxu0
        %v831 = vadd.f32 0.0, %v830
        %832 = vdwg.mxu0
        %v833 = vld [vmem:[#allocation5] sm:$0x1]
        %v835 = vperm.slane %v833, 0
        %v837 = vadd.f32 %v751, %v835
        %v838 = vmax.f32 %v837, 0.0
        %v839 = vld [vmem:[#allocation7] sm:$0xf]
        %v841 = vperm.slane %v839, 0
        %v842 = vperm.slane %v839, 1
        %v843 = vperm.slane %v839, 2
        %v844 = vperm.slane %v839, 3
        %v849 = vadd.f32 %v771, %v841
        %v850 = vadd.f32 %v791, %v842
        %v851 = vadd.f32 %v811, %v843
        %v852 = vadd.f32 %v831, %v844
        %v853 = vld [vmem:[#allocation11] sm:$0x1]
        %v854 = vld [vmem:[#allocation2] sm:$0x1]
        %v855 = vld [vmem:[#allocation13] sm:$0x1]
        %v856 = vld [vmem:[#allocation14] sm:$0x1]
        %v857 = vld [vmem:[#allocation8] sm:$0xff]
        %v858 = vld [vmem:[#allocation8 + $0x8] sm:$0xff]
        %v859 = vld [vmem:[#allocation8 + $0x10] sm:$0xff]
        %v860 = vld [vmem:[#allocation8 + $0x18] sm:$0xff]
        %v861 = vld [vmem:[#allocation8 + $0x20] sm:$0xff]
        %v862 = vld [vmem:[#allocation8 + $0x28] sm:$0xff]
        %v863 = vld [vmem:[#allocation8 + $0x30] sm:$0xff]
        %v864 = vld [vmem:[#allocation8 + $0x38] sm:$0xff]
        %v865 = vld [vmem:[#allocation8 + $0x40] sm:$0xff]
        %v866 = vld [vmem:[#allocation8 + $0x48] sm:$0xff]
        %v867 = vld [vmem:[#allocation8 + $0x50] sm:$0xff]
        %v868 = vld [vmem:[#allocation8 + $0x58] sm:$0xff]
        %v869 = vld [vmem:[#allocation8 + $0x60] sm:$0xff]
        %v870 = vld [vmem:[#allocation8 + $0x68] sm:$0xff]
        %v871 = vld [vmem:[#allocation8 + $0x70] sm:$0xff]
        %v872 = vld [vmem:[#allocation8 + $0x78] sm:$0xff]
        %v873 = vld [vmem:[#allocation8 + $0x80] sm:$0xff]
        %v874 = vld [vmem:[#allocation8 + $0x88] sm:$0xff]
        %v875 = vld [vmem:[#allocation8 + $0x90] sm:$0xff]
        %v876 = vld [vmem:[#allocation8 + $0x98] sm:$0xff]
        %v877 = vld [vmem:[#allocation8 + $0xa0] sm:$0xff]
        %v878 = vld [vmem:[#allocation8 + $0xa8] sm:$0xff]
        %v879 = vld [vmem:[#allocation8 + $0xb0] sm:$0xff]
        %v880 = vld [vmem:[#allocation8 + $0xb8] sm:$0xff]
        %v881 = vld [vmem:[#allocation8 + $0xc0] sm:$0xff]
        %v882 = vld [vmem:[#allocation8 + $0xc8] sm:$0xff]
        %v883 = vld [vmem:[#allocation8 + $0xd0] sm:$0xff]
        %v884 = vld [vmem:[#allocation8 + $0xd8] sm:$0xff]
        %v885 = vld [vmem:[#allocation8 + $0xe0] sm:$0xff]
        %v886 = vld [vmem:[#allocation8 + $0xe8] sm:$0xff]
        %v887 = vld [vmem:[#allocation8 + $0xf0] sm:$0xff]
        %v888 = vld [vmem:[#allocation8 + $0xf8] sm:$0xff]
        %v889 = vld [vmem:[#allocation8 + $0x100] sm:$0xff]
        %v890 = vld [vmem:[#allocation8 + $0x108] sm:$0xff]
        %v891 = vld [vmem:[#allocation8 + $0x110] sm:$0xff]
        %v892 = vld [vmem:[#allocation8 + $0x118] sm:$0xff]
        %v893 = vld [vmem:[#allocation8 + $0x120] sm:$0xff]
        %v894 = vld [vmem:[#allocation8 + $0x128] sm:$0xff]
        %v895 = vld [vmem:[#allocation8 + $0x130] sm:$0xff]
        %v896 = vld [vmem:[#allocation8 + $0x138] sm:$0xff]
        %v897 = vld [vmem:[#allocation8 + $0x140] sm:$0xff]
        %v898 = vld [vmem:[#allocation8 + $0x148] sm:$0xff]
        %v899 = vld [vmem:[#allocation8 + $0x150] sm:$0xff]
        %v900 = vld [vmem:[#allocation8 + $0x158] sm:$0xff]
        %v901 = vld [vmem:[#allocation8 + $0x160] sm:$0xff]
        %v902 = vld [vmem:[#allocation8 + $0x168] sm:$0xff]
        %v903 = vld [vmem:[#allocation8 + $0x170] sm:$0xff]
        %v904 = vld [vmem:[#allocation8 + $0x178] sm:$0xff]
        %905 = vmatpush.msra.mxu0 %v902
        %906 = vmatpush.msra.mxu0 %v899
        %907 = vmatpush.msra.mxu0 %v896
        %908 = vmatpush.msra.mxu0 %v893
        %909 = vmatpush.msra.mxu0 %v890
        %910 = vmatpush.msra.mxu0 %v887
        %911 = vmatpush.msra.mxu0 %v884
        %912 = vmatpush.msra.mxu0 %v881
        %913 = vmatpush.msra.mxu0 %v878
        %914 = vmatpush.msra.mxu0 %v875
        %915 = vmatpush.msra.mxu0 %v872
        %916 = vmatpush.msra.mxu0 %v869
        %917 = vmatpush.msra.mxu0 %v866
        %918 = vmatpush.msra.mxu0 %v863
        %919 = vmatpush.msra.mxu0 %v860
        %920 = vmatpush.msra.mxu0 %v857
        %921 = vmatmul.f32.gmra.mxu0 %v838
        %v922 = vpop.f32.mrf.mxu0
        %v923 = vadd.f32 0.0, %v922
        %924 = vdwg.mxu0
        %925 = vmatpush.msra.mxu0 %v903
        %926 = vmatpush.msra.mxu0 %v900
        %927 = vmatpush.msra.mxu0 %v897
        %928 = vmatpush.msra.mxu0 %v894
        %929 = vmatpush.msra.mxu0 %v891
        %930 = vmatpush.msra.mxu0 %v888
        %931 = vmatpush.msra.mxu0 %v885
        %932 = vmatpush.msra.mxu0 %v882
        %933 = vmatpush.msra.mxu0 %v879
        %934 = vmatpush.msra.mxu0 %v876
        %935 = vmatpush.msra.mxu0 %v873
        %936 = vmatpush.msra.mxu0 %v870
        %937 = vmatpush.msra.mxu0 %v867
        %938 = vmatpush.msra.mxu0 %v864
        %939 = vmatpush.msra.mxu0 %v861
        %940 = vmatpush.msra.mxu0 %v858
        %941 = vmatmul.f32.gmra.mxu0 %v838
        %v942 = vpop.f32.mrf.mxu0
        %v943 = vadd.f32 0.0, %v942
        %944 = vdwg.mxu0
        %945 = vmatpush.msra.mxu0 %v904
        %946 = vmatpush.msra.mxu0 %v901
        %947 = vmatpush.msra.mxu0 %v898
        %948 = vmatpush.msra.mxu0 %v895
        %949 = vmatpush.msra.mxu0 %v892
        %950 = vmatpush.msra.mxu0 %v889
        %951 = vmatpush.msra.mxu0 %v886
        %952 = vmatpush.msra.mxu0 %v883
        %953 = vmatpush.msra.mxu0 %v880
        %954 = vmatpush.msra.mxu0 %v877
        %955 = vmatpush.msra.mxu0 %v874
        %956 = vmatpush.msra.mxu0 %v871
        %957 = vmatpush.msra.mxu0 %v868
        %958 = vmatpush.msra.mxu0 %v865
        %959 = vmatpush.msra.mxu0 %v862
        %960 = vmatpush.msra.mxu0 %v859
        %961 = vmatmul.f32.gmra.mxu0 %v838
        %v962 = vpop.f32.mrf.mxu0
        %v963 = vadd.f32 0.0, %v962
        %964 = vdwg.mxu0
        %v966 = vrot.slane %v923, 7
        %vm968 = vcmask 1040384
        %v969 = vsel %vm968, 0.0, %v966
        %v970 = vadd.f32 %v943, %v969
        %v972 = vrot.slane %v963, 1
        %vm974 = vcmask 1046528
        %v975 = vsel %vm974, %v972, 0.0
        %v976 = vadd.f32 %v970, %v975
        %v977 = vld [vmem:[#allocation10] sm:$0x1]
        %v978 = vperm.slane %v977, 0
        %v979 = vadd.f32 %v976, %v978
        %v980 = vmax.f32 %v979, 0.0
        %v981 = vrot.slane %v980, 4
        %v982 = vadd.f32 %v980, %v981
        %v983 = vrot.slane %v982, 2
        %v984 = vadd.f32 %v982, %v983
        %v985 = vrot.slane %v984, 1
        %v986 = vadd.f32 %v984, %v985
        %v987 = vmul.f32 %v986, %v853
        %v988 = vsel %vm968, %v987, 0.0
        %989 = vadd.xlane.f32.xlu0 %v988
        %v990 = vpop.xlane.xlu0 %989
        %v991 = vadd.f32 %v990, %v854
        %v992 = vmax.f32 %v991, 0.0
        %994 = vset.pattern.permute.xlu0 0
        %995 = vperm.xlu0 %994, %v992
        %v996 = vpop.permute.xlu0 %995
        %v998 = vmul.f32 %v996, %v855
        %v999 = vadd.f32 %v998, 0.0
        %v1000 = vadd.f32 %v999, %v856
        %v1001 = vxor.u32 %v1000, 2147483648
        %v1002 = vmul.f32 %v1001, 1.442695
        %v1003 = vpow.pop %v1002
        %v1004 = vadd.f32 %v1003, 1.0
        %v1005 = vrcp.pop %v1004
        %v1006 = vmul.f32 %v1004, %v1005
        %v1007 = vsub.f32 1.0, %v1006
        %v1008 = vmul.f32 %v1005, %v1007
        %v1009 = vadd.f32 %v1005, %v1008
        %vm1010 = vweird.f32 %v1004
        %vm1011 = vweird.f32 %v1005
        %vm1012 = vmor %vm1010, %vm1011
        %v1013 = vsel %vm1012, %v1005, %v1009
        %v1014 = vand.u32 2147483647, %v1004
        %vm1015 = vcmp.eq.f32.partialorder %v1014, 8.507059e+37
        %v1016 = vand.u32 %v1004, 2147483648
        %v1017 = vor.u32 1.1754944e-38, %v1016
        %v1018 = vsel %vm1015, %v1017, %v1013
        %v1019 = vmul.f32 1.0, %v1018
        %v1020 = vperm.slane %v1019, 0
        %v1021 = vmul.f32 %v980, %v1020
        %v1022 = vadd.f32 %v1021, 0.0
        %s1023 = scalar_lea.vmem [#allocation8], 384
        %v1024 = vld [vmem:[%s1023] sm:$0xff]
        %v1025 = vld [vmem:[%s1023 + $0x8] sm:$0xff]
        %v1026 = vld [vmem:[%s1023 + $0x10] sm:$0xff]
        %v1027 = vld [vmem:[%s1023 + $0x18] sm:$0xff]
        %v1028 = vld [vmem:[%s1023 + $0x20] sm:$0xff]
        %v1029 = vld [vmem:[%s1023 + $0x28] sm:$0xff]
        %v1030 = vld [vmem:[%s1023 + $0x30] sm:$0xff]
        %v1031 = vld [vmem:[%s1023 + $0x38] sm:$0xff]
        %v1032 = vld [vmem:[%s1023 + $0x40] sm:$0xff]
        %v1033 = vld [vmem:[%s1023 + $0x48] sm:$0xff]
        %v1034 = vld [vmem:[%s1023 + $0x50] sm:$0xff]
        %v1035 = vld [vmem:[%s1023 + $0x58] sm:$0xff]
        %v1036 = vld [vmem:[%s1023 + $0x60] sm:$0xff]
        %v1037 = vld [vmem:[%s1023 + $0x68] sm:$0xff]
        %v1038 = vld [vmem:[%s1023 + $0x70] sm:$0xff]
        %v1039 = vld [vmem:[%s1023 + $0x78] sm:$0xff]
        %v1040 = vld [vmem:[%s1023 + $0x80] sm:$0xff]
        %v1041 = vld [vmem:[%s1023 + $0x88] sm:$0xff]
        %v1042 = vld [vmem:[%s1023 + $0x90] sm:$0xff]
        %v1043 = vld [vmem:[%s1023 + $0x98] sm:$0xff]
        %v1044 = vld [vmem:[%s1023 + $0xa0] sm:$0xff]
        %v1045 = vld [vmem:[%s1023 + $0xa8] sm:$0xff]
        %v1046 = vld [vmem:[%s1023 + $0xb0] sm:$0xff]
        %v1047 = vld [vmem:[%s1023 + $0xb8] sm:$0xff]
        %v1048 = vld [vmem:[%s1023 + $0xc0] sm:$0xff]
        %v1049 = vld [vmem:[%s1023 + $0xc8] sm:$0xff]
        %v1050 = vld [vmem:[%s1023 + $0xd0] sm:$0xff]
        %v1051 = vld [vmem:[%s1023 + $0xd8] sm:$0xff]
        %v1052 = vld [vmem:[%s1023 + $0xe0] sm:$0xff]
        %v1053 = vld [vmem:[%s1023 + $0xe8] sm:$0xff]
        %v1054 = vld [vmem:[%s1023 + $0xf0] sm:$0xff]
        %v1055 = vld [vmem:[%s1023 + $0xf8] sm:$0xff]
        %v1056 = vld [vmem:[%s1023 + $0x100] sm:$0xff]
        %v1057 = vld [vmem:[%s1023 + $0x108] sm:$0xff]
        %v1058 = vld [vmem:[%s1023 + $0x110] sm:$0xff]
        %v1059 = vld [vmem:[%s1023 + $0x118] sm:$0xff]
        %v1060 = vld [vmem:[%s1023 + $0x120] sm:$0xff]
        %v1061 = vld [vmem:[%s1023 + $0x128] sm:$0xff]
        %v1062 = vld [vmem:[%s1023 + $0x130] sm:$0xff]
        %v1063 = vld [vmem:[%s1023 + $0x138] sm:$0xff]
        %v1064 = vld [vmem:[%s1023 + $0x140] sm:$0xff]
        %v1065 = vld [vmem:[%s1023 + $0x148] sm:$0xff]
        %v1066 = vld [vmem:[%s1023 + $0x150] sm:$0xff]
        %v1067 = vld [vmem:[%s1023 + $0x158] sm:$0xff]
        %v1068 = vld [vmem:[%s1023 + $0x160] sm:$0xff]
        %v1069 = vld [vmem:[%s1023 + $0x168] sm:$0xff]
        %v1070 = vld [vmem:[%s1023 + $0x170] sm:$0xff]
        %v1071 = vld [vmem:[%s1023 + $0x178] sm:$0xff]
        %1072 = vmatpush.msra.mxu0 %v1069
        %1073 = vmatpush.msra.mxu0 %v1066
        %1074 = vmatpush.msra.mxu0 %v1063
        %1075 = vmatpush.msra.mxu0 %v1060
        %1076 = vmatpush.msra.mxu0 %v1057
        %1077 = vmatpush.msra.mxu0 %v1054
        %1078 = vmatpush.msra.mxu0 %v1051
        %1079 = vmatpush.msra.mxu0 %v1048
        %1080 = vmatpush.msra.mxu0 %v1045
        %1081 = vmatpush.msra.mxu0 %v1042
        %1082 = vmatpush.msra.mxu0 %v1039
        %1083 = vmatpush.msra.mxu0 %v1036
        %1084 = vmatpush.msra.mxu0 %v1033
        %1085 = vmatpush.msra.mxu0 %v1030
        %1086 = vmatpush.msra.mxu0 %v1027
        %1087 = vmatpush.msra.mxu0 %v1024
        %1088 = vmatmul.f32.gmra.mxu0 %v838
        %v1089 = vpop.f32.mrf.mxu0
        %v1090 = vadd.f32 0.0, %v1089
        %1091 = vdwg.mxu0
        %1092 = vmatpush.msra.mxu0 %v1070
        %1093 = vmatpush.msra.mxu0 %v1067
        %1094 = vmatpush.msra.mxu0 %v1064
        %1095 = vmatpush.msra.mxu0 %v1061
        %1096 = vmatpush.msra.mxu0 %v1058
        %1097 = vmatpush.msra.mxu0 %v1055
        %1098 = vmatpush.msra.mxu0 %v1052
        %1099 = vmatpush.msra.mxu0 %v1049
        %1100 = vmatpush.msra.mxu0 %v1046
        %1101 = vmatpush.msra.mxu0 %v1043
        %1102 = vmatpush.msra.mxu0 %v1040
        %1103 = vmatpush.msra.mxu0 %v1037
        %1104 = vmatpush.msra.mxu0 %v1034
        %1105 = vmatpush.msra.mxu0 %v1031
        %1106 = vmatpush.msra.mxu0 %v1028
        %1107 = vmatpush.msra.mxu0 %v1025
        %1108 = vmatmul.f32.gmra.mxu0 %v838
        %v1109 = vpop.f32.mrf.mxu0
        %v1110 = vadd.f32 0.0, %v1109
        %1111 = vdwg.mxu0
        %1112 = vmatpush.msra.mxu0 %v1071
        %1113 = vmatpush.msra.mxu0 %v1068
        %1114 = vmatpush.msra.mxu0 %v1065
        %1115 = vmatpush.msra.mxu0 %v1062
        %1116 = vmatpush.msra.mxu0 %v1059
        %1117 = vmatpush.msra.mxu0 %v1056
        %1118 = vmatpush.msra.mxu0 %v1053
        %1119 = vmatpush.msra.mxu0 %v1050
        %1120 = vmatpush.msra.mxu0 %v1047
        %1121 = vmatpush.msra.mxu0 %v1044
        %1122 = vmatpush.msra.mxu0 %v1041
        %1123 = vmatpush.msra.mxu0 %v1038
        %1124 = vmatpush.msra.mxu0 %v1035
        %1125 = vmatpush.msra.mxu0 %v1032
        %1126 = vmatpush.msra.mxu0 %v1029
        %1127 = vmatpush.msra.mxu0 %v1026
        %1128 = vmatmul.f32.gmra.mxu0 %v838
        %v1129 = vpop.f32.mrf.mxu0
        %v1130 = vadd.f32 0.0, %v1129
        %1131 = vdwg.mxu0
        %v1133 = vrot.slane %v1090, 7
        %v1135 = vsel %vm968, 0.0, %v1133
        %v1136 = vadd.f32 %v1110, %v1135
        %v1138 = vrot.slane %v1130, 1
        %v1140 = vsel %vm974, %v1138, 0.0
        %v1141 = vadd.f32 %v1136, %v1140
        %v1142 = vld [vmem:[#allocation10 + $0x1] sm:$0x1]
        %v1143 = vperm.slane %v1142, 0
        %v1144 = vadd.f32 %v1141, %v1143
        %v1145 = vmax.f32 %v1144, 0.0
        %s1146 = scalar_lea.vmem [#allocation8], 768
        %v1147 = vld [vmem:[%s1146] sm:$0xff]
        %v1148 = vld [vmem:[%s1146 + $0x8] sm:$0xff]
        %v1149 = vld [vmem:[%s1146 + $0x10] sm:$0xff]
        %v1150 = vld [vmem:[%s1146 + $0x18] sm:$0xff]
        %v1151 = vld [vmem:[%s1146 + $0x20] sm:$0xff]
        %v1152 = vld [vmem:[%s1146 + $0x28] sm:$0xff]
        %v1153 = vld [vmem:[%s1146 + $0x30] sm:$0xff]
        %v1154 = vld [vmem:[%s1146 + $0x38] sm:$0xff]
        %v1155 = vld [vmem:[%s1146 + $0x40] sm:$0xff]
        %v1156 = vld [vmem:[%s1146 + $0x48] sm:$0xff]
        %v1157 = vld [vmem:[%s1146 + $0x50] sm:$0xff]
        %v1158 = vld [vmem:[%s1146 + $0x58] sm:$0xff]
        %v1159 = vld [vmem:[%s1146 + $0x60] sm:$0xff]
        %v1160 = vld [vmem:[%s1146 + $0x68] sm:$0xff]
        %v1161 = vld [vmem:[%s1146 + $0x70] sm:$0xff]
        %v1162 = vld [vmem:[%s1146 + $0x78] sm:$0xff]
        %v1163 = vld [vmem:[%s1146 + $0x80] sm:$0xff]
        %v1164 = vld [vmem:[%s1146 + $0x88] sm:$0xff]
        %v1165 = vld [vmem:[%s1146 + $0x90] sm:$0xff]
        %v1166 = vld [vmem:[%s1146 + $0x98] sm:$0xff]
        %v1167 = vld [vmem:[%s1146 + $0xa0] sm:$0xff]
        %v1168 = vld [vmem:[%s1146 + $0xa8] sm:$0xff]
        %v1169 = vld [vmem:[%s1146 + $0xb0] sm:$0xff]
        %v1170 = vld [vmem:[%s1146 + $0xb8] sm:$0xff]
        %v1171 = vld [vmem:[%s1146 + $0xc0] sm:$0xff]
        %v1172 = vld [vmem:[%s1146 + $0xc8] sm:$0xff]
        %v1173 = vld [vmem:[%s1146 + $0xd0] sm:$0xff]
        %v1174 = vld [vmem:[%s1146 + $0xd8] sm:$0xff]
        %v1175 = vld [vmem:[%s1146 + $0xe0] sm:$0xff]
        %v1176 = vld [vmem:[%s1146 + $0xe8] sm:$0xff]
        %v1177 = vld [vmem:[%s1146 + $0xf0] sm:$0xff]
        %v1178 = vld [vmem:[%s1146 + $0xf8] sm:$0xff]
        %v1179 = vld [vmem:[%s1146 + $0x100] sm:$0xff]
        %v1180 = vld [vmem:[%s1146 + $0x108] sm:$0xff]
        %v1181 = vld [vmem:[%s1146 + $0x110] sm:$0xff]
        %v1182 = vld [vmem:[%s1146 + $0x118] sm:$0xff]
        %v1183 = vld [vmem:[%s1146 + $0x120] sm:$0xff]
        %v1184 = vld [vmem:[%s1146 + $0x128] sm:$0xff]
        %v1185 = vld [vmem:[%s1146 + $0x130] sm:$0xff]
        %v1186 = vld [vmem:[%s1146 + $0x138] sm:$0xff]
        %v1187 = vld [vmem:[%s1146 + $0x140] sm:$0xff]
        %v1188 = vld [vmem:[%s1146 + $0x148] sm:$0xff]
        %v1189 = vld [vmem:[%s1146 + $0x150] sm:$0xff]
        %v1190 = vld [vmem:[%s1146 + $0x158] sm:$0xff]
        %v1191 = vld [vmem:[%s1146 + $0x160] sm:$0xff]
        %v1192 = vld [vmem:[%s1146 + $0x168] sm:$0xff]
        %v1193 = vld [vmem:[%s1146 + $0x170] sm:$0xff]
        %v1194 = vld [vmem:[%s1146 + $0x178] sm:$0xff]
        %1195 = vmatpush.msra.mxu0 %v1192
        %1196 = vmatpush.msra.mxu0 %v1189
        %1197 = vmatpush.msra.mxu0 %v1186
        %1198 = vmatpush.msra.mxu0 %v1183
        %1199 = vmatpush.msra.mxu0 %v1180
        %1200 = vmatpush.msra.mxu0 %v1177
        %1201 = vmatpush.msra.mxu0 %v1174
        %1202 = vmatpush.msra.mxu0 %v1171
        %1203 = vmatpush.msra.mxu0 %v1168
        %1204 = vmatpush.msra.mxu0 %v1165
        %1205 = vmatpush.msra.mxu0 %v1162
        %1206 = vmatpush.msra.mxu0 %v1159
        %1207 = vmatpush.msra.mxu0 %v1156
        %1208 = vmatpush.msra.mxu0 %v1153
        %1209 = vmatpush.msra.mxu0 %v1150
        %1210 = vmatpush.msra.mxu0 %v1147
        %1211 = vmatmul.f32.gmra.mxu0 %v1145
        %v1212 = vpop.f32.mrf.mxu0
        %v1213 = vadd.f32 0.0, %v1212
        %1214 = vdwg.mxu0
        %1215 = vmatpush.msra.mxu0 %v1193
        %1216 = vmatpush.msra.mxu0 %v1190
        %1217 = vmatpush.msra.mxu0 %v1187
        %1218 = vmatpush.msra.mxu0 %v1184
        %1219 = vmatpush.msra.mxu0 %v1181
        %1220 = vmatpush.msra.mxu0 %v1178
        %1221 = vmatpush.msra.mxu0 %v1175
        %1222 = vmatpush.msra.mxu0 %v1172
        %1223 = vmatpush.msra.mxu0 %v1169
        %1224 = vmatpush.msra.mxu0 %v1166
        %1225 = vmatpush.msra.mxu0 %v1163
        %1226 = vmatpush.msra.mxu0 %v1160
        %1227 = vmatpush.msra.mxu0 %v1157
        %1228 = vmatpush.msra.mxu0 %v1154
        %1229 = vmatpush.msra.mxu0 %v1151
        %1230 = vmatpush.msra.mxu0 %v1148
        %1231 = vmatmul.f32.gmra.mxu0 %v1145
        %v1232 = vpop.f32.mrf.mxu0
        %v1233 = vadd.f32 0.0, %v1232
        %1234 = vdwg.mxu0
        %1235 = vmatpush.msra.mxu0 %v1194
        %1236 = vmatpush.msra.mxu0 %v1191
        %1237 = vmatpush.msra.mxu0 %v1188
        %1238 = vmatpush.msra.mxu0 %v1185
        %1239 = vmatpush.msra.mxu0 %v1182
        %1240 = vmatpush.msra.mxu0 %v1179
        %1241 = vmatpush.msra.mxu0 %v1176
        %1242 = vmatpush.msra.mxu0 %v1173
        %1243 = vmatpush.msra.mxu0 %v1170
        %1244 = vmatpush.msra.mxu0 %v1167
        %1245 = vmatpush.msra.mxu0 %v1164
        %1246 = vmatpush.msra.mxu0 %v1161
        %1247 = vmatpush.msra.mxu0 %v1158
        %1248 = vmatpush.msra.mxu0 %v1155
        %1249 = vmatpush.msra.mxu0 %v1152
        %1250 = vmatpush.msra.mxu0 %v1149
        %1251 = vmatmul.f32.gmra.mxu0 %v1145
        %v1252 = vpop.f32.mrf.mxu0
        %v1253 = vadd.f32 0.0, %v1252
        %1254 = vdwg.mxu0
        %v1256 = vrot.slane %v1213, 7
        %v1258 = vsel %vm968, 0.0, %v1256
        %v1259 = vadd.f32 %v1233, %v1258
        %v1261 = vrot.slane %v1253, 1
        %v1263 = vsel %vm974, %v1261, 0.0
        %v1264 = vadd.f32 %v1259, %v1263
        %v1265 = vld [vmem:[#allocation10 + $0x2] sm:$0x1]
        %v1266 = vperm.slane %v1265, 0
        %v1267 = vadd.f32 %v1264, %v1266
        %v1268 = vmax.f32 %v1267, 0.0
        %v1269 = vrot.slane %v1268, 4
        %v1270 = vadd.f32 %v1268, %v1269
        %v1271 = vrot.slane %v1270, 2
        %v1272 = vadd.f32 %v1270, %v1271
        %v1273 = vrot.slane %v1272, 1
        %v1274 = vadd.f32 %v1272, %v1273
        %v1275 = vmul.f32 %v1274, %v853
        %v1276 = vsel %vm968, %v1275, 0.0
        %1277 = vadd.xlane.f32.xlu0 %v1276
        %v1278 = vpop.xlane.xlu0 %1277
        %v1279 = vadd.f32 %v1278, %v854
        %v1280 = vmax.f32 %v1279, 0.0
        %1282 = vset.pattern.permute.xlu0 0
        %1283 = vperm.xlu0 %1282, %v1280
        %v1284 = vpop.permute.xlu0 %1283
        %v1286 = vmul.f32 %v1284, %v855
        %v1287 = vadd.f32 %v1286, 0.0
        %v1288 = vadd.f32 %v1287, %v856
        %v1289 = vxor.u32 %v1288, 2147483648
        %v1290 = vmul.f32 %v1289, 1.442695
        %v1291 = vpow.pop %v1290
        %v1292 = vadd.f32 %v1291, 1.0
        %v1293 = vrcp.pop %v1292
        %v1294 = vmul.f32 %v1292, %v1293
        %v1295 = vsub.f32 1.0, %v1294
        %v1296 = vmul.f32 %v1293, %v1295
        %v1297 = vadd.f32 %v1293, %v1296
        %vm1298 = vweird.f32 %v1292
        %vm1299 = vweird.f32 %v1293
        %vm1300 = vmor %vm1298, %vm1299
        %v1301 = vsel %vm1300, %v1293, %v1297
        %v1302 = vand.u32 2147483647, %v1292
        %vm1303 = vcmp.eq.f32.partialorder %v1302, 8.507059e+37
        %v1304 = vand.u32 %v1292, 2147483648
        %v1305 = vor.u32 1.1754944e-38, %v1304
        %v1306 = vsel %vm1303, %v1305, %v1301
        %v1307 = vmul.f32 1.0, %v1306
        %v1308 = vperm.slane %v1307, 0
        %v1309 = vmul.f32 %v1268, %v1308
        %v1310 = vadd.f32 %v1022, %v1309
        %s1311 = scalar_lea.vmem [#allocation8], 1152
        %v1312 = vld [vmem:[%s1311] sm:$0xff]
        %v1313 = vld [vmem:[%s1311 + $0x8] sm:$0xff]
        %v1314 = vld [vmem:[%s1311 + $0x10] sm:$0xff]
        %v1315 = vld [vmem:[%s1311 + $0x18] sm:$0xff]
        %v1316 = vld [vmem:[%s1311 + $0x20] sm:$0xff]
        %v1317 = vld [vmem:[%s1311 + $0x28] sm:$0xff]
        %v1318 = vld [vmem:[%s1311 + $0x30] sm:$0xff]
        %v1319 = vld [vmem:[%s1311 + $0x38] sm:$0xff]
        %v1320 = vld [vmem:[%s1311 + $0x40] sm:$0xff]
        %v1321 = vld [vmem:[%s1311 + $0x48] sm:$0xff]
        %v1322 = vld [vmem:[%s1311 + $0x50] sm:$0xff]
        %v1323 = vld [vmem:[%s1311 + $0x58] sm:$0xff]
        %v1324 = vld [vmem:[%s1311 + $0x60] sm:$0xff]
        %v1325 = vld [vmem:[%s1311 + $0x68] sm:$0xff]
        %v1326 = vld [vmem:[%s1311 + $0x70] sm:$0xff]
        %v1327 = vld [vmem:[%s1311 + $0x78] sm:$0xff]
        %v1328 = vld [vmem:[%s1311 + $0x80] sm:$0xff]
        %v1329 = vld [vmem:[%s1311 + $0x88] sm:$0xff]
        %v1330 = vld [vmem:[%s1311 + $0x90] sm:$0xff]
        %v1331 = vld [vmem:[%s1311 + $0x98] sm:$0xff]
        %v1332 = vld [vmem:[%s1311 + $0xa0] sm:$0xff]
        %v1333 = vld [vmem:[%s1311 + $0xa8] sm:$0xff]
        %v1334 = vld [vmem:[%s1311 + $0xb0] sm:$0xff]
        %v1335 = vld [vmem:[%s1311 + $0xb8] sm:$0xff]
        %v1336 = vld [vmem:[%s1311 + $0xc0] sm:$0xff]
        %v1337 = vld [vmem:[%s1311 + $0xc8] sm:$0xff]
        %v1338 = vld [vmem:[%s1311 + $0xd0] sm:$0xff]
        %v1339 = vld [vmem:[%s1311 + $0xd8] sm:$0xff]
        %v1340 = vld [vmem:[%s1311 + $0xe0] sm:$0xff]
        %v1341 = vld [vmem:[%s1311 + $0xe8] sm:$0xff]
        %v1342 = vld [vmem:[%s1311 + $0xf0] sm:$0xff]
        %v1343 = vld [vmem:[%s1311 + $0xf8] sm:$0xff]
        %v1344 = vld [vmem:[%s1311 + $0x100] sm:$0xff]
        %v1345 = vld [vmem:[%s1311 + $0x108] sm:$0xff]
        %v1346 = vld [vmem:[%s1311 + $0x110] sm:$0xff]
        %v1347 = vld [vmem:[%s1311 + $0x118] sm:$0xff]
        %v1348 = vld [vmem:[%s1311 + $0x120] sm:$0xff]
        %v1349 = vld [vmem:[%s1311 + $0x128] sm:$0xff]
        %v1350 = vld [vmem:[%s1311 + $0x130] sm:$0xff]
        %v1351 = vld [vmem:[%s1311 + $0x138] sm:$0xff]
        %v1352 = vld [vmem:[%s1311 + $0x140] sm:$0xff]
        %v1353 = vld [vmem:[%s1311 + $0x148] sm:$0xff]
        %v1354 = vld [vmem:[%s1311 + $0x150] sm:$0xff]
        %v1355 = vld [vmem:[%s1311 + $0x158] sm:$0xff]
        %v1356 = vld [vmem:[%s1311 + $0x160] sm:$0xff]
        %v1357 = vld [vmem:[%s1311 + $0x168] sm:$0xff]
        %v1358 = vld [vmem:[%s1311 + $0x170] sm:$0xff]
        %v1359 = vld [vmem:[%s1311 + $0x178] sm:$0xff]
        %1360 = vmatpush.msra.mxu0 %v1357
        %1361 = vmatpush.msra.mxu0 %v1354
        %1362 = vmatpush.msra.mxu0 %v1351
        %1363 = vmatpush.msra.mxu0 %v1348
        %1364 = vmatpush.msra.mxu0 %v1345
        %1365 = vmatpush.msra.mxu0 %v1342
        %1366 = vmatpush.msra.mxu0 %v1339
        %1367 = vmatpush.msra.mxu0 %v1336
        %1368 = vmatpush.msra.mxu0 %v1333
        %1369 = vmatpush.msra.mxu0 %v1330
        %1370 = vmatpush.msra.mxu0 %v1327
        %1371 = vmatpush.msra.mxu0 %v1324
        %1372 = vmatpush.msra.mxu0 %v1321
        %1373 = vmatpush.msra.mxu0 %v1318
        %1374 = vmatpush.msra.mxu0 %v1315
        %1375 = vmatpush.msra.mxu0 %v1312
        %1376 = vmatmul.f32.gmra.mxu0 %v838
        %v1377 = vpop.f32.mrf.mxu0
        %v1378 = vadd.f32 0.0, %v1377
        %1379 = vdwg.mxu0
        %1380 = vmatpush.msra.mxu0 %v1358
        %1381 = vmatpush.msra.mxu0 %v1355
        %1382 = vmatpush.msra.mxu0 %v1352
        %1383 = vmatpush.msra.mxu0 %v1349
        %1384 = vmatpush.msra.mxu0 %v1346
        %1385 = vmatpush.msra.mxu0 %v1343
        %1386 = vmatpush.msra.mxu0 %v1340
        %1387 = vmatpush.msra.mxu0 %v1337
        %1388 = vmatpush.msra.mxu0 %v1334
        %1389 = vmatpush.msra.mxu0 %v1331
        %1390 = vmatpush.msra.mxu0 %v1328
        %1391 = vmatpush.msra.mxu0 %v1325
        %1392 = vmatpush.msra.mxu0 %v1322
        %1393 = vmatpush.msra.mxu0 %v1319
        %1394 = vmatpush.msra.mxu0 %v1316
        %1395 = vmatpush.msra.mxu0 %v1313
        %1396 = vmatmul.f32.gmra.mxu0 %v838
        %v1397 = vpop.f32.mrf.mxu0
        %v1398 = vadd.f32 0.0, %v1397
        %1399 = vdwg.mxu0
        %1400 = vmatpush.msra.mxu0 %v1359
        %1401 = vmatpush.msra.mxu0 %v1356
        %1402 = vmatpush.msra.mxu0 %v1353
        %1403 = vmatpush.msra.mxu0 %v1350
        %1404 = vmatpush.msra.mxu0 %v1347
        %1405 = vmatpush.msra.mxu0 %v1344
        %1406 = vmatpush.msra.mxu0 %v1341
        %1407 = vmatpush.msra.mxu0 %v1338
        %1408 = vmatpush.msra.mxu0 %v1335
        %1409 = vmatpush.msra.mxu0 %v1332
        %1410 = vmatpush.msra.mxu0 %v1329
        %1411 = vmatpush.msra.mxu0 %v1326
        %1412 = vmatpush.msra.mxu0 %v1323
        %1413 = vmatpush.msra.mxu0 %v1320
        %1414 = vmatpush.msra.mxu0 %v1317
        %1415 = vmatpush.msra.mxu0 %v1314
        %1416 = vmatmul.f32.gmra.mxu0 %v838
        %v1417 = vpop.f32.mrf.mxu0
        %v1418 = vadd.f32 0.0, %v1417
        %1419 = vdwg.mxu0
        %v1421 = vrot.slane %v1378, 7
        %v1423 = vsel %vm968, 0.0, %v1421
        %v1424 = vadd.f32 %v1398, %v1423
        %v1426 = vrot.slane %v1418, 1
        %v1428 = vsel %vm974, %v1426, 0.0
        %v1429 = vadd.f32 %v1424, %v1428
        %v1430 = vld [vmem:[#allocation10 + $0x3] sm:$0x1]
        %v1431 = vperm.slane %v1430, 0
        %v1432 = vadd.f32 %v1429, %v1431
        %v1433 = vmax.f32 %v1432, 0.0
        %s1434 = scalar_lea.vmem [#allocation8], 1536
        %v1435 = vld [vmem:[%s1434] sm:$0xff]
        %v1436 = vld [vmem:[%s1434 + $0x8] sm:$0xff]
        %v1437 = vld [vmem:[%s1434 + $0x10] sm:$0xff]
        %v1438 = vld [vmem:[%s1434 + $0x18] sm:$0xff]
        %v1439 = vld [vmem:[%s1434 + $0x20] sm:$0xff]
        %v1440 = vld [vmem:[%s1434 + $0x28] sm:$0xff]
        %v1441 = vld [vmem:[%s1434 + $0x30] sm:$0xff]
        %v1442 = vld [vmem:[%s1434 + $0x38] sm:$0xff]
        %v1443 = vld [vmem:[%s1434 + $0x40] sm:$0xff]
        %v1444 = vld [vmem:[%s1434 + $0x48] sm:$0xff]
        %v1445 = vld [vmem:[%s1434 + $0x50] sm:$0xff]
        %v1446 = vld [vmem:[%s1434 + $0x58] sm:$0xff]
        %v1447 = vld [vmem:[%s1434 + $0x60] sm:$0xff]
        %v1448 = vld [vmem:[%s1434 + $0x68] sm:$0xff]
        %v1449 = vld [vmem:[%s1434 + $0x70] sm:$0xff]
        %v1450 = vld [vmem:[%s1434 + $0x78] sm:$0xff]
        %v1451 = vld [vmem:[%s1434 + $0x80] sm:$0xff]
        %v1452 = vld [vmem:[%s1434 + $0x88] sm:$0xff]
        %v1453 = vld [vmem:[%s1434 + $0x90] sm:$0xff]
        %v1454 = vld [vmem:[%s1434 + $0x98] sm:$0xff]
        %v1455 = vld [vmem:[%s1434 + $0xa0] sm:$0xff]
        %v1456 = vld [vmem:[%s1434 + $0xa8] sm:$0xff]
        %v1457 = vld [vmem:[%s1434 + $0xb0] sm:$0xff]
        %v1458 = vld [vmem:[%s1434 + $0xb8] sm:$0xff]
        %v1459 = vld [vmem:[%s1434 + $0xc0] sm:$0xff]
        %v1460 = vld [vmem:[%s1434 + $0xc8] sm:$0xff]
        %v1461 = vld [vmem:[%s1434 + $0xd0] sm:$0xff]
        %v1462 = vld [vmem:[%s1434 + $0xd8] sm:$0xff]
        %v1463 = vld [vmem:[%s1434 + $0xe0] sm:$0xff]
        %v1464 = vld [vmem:[%s1434 + $0xe8] sm:$0xff]
        %v1465 = vld [vmem:[%s1434 + $0xf0] sm:$0xff]
        %v1466 = vld [vmem:[%s1434 + $0xf8] sm:$0xff]
        %v1467 = vld [vmem:[%s1434 + $0x100] sm:$0xff]
        %v1468 = vld [vmem:[%s1434 + $0x108] sm:$0xff]
        %v1469 = vld [vmem:[%s1434 + $0x110] sm:$0xff]
        %v1470 = vld [vmem:[%s1434 + $0x118] sm:$0xff]
        %v1471 = vld [vmem:[%s1434 + $0x120] sm:$0xff]
        %v1472 = vld [vmem:[%s1434 + $0x128] sm:$0xff]
        %v1473 = vld [vmem:[%s1434 + $0x130] sm:$0xff]
        %v1474 = vld [vmem:[%s1434 + $0x138] sm:$0xff]
        %v1475 = vld [vmem:[%s1434 + $0x140] sm:$0xff]
        %v1476 = vld [vmem:[%s1434 + $0x148] sm:$0xff]
        %v1477 = vld [vmem:[%s1434 + $0x150] sm:$0xff]
        %v1478 = vld [vmem:[%s1434 + $0x158] sm:$0xff]
        %v1479 = vld [vmem:[%s1434 + $0x160] sm:$0xff]
        %v1480 = vld [vmem:[%s1434 + $0x168] sm:$0xff]
        %v1481 = vld [vmem:[%s1434 + $0x170] sm:$0xff]
        %v1482 = vld [vmem:[%s1434 + $0x178] sm:$0xff]
        %1483 = vmatpush.msra.mxu0 %v1480
        %1484 = vmatpush.msra.mxu0 %v1477
        %1485 = vmatpush.msra.mxu0 %v1474
        %1486 = vmatpush.msra.mxu0 %v1471
        %1487 = vmatpush.msra.mxu0 %v1468
        %1488 = vmatpush.msra.mxu0 %v1465
        %1489 = vmatpush.msra.mxu0 %v1462
        %1490 = vmatpush.msra.mxu0 %v1459
        %1491 = vmatpush.msra.mxu0 %v1456
        %1492 = vmatpush.msra.mxu0 %v1453
        %1493 = vmatpush.msra.mxu0 %v1450
        %1494 = vmatpush.msra.mxu0 %v1447
        %1495 = vmatpush.msra.mxu0 %v1444
        %1496 = vmatpush.msra.mxu0 %v1441
        %1497 = vmatpush.msra.mxu0 %v1438
        %1498 = vmatpush.msra.mxu0 %v1435
        %1499 = vmatmul.f32.gmra.mxu0 %v1433
        %v1500 = vpop.f32.mrf.mxu0
        %v1501 = vadd.f32 0.0, %v1500
        %1502 = vdwg.mxu0
        %1503 = vmatpush.msra.mxu0 %v1481
        %1504 = vmatpush.msra.mxu0 %v1478
        %1505 = vmatpush.msra.mxu0 %v1475
        %1506 = vmatpush.msra.mxu0 %v1472
        %1507 = vmatpush.msra.mxu0 %v1469
        %1508 = vmatpush.msra.mxu0 %v1466
        %1509 = vmatpush.msra.mxu0 %v1463
        %1510 = vmatpush.msra.mxu0 %v1460
        %1511 = vmatpush.msra.mxu0 %v1457
        %1512 = vmatpush.msra.mxu0 %v1454
        %1513 = vmatpush.msra.mxu0 %v1451
        %1514 = vmatpush.msra.mxu0 %v1448
        %1515 = vmatpush.msra.mxu0 %v1445
        %1516 = vmatpush.msra.mxu0 %v1442
        %1517 = vmatpush.msra.mxu0 %v1439
        %1518 = vmatpush.msra.mxu0 %v1436
        %1519 = vmatmul.f32.gmra.mxu0 %v1433
        %v1520 = vpop.f32.mrf.mxu0
        %v1521 = vadd.f32 0.0, %v1520
        %1522 = vdwg.mxu0
        %1523 = vmatpush.msra.mxu0 %v1482
        %1524 = vmatpush.msra.mxu0 %v1479
        %1525 = vmatpush.msra.mxu0 %v1476
        %1526 = vmatpush.msra.mxu0 %v1473
        %1527 = vmatpush.msra.mxu0 %v1470
        %1528 = vmatpush.msra.mxu0 %v1467
        %1529 = vmatpush.msra.mxu0 %v1464
        %1530 = vmatpush.msra.mxu0 %v1461
        %1531 = vmatpush.msra.mxu0 %v1458
        %1532 = vmatpush.msra.mxu0 %v1455
        %1533 = vmatpush.msra.mxu0 %v1452
        %1534 = vmatpush.msra.mxu0 %v1449
        %1535 = vmatpush.msra.mxu0 %v1446
        %1536 = vmatpush.msra.mxu0 %v1443
        %1537 = vmatpush.msra.mxu0 %v1440
        %1538 = vmatpush.msra.mxu0 %v1437
        %1539 = vmatmul.f32.gmra.mxu0 %v1433
        %v1540 = vpop.f32.mrf.mxu0
        %v1541 = vadd.f32 0.0, %v1540
        %1542 = vdwg.mxu0
        %v1544 = vrot.slane %v1501, 7
        %v1546 = vsel %vm968, 0.0, %v1544
        %v1547 = vadd.f32 %v1521, %v1546
        %v1549 = vrot.slane %v1541, 1
        %v1551 = vsel %vm974, %v1549, 0.0
        %v1552 = vadd.f32 %v1547, %v1551
        %v1553 = vld [vmem:[#allocation10 + $0x4] sm:$0x1]
        %v1554 = vperm.slane %v1553, 0
        %v1555 = vadd.f32 %v1552, %v1554
        %v1556 = vmax.f32 %v1555, 0.0
        %s1557 = scalar_lea.vmem [#allocation8], 1920
        %v1558 = vld [vmem:[%s1557] sm:$0xff]
        %v1559 = vld [vmem:[%s1557 + $0x8] sm:$0xff]
        %v1560 = vld [vmem:[%s1557 + $0x10] sm:$0xff]
        %v1561 = vld [vmem:[%s1557 + $0x18] sm:$0xff]
        %v1562 = vld [vmem:[%s1557 + $0x20] sm:$0xff]
        %v1563 = vld [vmem:[%s1557 + $0x28] sm:$0xff]
        %v1564 = vld [vmem:[%s1557 + $0x30] sm:$0xff]
        %v1565 = vld [vmem:[%s1557 + $0x38] sm:$0xff]
        %v1566 = vld [vmem:[%s1557 + $0x40] sm:$0xff]
        %v1567 = vld [vmem:[%s1557 + $0x48] sm:$0xff]
        %v1568 = vld [vmem:[%s1557 + $0x50] sm:$0xff]
        %v1569 = vld [vmem:[%s1557 + $0x58] sm:$0xff]
        %v1570 = vld [vmem:[%s1557 + $0x60] sm:$0xff]
        %v1571 = vld [vmem:[%s1557 + $0x68] sm:$0xff]
        %v1572 = vld [vmem:[%s1557 + $0x70] sm:$0xff]
        %v1573 = vld [vmem:[%s1557 + $0x78] sm:$0xff]
        %v1574 = vld [vmem:[%s1557 + $0x80] sm:$0xff]
        %v1575 = vld [vmem:[%s1557 + $0x88] sm:$0xff]
        %v1576 = vld [vmem:[%s1557 + $0x90] sm:$0xff]
        %v1577 = vld [vmem:[%s1557 + $0x98] sm:$0xff]
        %v1578 = vld [vmem:[%s1557 + $0xa0] sm:$0xff]
        %v1579 = vld [vmem:[%s1557 + $0xa8] sm:$0xff]
        %v1580 = vld [vmem:[%s1557 + $0xb0] sm:$0xff]
        %v1581 = vld [vmem:[%s1557 + $0xb8] sm:$0xff]
        %v1582 = vld [vmem:[%s1557 + $0xc0] sm:$0xff]
        %v1583 = vld [vmem:[%s1557 + $0xc8] sm:$0xff]
        %v1584 = vld [vmem:[%s1557 + $0xd0] sm:$0xff]
        %v1585 = vld [vmem:[%s1557 + $0xd8] sm:$0xff]
        %v1586 = vld [vmem:[%s1557 + $0xe0] sm:$0xff]
        %v1587 = vld [vmem:[%s1557 + $0xe8] sm:$0xff]
        %v1588 = vld [vmem:[%s1557 + $0xf0] sm:$0xff]
        %v1589 = vld [vmem:[%s1557 + $0xf8] sm:$0xff]
        %v1590 = vld [vmem:[%s1557 + $0x100] sm:$0xff]
        %v1591 = vld [vmem:[%s1557 + $0x108] sm:$0xff]
        %v1592 = vld [vmem:[%s1557 + $0x110] sm:$0xff]
        %v1593 = vld [vmem:[%s1557 + $0x118] sm:$0xff]
        %v1594 = vld [vmem:[%s1557 + $0x120] sm:$0xff]
        %v1595 = vld [vmem:[%s1557 + $0x128] sm:$0xff]
        %v1596 = vld [vmem:[%s1557 + $0x130] sm:$0xff]
        %v1597 = vld [vmem:[%s1557 + $0x138] sm:$0xff]
        %v1598 = vld [vmem:[%s1557 + $0x140] sm:$0xff]
        %v1599 = vld [vmem:[%s1557 + $0x148] sm:$0xff]
        %v1600 = vld [vmem:[%s1557 + $0x150] sm:$0xff]
        %v1601 = vld [vmem:[%s1557 + $0x158] sm:$0xff]
        %v1602 = vld [vmem:[%s1557 + $0x160] sm:$0xff]
        %v1603 = vld [vmem:[%s1557 + $0x168] sm:$0xff]
        %v1604 = vld [vmem:[%s1557 + $0x170] sm:$0xff]
        %v1605 = vld [vmem:[%s1557 + $0x178] sm:$0xff]
        %1606 = vmatpush.msra.mxu0 %v1603
        %1607 = vmatpush.msra.mxu0 %v1600
        %1608 = vmatpush.msra.mxu0 %v1597
        %1609 = vmatpush.msra.mxu0 %v1594
        %1610 = vmatpush.msra.mxu0 %v1591
        %1611 = vmatpush.msra.mxu0 %v1588
        %1612 = vmatpush.msra.mxu0 %v1585
        %1613 = vmatpush.msra.mxu0 %v1582
        %1614 = vmatpush.msra.mxu0 %v1579
        %1615 = vmatpush.msra.mxu0 %v1576
        %1616 = vmatpush.msra.mxu0 %v1573
        %1617 = vmatpush.msra.mxu0 %v1570
        %1618 = vmatpush.msra.mxu0 %v1567
        %1619 = vmatpush.msra.mxu0 %v1564
        %1620 = vmatpush.msra.mxu0 %v1561
        %1621 = vmatpush.msra.mxu0 %v1558
        %1622 = vmatmul.f32.gmra.mxu0 %v1556
        %v1623 = vpop.f32.mrf.mxu0
        %v1624 = vadd.f32 0.0, %v1623
        %1625 = vdwg.mxu0
        %1626 = vmatpush.msra.mxu0 %v1604
        %1627 = vmatpush.msra.mxu0 %v1601
        %1628 = vmatpush.msra.mxu0 %v1598
        %1629 = vmatpush.msra.mxu0 %v1595
        %1630 = vmatpush.msra.mxu0 %v1592
        %1631 = vmatpush.msra.mxu0 %v1589
        %1632 = vmatpush.msra.mxu0 %v1586
        %1633 = vmatpush.msra.mxu0 %v1583
        %1634 = vmatpush.msra.mxu0 %v1580
        %1635 = vmatpush.msra.mxu0 %v1577
        %1636 = vmatpush.msra.mxu0 %v1574
        %1637 = vmatpush.msra.mxu0 %v1571
        %1638 = vmatpush.msra.mxu0 %v1568
        %1639 = vmatpush.msra.mxu0 %v1565
        %1640 = vmatpush.msra.mxu0 %v1562
        %1641 = vmatpush.msra.mxu0 %v1559
        %1642 = vmatmul.f32.gmra.mxu0 %v1556
        %v1643 = vpop.f32.mrf.mxu0
        %v1644 = vadd.f32 0.0, %v1643
        %1645 = vdwg.mxu0
        %1646 = vmatpush.msra.mxu0 %v1605
        %1647 = vmatpush.msra.mxu0 %v1602
        %1648 = vmatpush.msra.mxu0 %v1599
        %1649 = vmatpush.msra.mxu0 %v1596
        %1650 = vmatpush.msra.mxu0 %v1593
        %1651 = vmatpush.msra.mxu0 %v1590
        %1652 = vmatpush.msra.mxu0 %v1587
        %1653 = vmatpush.msra.mxu0 %v1584
        %1654 = vmatpush.msra.mxu0 %v1581
        %1655 = vmatpush.msra.mxu0 %v1578
        %1656 = vmatpush.msra.mxu0 %v1575
        %1657 = vmatpush.msra.mxu0 %v1572
        %1658 = vmatpush.msra.mxu0 %v1569
        %1659 = vmatpush.msra.mxu0 %v1566
        %1660 = vmatpush.msra.mxu0 %v1563
        %1661 = vmatpush.msra.mxu0 %v1560
        %1662 = vmatmul.f32.gmra.mxu0 %v1556
        %v1663 = vpop.f32.mrf.mxu0
        %v1664 = vadd.f32 0.0, %v1663
        %1665 = vdwg.mxu0
        %v1667 = vrot.slane %v1624, 7
        %v1669 = vsel %vm968, 0.0, %v1667
        %v1670 = vadd.f32 %v1644, %v1669
        %v1672 = vrot.slane %v1664, 1
        %v1674 = vsel %vm974, %v1672, 0.0
        %v1675 = vadd.f32 %v1670, %v1674
        %v1676 = vld [vmem:[#allocation10 + $0x5] sm:$0x1]
        %v1677 = vperm.slane %v1676, 0
        %v1678 = vadd.f32 %v1675, %v1677
        %v1679 = vmax.f32 %v1678, 0.0
        %v1680 = vrot.slane %v1679, 4
        %v1681 = vadd.f32 %v1679, %v1680
        %v1682 = vrot.slane %v1681, 2
        %v1683 = vadd.f32 %v1681, %v1682
        %v1684 = vrot.slane %v1683, 1
        %v1685 = vadd.f32 %v1683, %v1684
        %v1686 = vmul.f32 %v1685, %v853
        %v1687 = vsel %vm968, %v1686, 0.0
        %1688 = vadd.xlane.f32.xlu0 %v1687
        %v1689 = vpop.xlane.xlu0 %1688
        %v1690 = vadd.f32 %v1689, %v854
        %v1691 = vmax.f32 %v1690, 0.0
        %1693 = vset.pattern.permute.xlu0 0
        %1694 = vperm.xlu0 %1693, %v1691
        %v1695 = vpop.permute.xlu0 %1694
        %v1697 = vmul.f32 %v1695, %v855
        %v1698 = vadd.f32 %v1697, 0.0
        %v1699 = vadd.f32 %v1698, %v856
        %v1700 = vxor.u32 %v1699, 2147483648
        %v1701 = vmul.f32 %v1700, 1.442695
        %v1702 = vpow.pop %v1701
        %v1703 = vadd.f32 %v1702, 1.0
        %v1704 = vrcp.pop %v1703
        %v1705 = vmul.f32 %v1703, %v1704
        %v1706 = vsub.f32 1.0, %v1705
        %v1707 = vmul.f32 %v1704, %v1706
        %v1708 = vadd.f32 %v1704, %v1707
        %vm1709 = vweird.f32 %v1703
        %vm1710 = vweird.f32 %v1704
        %vm1711 = vmor %vm1709, %vm1710
        %v1712 = vsel %vm1711, %v1704, %v1708
        %v1713 = vand.u32 2147483647, %v1703
        %vm1714 = vcmp.eq.f32.partialorder %v1713, 8.507059e+37
        %v1715 = vand.u32 %v1703, 2147483648
        %v1716 = vor.u32 1.1754944e-38, %v1715
        %v1717 = vsel %vm1714, %v1716, %v1712
        %v1718 = vmul.f32 1.0, %v1717
        %v1719 = vperm.slane %v1718, 0
        %v1720 = vmul.f32 %v1679, %v1719
        %v1721 = vadd.f32 %v1310, %v1720
        %s1722 = scalar_lea.vmem [#allocation8], 2304
        %v1723 = vld [vmem:[%s1722] sm:$0xff]
        %v1724 = vld [vmem:[%s1722 + $0x8] sm:$0xff]
        %v1725 = vld [vmem:[%s1722 + $0x10] sm:$0xff]
        %v1726 = vld [vmem:[%s1722 + $0x18] sm:$0xff]
        %v1727 = vld [vmem:[%s1722 + $0x20] sm:$0xff]
        %v1728 = vld [vmem:[%s1722 + $0x28] sm:$0xff]
        %v1729 = vld [vmem:[%s1722 + $0x30] sm:$0xff]
        %v1730 = vld [vmem:[%s1722 + $0x38] sm:$0xff]
        %v1731 = vld [vmem:[%s1722 + $0x40] sm:$0xff]
        %v1732 = vld [vmem:[%s1722 + $0x48] sm:$0xff]
        %v1733 = vld [vmem:[%s1722 + $0x50] sm:$0xff]
        %v1734 = vld [vmem:[%s1722 + $0x58] sm:$0xff]
        %v1735 = vld [vmem:[%s1722 + $0x60] sm:$0xff]
        %v1736 = vld [vmem:[%s1722 + $0x68] sm:$0xff]
        %v1737 = vld [vmem:[%s1722 + $0x70] sm:$0xff]
        %v1738 = vld [vmem:[%s1722 + $0x78] sm:$0xff]
        %v1739 = vld [vmem:[%s1722 + $0x80] sm:$0xff]
        %v1740 = vld [vmem:[%s1722 + $0x88] sm:$0xff]
        %v1741 = vld [vmem:[%s1722 + $0x90] sm:$0xff]
        %v1742 = vld [vmem:[%s1722 + $0x98] sm:$0xff]
        %v1743 = vld [vmem:[%s1722 + $0xa0] sm:$0xff]
        %v1744 = vld [vmem:[%s1722 + $0xa8] sm:$0xff]
        %v1745 = vld [vmem:[%s1722 + $0xb0] sm:$0xff]
        %v1746 = vld [vmem:[%s1722 + $0xb8] sm:$0xff]
        %v1747 = vld [vmem:[%s1722 + $0xc0] sm:$0xff]
        %v1748 = vld [vmem:[%s1722 + $0xc8] sm:$0xff]
        %v1749 = vld [vmem:[%s1722 + $0xd0] sm:$0xff]
        %v1750 = vld [vmem:[%s1722 + $0xd8] sm:$0xff]
        %v1751 = vld [vmem:[%s1722 + $0xe0] sm:$0xff]
        %v1752 = vld [vmem:[%s1722 + $0xe8] sm:$0xff]
        %v1753 = vld [vmem:[%s1722 + $0xf0] sm:$0xff]
        %v1754 = vld [vmem:[%s1722 + $0xf8] sm:$0xff]
        %v1755 = vld [vmem:[%s1722 + $0x100] sm:$0xff]
        %v1756 = vld [vmem:[%s1722 + $0x108] sm:$0xff]
        %v1757 = vld [vmem:[%s1722 + $0x110] sm:$0xff]
        %v1758 = vld [vmem:[%s1722 + $0x118] sm:$0xff]
        %v1759 = vld [vmem:[%s1722 + $0x120] sm:$0xff]
        %v1760 = vld [vmem:[%s1722 + $0x128] sm:$0xff]
        %v1761 = vld [vmem:[%s1722 + $0x130] sm:$0xff]
        %v1762 = vld [vmem:[%s1722 + $0x138] sm:$0xff]
        %v1763 = vld [vmem:[%s1722 + $0x140] sm:$0xff]
        %v1764 = vld [vmem:[%s1722 + $0x148] sm:$0xff]
        %v1765 = vld [vmem:[%s1722 + $0x150] sm:$0xff]
        %v1766 = vld [vmem:[%s1722 + $0x158] sm:$0xff]
        %v1767 = vld [vmem:[%s1722 + $0x160] sm:$0xff]
        %v1768 = vld [vmem:[%s1722 + $0x168] sm:$0xff]
        %v1769 = vld [vmem:[%s1722 + $0x170] sm:$0xff]
        %v1770 = vld [vmem:[%s1722 + $0x178] sm:$0xff]
        %1771 = vmatpush.msra.mxu0 %v1768
        %1772 = vmatpush.msra.mxu0 %v1765
        %1773 = vmatpush.msra.mxu0 %v1762
        %1774 = vmatpush.msra.mxu0 %v1759
        %1775 = vmatpush.msra.mxu0 %v1756
        %1776 = vmatpush.msra.mxu0 %v1753
        %1777 = vmatpush.msra.mxu0 %v1750
        %1778 = vmatpush.msra.mxu0 %v1747
        %1779 = vmatpush.msra.mxu0 %v1744
        %1780 = vmatpush.msra.mxu0 %v1741
        %1781 = vmatpush.msra.mxu0 %v1738
        %1782 = vmatpush.msra.mxu0 %v1735
        %1783 = vmatpush.msra.mxu0 %v1732
        %1784 = vmatpush.msra.mxu0 %v1729
        %1785 = vmatpush.msra.mxu0 %v1726
        %1786 = vmatpush.msra.mxu0 %v1723
        %1787 = vmatmul.f32.gmra.mxu0 %v838
        %v1788 = vpop.f32.mrf.mxu0
        %v1789 = vadd.f32 0.0, %v1788
        %1790 = vdwg.mxu0
        %1791 = vmatpush.msra.mxu0 %v1769
        %1792 = vmatpush.msra.mxu0 %v1766
        %1793 = vmatpush.msra.mxu0 %v1763
        %1794 = vmatpush.msra.mxu0 %v1760
        %1795 = vmatpush.msra.mxu0 %v1757
        %1796 = vmatpush.msra.mxu0 %v1754
        %1797 = vmatpush.msra.mxu0 %v1751
        %1798 = vmatpush.msra.mxu0 %v1748
        %1799 = vmatpush.msra.mxu0 %v1745
        %1800 = vmatpush.msra.mxu0 %v1742
        %1801 = vmatpush.msra.mxu0 %v1739
        %1802 = vmatpush.msra.mxu0 %v1736
        %1803 = vmatpush.msra.mxu0 %v1733
        %1804 = vmatpush.msra.mxu0 %v1730
        %1805 = vmatpush.msra.mxu0 %v1727
        %1806 = vmatpush.msra.mxu0 %v1724
        %1807 = vmatmul.f32.gmra.mxu0 %v838
        %v1808 = vpop.f32.mrf.mxu0
        %v1809 = vadd.f32 0.0, %v1808
        %1810 = vdwg.mxu0
        %1811 = vmatpush.msra.mxu0 %v1770
        %1812 = vmatpush.msra.mxu0 %v1767
        %1813 = vmatpush.msra.mxu0 %v1764
        %1814 = vmatpush.msra.mxu0 %v1761
        %1815 = vmatpush.msra.mxu0 %v1758
        %1816 = vmatpush.msra.mxu0 %v1755
        %1817 = vmatpush.msra.mxu0 %v1752
        %1818 = vmatpush.msra.mxu0 %v1749
        %1819 = vmatpush.msra.mxu0 %v1746
        %1820 = vmatpush.msra.mxu0 %v1743
        %1821 = vmatpush.msra.mxu0 %v1740
        %1822 = vmatpush.msra.mxu0 %v1737
        %1823 = vmatpush.msra.mxu0 %v1734
        %1824 = vmatpush.msra.mxu0 %v1731
        %1825 = vmatpush.msra.mxu0 %v1728
        %1826 = vmatpush.msra.mxu0 %v1725
        %1827 = vmatmul.f32.gmra.mxu0 %v838
        %v1828 = vpop.f32.mrf.mxu0
        %v1829 = vadd.f32 0.0, %v1828
        %1830 = vdwg.mxu0
        %v1832 = vrot.slane %v1789, 7
        %v1834 = vsel %vm968, 0.0, %v1832
        %v1835 = vadd.f32 %v1809, %v1834
        %v1837 = vrot.slane %v1829, 1
        %v1839 = vsel %vm974, %v1837, 0.0
        %v1840 = vadd.f32 %v1835, %v1839
        %v1841 = vld [vmem:[#allocation10 + $0x6] sm:$0x1]
        %v1842 = vperm.slane %v1841, 0
        %v1843 = vadd.f32 %v1840, %v1842
        %v1844 = vmax.f32 %v1843, 0.0
        %s1845 = scalar_lea.vmem [#allocation8], 2688
        %v1846 = vld [vmem:[%s1845] sm:$0xff]
        %v1847 = vld [vmem:[%s1845 + $0x8] sm:$0xff]
        %v1848 = vld [vmem:[%s1845 + $0x10] sm:$0xff]
        %v1849 = vld [vmem:[%s1845 + $0x18] sm:$0xff]
        %v1850 = vld [vmem:[%s1845 + $0x20] sm:$0xff]
        %v1851 = vld [vmem:[%s1845 + $0x28] sm:$0xff]
        %v1852 = vld [vmem:[%s1845 + $0x30] sm:$0xff]
        %v1853 = vld [vmem:[%s1845 + $0x38] sm:$0xff]
        %v1854 = vld [vmem:[%s1845 + $0x40] sm:$0xff]
        %v1855 = vld [vmem:[%s1845 + $0x48] sm:$0xff]
        %v1856 = vld [vmem:[%s1845 + $0x50] sm:$0xff]
        %v1857 = vld [vmem:[%s1845 + $0x58] sm:$0xff]
        %v1858 = vld [vmem:[%s1845 + $0x60] sm:$0xff]
        %v1859 = vld [vmem:[%s1845 + $0x68] sm:$0xff]
        %v1860 = vld [vmem:[%s1845 + $0x70] sm:$0xff]
        %v1861 = vld [vmem:[%s1845 + $0x78] sm:$0xff]
        %v1862 = vld [vmem:[%s1845 + $0x80] sm:$0xff]
        %v1863 = vld [vmem:[%s1845 + $0x88] sm:$0xff]
        %v1864 = vld [vmem:[%s1845 + $0x90] sm:$0xff]
        %v1865 = vld [vmem:[%s1845 + $0x98] sm:$0xff]
        %v1866 = vld [vmem:[%s1845 + $0xa0] sm:$0xff]
        %v1867 = vld [vmem:[%s1845 + $0xa8] sm:$0xff]
        %v1868 = vld [vmem:[%s1845 + $0xb0] sm:$0xff]
        %v1869 = vld [vmem:[%s1845 + $0xb8] sm:$0xff]
        %v1870 = vld [vmem:[%s1845 + $0xc0] sm:$0xff]
        %v1871 = vld [vmem:[%s1845 + $0xc8] sm:$0xff]
        %v1872 = vld [vmem:[%s1845 + $0xd0] sm:$0xff]
        %v1873 = vld [vmem:[%s1845 + $0xd8] sm:$0xff]
        %v1874 = vld [vmem:[%s1845 + $0xe0] sm:$0xff]
        %v1875 = vld [vmem:[%s1845 + $0xe8] sm:$0xff]
        %v1876 = vld [vmem:[%s1845 + $0xf0] sm:$0xff]
        %v1877 = vld [vmem:[%s1845 + $0xf8] sm:$0xff]
        %v1878 = vld [vmem:[%s1845 + $0x100] sm:$0xff]
        %v1879 = vld [vmem:[%s1845 + $0x108] sm:$0xff]
        %v1880 = vld [vmem:[%s1845 + $0x110] sm:$0xff]
        %v1881 = vld [vmem:[%s1845 + $0x118] sm:$0xff]
        %v1882 = vld [vmem:[%s1845 + $0x120] sm:$0xff]
        %v1883 = vld [vmem:[%s1845 + $0x128] sm:$0xff]
        %v1884 = vld [vmem:[%s1845 + $0x130] sm:$0xff]
        %v1885 = vld [vmem:[%s1845 + $0x138] sm:$0xff]
        %v1886 = vld [vmem:[%s1845 + $0x140] sm:$0xff]
        %v1887 = vld [vmem:[%s1845 + $0x148] sm:$0xff]
        %v1888 = vld [vmem:[%s1845 + $0x150] sm:$0xff]
        %v1889 = vld [vmem:[%s1845 + $0x158] sm:$0xff]
        %v1890 = vld [vmem:[%s1845 + $0x160] sm:$0xff]
        %v1891 = vld [vmem:[%s1845 + $0x168] sm:$0xff]
        %v1892 = vld [vmem:[%s1845 + $0x170] sm:$0xff]
        %v1893 = vld [vmem:[%s1845 + $0x178] sm:$0xff]
        %1894 = vmatpush.msra.mxu0 %v1891
        %1895 = vmatpush.msra.mxu0 %v1888
        %1896 = vmatpush.msra.mxu0 %v1885
        %1897 = vmatpush.msra.mxu0 %v1882
        %1898 = vmatpush.msra.mxu0 %v1879
        %1899 = vmatpush.msra.mxu0 %v1876
        %1900 = vmatpush.msra.mxu0 %v1873
        %1901 = vmatpush.msra.mxu0 %v1870
        %1902 = vmatpush.msra.mxu0 %v1867
        %1903 = vmatpush.msra.mxu0 %v1864
        %1904 = vmatpush.msra.mxu0 %v1861
        %1905 = vmatpush.msra.mxu0 %v1858
        %1906 = vmatpush.msra.mxu0 %v1855
        %1907 = vmatpush.msra.mxu0 %v1852
        %1908 = vmatpush.msra.mxu0 %v1849
        %1909 = vmatpush.msra.mxu0 %v1846
        %1910 = vmatmul.f32.gmra.mxu0 %v1844
        %v1911 = vpop.f32.mrf.mxu0
        %v1912 = vadd.f32 0.0, %v1911
        %1913 = vdwg.mxu0
        %1914 = vmatpush.msra.mxu0 %v1892
        %1915 = vmatpush.msra.mxu0 %v1889
        %1916 = vmatpush.msra.mxu0 %v1886
        %1917 = vmatpush.msra.mxu0 %v1883
        %1918 = vmatpush.msra.mxu0 %v1880
        %1919 = vmatpush.msra.mxu0 %v1877
        %1920 = vmatpush.msra.mxu0 %v1874
        %1921 = vmatpush.msra.mxu0 %v1871
        %1922 = vmatpush.msra.mxu0 %v1868
        %1923 = vmatpush.msra.mxu0 %v1865
        %1924 = vmatpush.msra.mxu0 %v1862
        %1925 = vmatpush.msra.mxu0 %v1859
        %1926 = vmatpush.msra.mxu0 %v1856
        %1927 = vmatpush.msra.mxu0 %v1853
        %1928 = vmatpush.msra.mxu0 %v1850
        %1929 = vmatpush.msra.mxu0 %v1847
        %1930 = vmatmul.f32.gmra.mxu0 %v1844
        %v1931 = vpop.f32.mrf.mxu0
        %v1932 = vadd.f32 0.0, %v1931
        %1933 = vdwg.mxu0
        %1934 = vmatpush.msra.mxu0 %v1893
        %1935 = vmatpush.msra.mxu0 %v1890
        %1936 = vmatpush.msra.mxu0 %v1887
        %1937 = vmatpush.msra.mxu0 %v1884
        %1938 = vmatpush.msra.mxu0 %v1881
        %1939 = vmatpush.msra.mxu0 %v1878
        %1940 = vmatpush.msra.mxu0 %v1875
        %1941 = vmatpush.msra.mxu0 %v1872
        %1942 = vmatpush.msra.mxu0 %v1869
        %1943 = vmatpush.msra.mxu0 %v1866
        %1944 = vmatpush.msra.mxu0 %v1863
        %1945 = vmatpush.msra.mxu0 %v1860
        %1946 = vmatpush.msra.mxu0 %v1857
        %1947 = vmatpush.msra.mxu0 %v1854
        %1948 = vmatpush.msra.mxu0 %v1851
        %1949 = vmatpush.msra.mxu0 %v1848
        %1950 = vmatmul.f32.gmra.mxu0 %v1844
        %v1951 = vpop.f32.mrf.mxu0
        %v1952 = vadd.f32 0.0, %v1951
        %1953 = vdwg.mxu0
        %v1955 = vrot.slane %v1912, 7
        %v1957 = vsel %vm968, 0.0, %v1955
        %v1958 = vadd.f32 %v1932, %v1957
        %v1960 = vrot.slane %v1952, 1
        %v1962 = vsel %vm974, %v1960, 0.0
        %v1963 = vadd.f32 %v1958, %v1962
        %v1964 = vld [vmem:[#allocation10 + $0x7] sm:$0x1]
        %v1965 = vperm.slane %v1964, 0
        %v1966 = vadd.f32 %v1963, %v1965
        %v1967 = vmax.f32 %v1966, 0.0
        %s1968 = scalar_lea.vmem [#allocation8], 3072
        %v1969 = vld [vmem:[%s1968] sm:$0xff]
        %v1970 = vld [vmem:[%s1968 + $0x8] sm:$0xff]
        %v1971 = vld [vmem:[%s1968 + $0x10] sm:$0xff]
        %v1972 = vld [vmem:[%s1968 + $0x18] sm:$0xff]
        %v1973 = vld [vmem:[%s1968 + $0x20] sm:$0xff]
        %v1974 = vld [vmem:[%s1968 + $0x28] sm:$0xff]
        %v1975 = vld [vmem:[%s1968 + $0x30] sm:$0xff]
        %v1976 = vld [vmem:[%s1968 + $0x38] sm:$0xff]
        %v1977 = vld [vmem:[%s1968 + $0x40] sm:$0xff]
        %v1978 = vld [vmem:[%s1968 + $0x48] sm:$0xff]
        %v1979 = vld [vmem:[%s1968 + $0x50] sm:$0xff]
        %v1980 = vld [vmem:[%s1968 + $0x58] sm:$0xff]
        %v1981 = vld [vmem:[%s1968 + $0x60] sm:$0xff]
        %v1982 = vld [vmem:[%s1968 + $0x68] sm:$0xff]
        %v1983 = vld [vmem:[%s1968 + $0x70] sm:$0xff]
        %v1984 = vld [vmem:[%s1968 + $0x78] sm:$0xff]
        %v1985 = vld [vmem:[%s1968 + $0x80] sm:$0xff]
        %v1986 = vld [vmem:[%s1968 + $0x88] sm:$0xff]
        %v1987 = vld [vmem:[%s1968 + $0x90] sm:$0xff]
        %v1988 = vld [vmem:[%s1968 + $0x98] sm:$0xff]
        %v1989 = vld [vmem:[%s1968 + $0xa0] sm:$0xff]
        %v1990 = vld [vmem:[%s1968 + $0xa8] sm:$0xff]
        %v1991 = vld [vmem:[%s1968 + $0xb0] sm:$0xff]
        %v1992 = vld [vmem:[%s1968 + $0xb8] sm:$0xff]
        %v1993 = vld [vmem:[%s1968 + $0xc0] sm:$0xff]
        %v1994 = vld [vmem:[%s1968 + $0xc8] sm:$0xff]
        %v1995 = vld [vmem:[%s1968 + $0xd0] sm:$0xff]
        %v1996 = vld [vmem:[%s1968 + $0xd8] sm:$0xff]
        %v1997 = vld [vmem:[%s1968 + $0xe0] sm:$0xff]
        %v1998 = vld [vmem:[%s1968 + $0xe8] sm:$0xff]
        %v1999 = vld [vmem:[%s1968 + $0xf0] sm:$0xff]
        %v2000 = vld [vmem:[%s1968 + $0xf8] sm:$0xff]
        %v2001 = vld [vmem:[%s1968 + $0x100] sm:$0xff]
        %v2002 = vld [vmem:[%s1968 + $0x108] sm:$0xff]
        %v2003 = vld [vmem:[%s1968 + $0x110] sm:$0xff]
        %v2004 = vld [vmem:[%s1968 + $0x118] sm:$0xff]
        %v2005 = vld [vmem:[%s1968 + $0x120] sm:$0xff]
        %v2006 = vld [vmem:[%s1968 + $0x128] sm:$0xff]
        %v2007 = vld [vmem:[%s1968 + $0x130] sm:$0xff]
        %v2008 = vld [vmem:[%s1968 + $0x138] sm:$0xff]
        %v2009 = vld [vmem:[%s1968 + $0x140] sm:$0xff]
        %v2010 = vld [vmem:[%s1968 + $0x148] sm:$0xff]
        %v2011 = vld [vmem:[%s1968 + $0x150] sm:$0xff]
        %v2012 = vld [vmem:[%s1968 + $0x158] sm:$0xff]
        %v2013 = vld [vmem:[%s1968 + $0x160] sm:$0xff]
        %v2014 = vld [vmem:[%s1968 + $0x168] sm:$0xff]
        %v2015 = vld [vmem:[%s1968 + $0x170] sm:$0xff]
        %v2016 = vld [vmem:[%s1968 + $0x178] sm:$0xff]
        %2017 = vmatpush.msra.mxu0 %v2014
        %2018 = vmatpush.msra.mxu0 %v2011
        %2019 = vmatpush.msra.mxu0 %v2008
        %2020 = vmatpush.msra.mxu0 %v2005
        %2021 = vmatpush.msra.mxu0 %v2002
        %2022 = vmatpush.msra.mxu0 %v1999
        %2023 = vmatpush.msra.mxu0 %v1996
        %2024 = vmatpush.msra.mxu0 %v1993
        %2025 = vmatpush.msra.mxu0 %v1990
        %2026 = vmatpush.msra.mxu0 %v1987
        %2027 = vmatpush.msra.mxu0 %v1984
        %2028 = vmatpush.msra.mxu0 %v1981
        %2029 = vmatpush.msra.mxu0 %v1978
        %2030 = vmatpush.msra.mxu0 %v1975
        %2031 = vmatpush.msra.mxu0 %v1972
        %2032 = vmatpush.msra.mxu0 %v1969
        %2033 = vmatmul.f32.gmra.mxu0 %v1967
        %v2034 = vpop.f32.mrf.mxu0
        %v2035 = vadd.f32 0.0, %v2034
        %2036 = vdwg.mxu0
        %2037 = vmatpush.msra.mxu0 %v2015
        %2038 = vmatpush.msra.mxu0 %v2012
        %2039 = vmatpush.msra.mxu0 %v2009
        %2040 = vmatpush.msra.mxu0 %v2006
        %2041 = vmatpush.msra.mxu0 %v2003
        %2042 = vmatpush.msra.mxu0 %v2000
        %2043 = vmatpush.msra.mxu0 %v1997
        %2044 = vmatpush.msra.mxu0 %v1994
        %2045 = vmatpush.msra.mxu0 %v1991
        %2046 = vmatpush.msra.mxu0 %v1988
        %2047 = vmatpush.msra.mxu0 %v1985
        %2048 = vmatpush.msra.mxu0 %v1982
        %2049 = vmatpush.msra.mxu0 %v1979
        %2050 = vmatpush.msra.mxu0 %v1976
        %2051 = vmatpush.msra.mxu0 %v1973
        %2052 = vmatpush.msra.mxu0 %v1970
        %2053 = vmatmul.f32.gmra.mxu0 %v1967
        %v2054 = vpop.f32.mrf.mxu0
        %v2055 = vadd.f32 0.0, %v2054
        %2056 = vdwg.mxu0
        %2057 = vmatpush.msra.mxu0 %v2016
        %2058 = vmatpush.msra.mxu0 %v2013
        %2059 = vmatpush.msra.mxu0 %v2010
        %2060 = vmatpush.msra.mxu0 %v2007
        %2061 = vmatpush.msra.mxu0 %v2004
        %2062 = vmatpush.msra.mxu0 %v2001
        %2063 = vmatpush.msra.mxu0 %v1998
        %2064 = vmatpush.msra.mxu0 %v1995
        %2065 = vmatpush.msra.mxu0 %v1992
        %2066 = vmatpush.msra.mxu0 %v1989
        %2067 = vmatpush.msra.mxu0 %v1986
        %2068 = vmatpush.msra.mxu0 %v1983
        %2069 = vmatpush.msra.mxu0 %v1980
        %2070 = vmatpush.msra.mxu0 %v1977
        %2071 = vmatpush.msra.mxu0 %v1974
        %2072 = vmatpush.msra.mxu0 %v1971
        %2073 = vmatmul.f32.gmra.mxu0 %v1967
        %v2074 = vpop.f32.mrf.mxu0
        %v2075 = vadd.f32 0.0, %v2074
        %2076 = vdwg.mxu0
        %v2078 = vrot.slane %v2035, 7
        %v2080 = vsel %vm968, 0.0, %v2078
        %v2081 = vadd.f32 %v2055, %v2080
        %v2083 = vrot.slane %v2075, 1
        %v2085 = vsel %vm974, %v2083, 0.0
        %v2086 = vadd.f32 %v2081, %v2085
        %v2087 = vld [vmem:[#allocation10 + $0x8] sm:$0x1]
        %v2088 = vperm.slane %v2087, 0
        %v2089 = vadd.f32 %v2086, %v2088
        %v2090 = vmax.f32 %v2089, 0.0
        %s2091 = scalar_lea.vmem [#allocation8], 3456
        %v2092 = vld [vmem:[%s2091] sm:$0xff]
        %v2093 = vld [vmem:[%s2091 + $0x8] sm:$0xff]
        %v2094 = vld [vmem:[%s2091 + $0x10] sm:$0xff]
        %v2095 = vld [vmem:[%s2091 + $0x18] sm:$0xff]
        %v2096 = vld [vmem:[%s2091 + $0x20] sm:$0xff]
        %v2097 = vld [vmem:[%s2091 + $0x28] sm:$0xff]
        %v2098 = vld [vmem:[%s2091 + $0x30] sm:$0xff]
        %v2099 = vld [vmem:[%s2091 + $0x38] sm:$0xff]
        %v2100 = vld [vmem:[%s2091 + $0x40] sm:$0xff]
        %v2101 = vld [vmem:[%s2091 + $0x48] sm:$0xff]
        %v2102 = vld [vmem:[%s2091 + $0x50] sm:$0xff]
        %v2103 = vld [vmem:[%s2091 + $0x58] sm:$0xff]
        %v2104 = vld [vmem:[%s2091 + $0x60] sm:$0xff]
        %v2105 = vld [vmem:[%s2091 + $0x68] sm:$0xff]
        %v2106 = vld [vmem:[%s2091 + $0x70] sm:$0xff]
        %v2107 = vld [vmem:[%s2091 + $0x78] sm:$0xff]
        %v2108 = vld [vmem:[%s2091 + $0x80] sm:$0xff]
        %v2109 = vld [vmem:[%s2091 + $0x88] sm:$0xff]
        %v2110 = vld [vmem:[%s2091 + $0x90] sm:$0xff]
        %v2111 = vld [vmem:[%s2091 + $0x98] sm:$0xff]
        %v2112 = vld [vmem:[%s2091 + $0xa0] sm:$0xff]
        %v2113 = vld [vmem:[%s2091 + $0xa8] sm:$0xff]
        %v2114 = vld [vmem:[%s2091 + $0xb0] sm:$0xff]
        %v2115 = vld [vmem:[%s2091 + $0xb8] sm:$0xff]
        %v2116 = vld [vmem:[%s2091 + $0xc0] sm:$0xff]
        %v2117 = vld [vmem:[%s2091 + $0xc8] sm:$0xff]
        %v2118 = vld [vmem:[%s2091 + $0xd0] sm:$0xff]
        %v2119 = vld [vmem:[%s2091 + $0xd8] sm:$0xff]
        %v2120 = vld [vmem:[%s2091 + $0xe0] sm:$0xff]
        %v2121 = vld [vmem:[%s2091 + $0xe8] sm:$0xff]
        %v2122 = vld [vmem:[%s2091 + $0xf0] sm:$0xff]
        %v2123 = vld [vmem:[%s2091 + $0xf8] sm:$0xff]
        %v2124 = vld [vmem:[%s2091 + $0x100] sm:$0xff]
        %v2125 = vld [vmem:[%s2091 + $0x108] sm:$0xff]
        %v2126 = vld [vmem:[%s2091 + $0x110] sm:$0xff]
        %v2127 = vld [vmem:[%s2091 + $0x118] sm:$0xff]
        %v2128 = vld [vmem:[%s2091 + $0x120] sm:$0xff]
        %v2129 = vld [vmem:[%s2091 + $0x128] sm:$0xff]
        %v2130 = vld [vmem:[%s2091 + $0x130] sm:$0xff]
        %v2131 = vld [vmem:[%s2091 + $0x138] sm:$0xff]
        %v2132 = vld [vmem:[%s2091 + $0x140] sm:$0xff]
        %v2133 = vld [vmem:[%s2091 + $0x148] sm:$0xff]
        %v2134 = vld [vmem:[%s2091 + $0x150] sm:$0xff]
        %v2135 = vld [vmem:[%s2091 + $0x158] sm:$0xff]
        %v2136 = vld [vmem:[%s2091 + $0x160] sm:$0xff]
        %v2137 = vld [vmem:[%s2091 + $0x168] sm:$0xff]
        %v2138 = vld [vmem:[%s2091 + $0x170] sm:$0xff]
        %v2139 = vld [vmem:[%s2091 + $0x178] sm:$0xff]
        %2140 = vmatpush.msra.mxu0 %v2137
        %2141 = vmatpush.msra.mxu0 %v2134
        %2142 = vmatpush.msra.mxu0 %v2131
        %2143 = vmatpush.msra.mxu0 %v2128
        %2144 = vmatpush.msra.mxu0 %v2125
        %2145 = vmatpush.msra.mxu0 %v2122
        %2146 = vmatpush.msra.mxu0 %v2119
        %2147 = vmatpush.msra.mxu0 %v2116
        %2148 = vmatpush.msra.mxu0 %v2113
        %2149 = vmatpush.msra.mxu0 %v2110
        %2150 = vmatpush.msra.mxu0 %v2107
        %2151 = vmatpush.msra.mxu0 %v2104
        %2152 = vmatpush.msra.mxu0 %v2101
        %2153 = vmatpush.msra.mxu0 %v2098
        %2154 = vmatpush.msra.mxu0 %v2095
        %2155 = vmatpush.msra.mxu0 %v2092
        %2156 = vmatmul.f32.gmra.mxu0 %v2090
        %v2157 = vpop.f32.mrf.mxu0
        %v2158 = vadd.f32 0.0, %v2157
        %2159 = vdwg.mxu0
        %2160 = vmatpush.msra.mxu0 %v2138
        %2161 = vmatpush.msra.mxu0 %v2135
        %2162 = vmatpush.msra.mxu0 %v2132
        %2163 = vmatpush.msra.mxu0 %v2129
        %2164 = vmatpush.msra.mxu0 %v2126
        %2165 = vmatpush.msra.mxu0 %v2123
        %2166 = vmatpush.msra.mxu0 %v2120
        %2167 = vmatpush.msra.mxu0 %v2117
        %2168 = vmatpush.msra.mxu0 %v2114
        %2169 = vmatpush.msra.mxu0 %v2111
        %2170 = vmatpush.msra.mxu0 %v2108
        %2171 = vmatpush.msra.mxu0 %v2105
        %2172 = vmatpush.msra.mxu0 %v2102
        %2173 = vmatpush.msra.mxu0 %v2099
        %2174 = vmatpush.msra.mxu0 %v2096
        %2175 = vmatpush.msra.mxu0 %v2093
        %2176 = vmatmul.f32.gmra.mxu0 %v2090
        %v2177 = vpop.f32.mrf.mxu0
        %v2178 = vadd.f32 0.0, %v2177
        %2179 = vdwg.mxu0
        %2180 = vmatpush.msra.mxu0 %v2139
        %2181 = vmatpush.msra.mxu0 %v2136
        %2182 = vmatpush.msra.mxu0 %v2133
        %2183 = vmatpush.msra.mxu0 %v2130
        %2184 = vmatpush.msra.mxu0 %v2127
        %2185 = vmatpush.msra.mxu0 %v2124
        %2186 = vmatpush.msra.mxu0 %v2121
        %2187 = vmatpush.msra.mxu0 %v2118
        %2188 = vmatpush.msra.mxu0 %v2115
        %2189 = vmatpush.msra.mxu0 %v2112
        %2190 = vmatpush.msra.mxu0 %v2109
        %2191 = vmatpush.msra.mxu0 %v2106
        %2192 = vmatpush.msra.mxu0 %v2103
        %2193 = vmatpush.msra.mxu0 %v2100
        %2194 = vmatpush.msra.mxu0 %v2097
        %2195 = vmatpush.msra.mxu0 %v2094
        %2196 = vmatmul.f32.gmra.mxu0 %v2090
        %v2197 = vpop.f32.mrf.mxu0
        %v2198 = vadd.f32 0.0, %v2197
        %2199 = vdwg.mxu0
        %v2201 = vrot.slane %v2158, 7
        %v2203 = vsel %vm968, 0.0, %v2201
        %v2204 = vadd.f32 %v2178, %v2203
        %v2206 = vrot.slane %v2198, 1
        %v2208 = vsel %vm974, %v2206, 0.0
        %v2209 = vadd.f32 %v2204, %v2208
        %v2210 = vld [vmem:[#allocation10 + $0x9] sm:$0x1]
        %v2211 = vperm.slane %v2210, 0
        %v2212 = vadd.f32 %v2209, %v2211
        %v2213 = vmax.f32 %v2212, 0.0
        %v2214 = vrot.slane %v2213, 4
        %v2215 = vadd.f32 %v2213, %v2214
        %v2216 = vrot.slane %v2215, 2
        %v2217 = vadd.f32 %v2215, %v2216
        %v2218 = vrot.slane %v2217, 1
        %v2219 = vadd.f32 %v2217, %v2218
        %v2220 = vmul.f32 %v2219, %v853
        %v2221 = vsel %vm968, %v2220, 0.0
        %2222 = vadd.xlane.f32.xlu0 %v2221
        %v2223 = vpop.xlane.xlu0 %2222
        %v2224 = vadd.f32 %v2223, %v854
        %v2225 = vmax.f32 %v2224, 0.0
        %2227 = vset.pattern.permute.xlu0 0
        %2228 = vperm.xlu0 %2227, %v2225
        %v2229 = vpop.permute.xlu0 %2228
        %v2231 = vmul.f32 %v2229, %v855
        %v2232 = vadd.f32 %v2231, 0.0
        %v2233 = vadd.f32 %v2232, %v856
        %v2234 = vxor.u32 %v2233, 2147483648
        %v2235 = vmul.f32 %v2234, 1.442695
        %v2236 = vpow.pop %v2235
        %v2237 = vadd.f32 %v2236, 1.0
        %v2238 = vrcp.pop %v2237
        %v2239 = vmul.f32 %v2237, %v2238
        %v2240 = vsub.f32 1.0, %v2239
        %v2241 = vmul.f32 %v2238, %v2240
        %v2242 = vadd.f32 %v2238, %v2241
        %vm2243 = vweird.f32 %v2237
        %vm2244 = vweird.f32 %v2238
        %vm2245 = vmor %vm2243, %vm2244
        %v2246 = vsel %vm2245, %v2238, %v2242
        %v2247 = vand.u32 2147483647, %v2237
        %vm2248 = vcmp.eq.f32.partialorder %v2247, 8.507059e+37
        %v2249 = vand.u32 %v2237, 2147483648
        %v2250 = vor.u32 1.1754944e-38, %v2249
        %v2251 = vsel %vm2248, %v2250, %v2246
        %v2252 = vmul.f32 1.0, %v2251
        %v2253 = vperm.slane %v2252, 0
        %v2254 = vmul.f32 %v2213, %v2253
        %v2255 = vadd.f32 %v1721, %v2254
        %v2256 = vld [vmem:[#allocation16] sm:$0xff]
        %v2257 = vld [vmem:[#allocation16 + $0x8] sm:$0xff]
        %v2258 = vld [vmem:[#allocation16 + $0x10] sm:$0xff]
        %v2259 = vld [vmem:[#allocation16 + $0x18] sm:$0xff]
        %v2260 = vld [vmem:[#allocation16 + $0x20] sm:$0xff]
        %v2261 = vld [vmem:[#allocation16 + $0x28] sm:$0xff]
        %v2262 = vld [vmem:[#allocation16 + $0x30] sm:$0xff]
        %v2263 = vld [vmem:[#allocation16 + $0x38] sm:$0xff]
        %v2264 = vld [vmem:[#allocation16 + $0x40] sm:$0xff]
        %v2265 = vld [vmem:[#allocation16 + $0x48] sm:$0xff]
        %v2266 = vld [vmem:[#allocation16 + $0x50] sm:$0xff]
        %v2267 = vld [vmem:[#allocation16 + $0x58] sm:$0xff]
        %v2268 = vld [vmem:[#allocation16 + $0x60] sm:$0xff]
        %v2269 = vld [vmem:[#allocation16 + $0x68] sm:$0xff]
        %v2270 = vld [vmem:[#allocation16 + $0x70] sm:$0xff]
        %v2271 = vld [vmem:[#allocation16 + $0x78] sm:$0xff]
        %v2272 = vld [vmem:[#allocation16 + $0x80] sm:$0xff]
        %v2273 = vld [vmem:[#allocation16 + $0x88] sm:$0xff]
        %v2274 = vld [vmem:[#allocation16 + $0x90] sm:$0xff]
        %v2275 = vld [vmem:[#allocation16 + $0x98] sm:$0xff]
        %v2276 = vld [vmem:[#allocation16 + $0xa0] sm:$0xff]
        %v2277 = vld [vmem:[#allocation16 + $0xa8] sm:$0xff]
        %v2278 = vld [vmem:[#allocation16 + $0xb0] sm:$0xff]
        %v2279 = vld [vmem:[#allocation16 + $0xb8] sm:$0xff]
        %v2280 = vld [vmem:[#allocation16 + $0xc0] sm:$0xff]
        %v2281 = vld [vmem:[#allocation16 + $0xc8] sm:$0xff]
        %v2282 = vld [vmem:[#allocation16 + $0xd0] sm:$0xff]
        %v2283 = vld [vmem:[#allocation16 + $0xd8] sm:$0xff]
        %v2284 = vld [vmem:[#allocation16 + $0xe0] sm:$0xff]
        %v2285 = vld [vmem:[#allocation16 + $0xe8] sm:$0xff]
        %v2286 = vld [vmem:[#allocation16 + $0xf0] sm:$0xff]
        %v2287 = vld [vmem:[#allocation16 + $0xf8] sm:$0xff]
        %v2288 = vld [vmem:[#allocation16 + $0x100] sm:$0xff]
        %v2289 = vld [vmem:[#allocation16 + $0x108] sm:$0xff]
        %v2290 = vld [vmem:[#allocation16 + $0x110] sm:$0xff]
        %v2291 = vld [vmem:[#allocation16 + $0x118] sm:$0xff]
        %v2292 = vld [vmem:[#allocation16 + $0x120] sm:$0xff]
        %v2293 = vld [vmem:[#allocation16 + $0x128] sm:$0xff]
        %v2294 = vld [vmem:[#allocation16 + $0x130] sm:$0xff]
        %v2295 = vld [vmem:[#allocation16 + $0x138] sm:$0xff]
        %v2296 = vld [vmem:[#allocation16 + $0x140] sm:$0xff]
        %v2297 = vld [vmem:[#allocation16 + $0x148] sm:$0xff]
        %v2298 = vld [vmem:[#allocation16 + $0x150] sm:$0xff]
        %v2299 = vld [vmem:[#allocation16 + $0x158] sm:$0xff]
        %v2300 = vld [vmem:[#allocation16 + $0x160] sm:$0xff]
        %v2301 = vld [vmem:[#allocation16 + $0x168] sm:$0xff]
        %v2302 = vld [vmem:[#allocation16 + $0x170] sm:$0xff]
        %v2303 = vld [vmem:[#allocation16 + $0x178] sm:$0xff]
        %v2304 = vld [vmem:[#allocation16 + $0x180] sm:$0xff]
        %v2305 = vld [vmem:[#allocation16 + $0x188] sm:$0xff]
        %v2306 = vld [vmem:[#allocation16 + $0x190] sm:$0xff]
        %v2307 = vld [vmem:[#allocation16 + $0x198] sm:$0xff]
        %v2308 = vld [vmem:[#allocation16 + $0x1a0] sm:$0xff]
        %v2309 = vld [vmem:[#allocation16 + $0x1a8] sm:$0xff]
        %v2310 = vld [vmem:[#allocation16 + $0x1b0] sm:$0xff]
        %v2311 = vld [vmem:[#allocation16 + $0x1b8] sm:$0xff]
        %v2312 = vld [vmem:[#allocation16 + $0x1c0] sm:$0xff]
        %v2313 = vld [vmem:[#allocation16 + $0x1c8] sm:$0xff]
        %v2314 = vld [vmem:[#allocation16 + $0x1d0] sm:$0xff]
        %v2315 = vld [vmem:[#allocation16 + $0x1d8] sm:$0xff]
        %v2316 = vld [vmem:[#allocation16 + $0x1e0] sm:$0xff]
        %v2317 = vld [vmem:[#allocation16 + $0x1e8] sm:$0xff]
        %v2318 = vld [vmem:[#allocation16 + $0x1f0] sm:$0xff]
        %v2319 = vld [vmem:[#allocation16 + $0x1f8] sm:$0xff]
        %2320 = vmatpush.msra.mxu0 %v2316
        %2321 = vmatpush.msra.mxu0 %v2312
        %2322 = vmatpush.msra.mxu0 %v2308
        %2323 = vmatpush.msra.mxu0 %v2304
        %2324 = vmatpush.msra.mxu0 %v2300
        %2325 = vmatpush.msra.mxu0 %v2296
        %2326 = vmatpush.msra.mxu0 %v2292
        %2327 = vmatpush.msra.mxu0 %v2288
        %2328 = vmatpush.msra.mxu0 %v2284
        %2329 = vmatpush.msra.mxu0 %v2280
        %2330 = vmatpush.msra.mxu0 %v2276
        %2331 = vmatpush.msra.mxu0 %v2272
        %2332 = vmatpush.msra.mxu0 %v2268
        %2333 = vmatpush.msra.mxu0 %v2264
        %2334 = vmatpush.msra.mxu0 %v2260
        %2335 = vmatpush.msra.mxu0 %v2256
        %2336 = vmatmul.f32.gmra.mxu0 %v2255
        %v2337 = vpop.f32.mrf.mxu0
        %v2338 = vadd.f32 0.0, %v2337
        %2339 = vdwg.mxu0
        %2340 = vmatpush.msra.mxu0 %v2317
        %2341 = vmatpush.msra.mxu0 %v2313
        %2342 = vmatpush.msra.mxu0 %v2309
        %2343 = vmatpush.msra.mxu0 %v2305
        %2344 = vmatpush.msra.mxu0 %v2301
        %2345 = vmatpush.msra.mxu0 %v2297
        %2346 = vmatpush.msra.mxu0 %v2293
        %2347 = vmatpush.msra.mxu0 %v2289
        %2348 = vmatpush.msra.mxu0 %v2285
        %2349 = vmatpush.msra.mxu0 %v2281
        %2350 = vmatpush.msra.mxu0 %v2277
        %2351 = vmatpush.msra.mxu0 %v2273
        %2352 = vmatpush.msra.mxu0 %v2269
        %2353 = vmatpush.msra.mxu0 %v2265
        %2354 = vmatpush.msra.mxu0 %v2261
        %2355 = vmatpush.msra.mxu0 %v2257
        %2356 = vmatmul.f32.gmra.mxu0 %v2255
        %v2357 = vpop.f32.mrf.mxu0
        %v2358 = vadd.f32 0.0, %v2357
        %2359 = vdwg.mxu0
        %2360 = vmatpush.msra.mxu0 %v2318
        %2361 = vmatpush.msra.mxu0 %v2314
        %2362 = vmatpush.msra.mxu0 %v2310
        %2363 = vmatpush.msra.mxu0 %v2306
        %2364 = vmatpush.msra.mxu0 %v2302
        %2365 = vmatpush.msra.mxu0 %v2298
        %2366 = vmatpush.msra.mxu0 %v2294
        %2367 = vmatpush.msra.mxu0 %v2290
        %2368 = vmatpush.msra.mxu0 %v2286
        %2369 = vmatpush.msra.mxu0 %v2282
        %2370 = vmatpush.msra.mxu0 %v2278
        %2371 = vmatpush.msra.mxu0 %v2274
        %2372 = vmatpush.msra.mxu0 %v2270
        %2373 = vmatpush.msra.mxu0 %v2266
        %2374 = vmatpush.msra.mxu0 %v2262
        %2375 = vmatpush.msra.mxu0 %v2258
        %2376 = vmatmul.f32.gmra.mxu0 %v2255
        %v2377 = vpop.f32.mrf.mxu0
        %v2378 = vadd.f32 0.0, %v2377
        %2379 = vdwg.mxu0
        %2380 = vmatpush.msra.mxu0 %v2319
        %2381 = vmatpush.msra.mxu0 %v2315
        %2382 = vmatpush.msra.mxu0 %v2311
        %2383 = vmatpush.msra.mxu0 %v2307
        %2384 = vmatpush.msra.mxu0 %v2303
        %2385 = vmatpush.msra.mxu0 %v2299
        %2386 = vmatpush.msra.mxu0 %v2295
        %2387 = vmatpush.msra.mxu0 %v2291
        %2388 = vmatpush.msra.mxu0 %v2287
        %2389 = vmatpush.msra.mxu0 %v2283
        %2390 = vmatpush.msra.mxu0 %v2279
        %2391 = vmatpush.msra.mxu0 %v2275
        %2392 = vmatpush.msra.mxu0 %v2271
        %2393 = vmatpush.msra.mxu0 %v2267
        %2394 = vmatpush.msra.mxu0 %v2263
        %2395 = vmatpush.msra.mxu0 %v2259
        %2396 = vmatmul.f32.gmra.mxu0 %v2255
        %v2397 = vpop.f32.mrf.mxu0
        %v2398 = vadd.f32 0.0, %v2397
        %2399 = vdwg.mxu0
        %v2400 = vrot.slane %v2338, 4
        %v2401 = vadd.f32 %v2338, %v2400
        %v2402 = vrot.slane %v2401, 2
        %v2403 = vadd.f32 %v2401, %v2402
        %v2404 = vrot.slane %v2403, 1
        %v2405 = vadd.f32 %v2403, %v2404
        %v2406 = vrot.slane %v2358, 4
        %v2407 = vadd.f32 %v2358, %v2406
        %v2408 = vrot.slane %v2407, 2
        %v2409 = vadd.f32 %v2407, %v2408
        %v2410 = vrot.slane %v2409, 1
        %v2411 = vadd.f32 %v2409, %v2410
        %v2412 = vrot.slane %v2378, 4
        %v2413 = vadd.f32 %v2378, %v2412
        %v2414 = vrot.slane %v2413, 2
        %v2415 = vadd.f32 %v2413, %v2414
        %v2416 = vrot.slane %v2415, 1
        %v2417 = vadd.f32 %v2415, %v2416
        %v2418 = vrot.slane %v2398, 4
        %v2419 = vadd.f32 %v2398, %v2418
        %v2420 = vrot.slane %v2419, 2
        %v2421 = vadd.f32 %v2419, %v2420
        %v2422 = vrot.slane %v2421, 1
        %v2423 = vadd.f32 %v2421, %v2422
        %v2424 = vmul.f32 %v2338, %v2338
        %v2425 = vmul.f32 %v2358, %v2358
        %v2426 = vmul.f32 %v2378, %v2378
        %v2427 = vmul.f32 %v2398, %v2398
        %v2428 = vrot.slane %v2424, 4
        %v2429 = vadd.f32 %v2424, %v2428
        %v2430 = vrot.slane %v2429, 2
        %v2431 = vadd.f32 %v2429, %v2430
        %v2432 = vrot.slane %v2431, 1
        %v2433 = vadd.f32 %v2431, %v2432
        %v2434 = vrot.slane %v2425, 4
        %v2435 = vadd.f32 %v2425, %v2434
        %v2436 = vrot.slane %v2435, 2
        %v2437 = vadd.f32 %v2435, %v2436
        %v2438 = vrot.slane %v2437, 1
        %v2439 = vadd.f32 %v2437, %v2438
        %v2440 = vrot.slane %v2426, 4
        %v2441 = vadd.f32 %v2426, %v2440
        %v2442 = vrot.slane %v2441, 2
        %v2443 = vadd.f32 %v2441, %v2442
        %v2444 = vrot.slane %v2443, 1
        %v2445 = vadd.f32 %v2443, %v2444
        %v2446 = vrot.slane %v2427, 4
        %v2447 = vadd.f32 %v2427, %v2446
        %v2448 = vrot.slane %v2447, 2
        %v2449 = vadd.f32 %v2447, %v2448
        %v2450 = vrot.slane %v2449, 1
        %v2451 = vadd.f32 %v2449, %v2450
        %v2452 = vsel %vm968, %v2405, %v2433
        %v2453 = vsel %vm968, %v2411, %v2439
        %v2454 = vsel %vm968, %v2417, %v2445
        %v2455 = vsel %vm968, %v2423, %v2451
        %v2456 = vld [vmem:[#allocation17] sm:$0xff]
        %v2457 = vld [vmem:[#allocation17 + $0x8] sm:$0xff]
        %v2458 = vld [vmem:[#allocation17 + $0x10] sm:$0xff]
        %v2459 = vld [vmem:[#allocation17 + $0x18] sm:$0xff]
        %v2460 = vld [vmem:[#allocation17 + $0x20] sm:$0xff]
        %v2461 = vld [vmem:[#allocation17 + $0x28] sm:$0xff]
        %v2462 = vld [vmem:[#allocation17 + $0x30] sm:$0xff]
        %v2463 = vld [vmem:[#allocation17 + $0x38] sm:$0xff]
        %v2464 = vld [vmem:[#allocation17 + $0x40] sm:$0xff]
        %v2465 = vld [vmem:[#allocation17 + $0x48] sm:$0xff]
        %v2466 = vld [vmem:[#allocation17 + $0x50] sm:$0xff]
        %v2467 = vld [vmem:[#allocation17 + $0x58] sm:$0xff]
        %v2468 = vld [vmem:[#allocation17 + $0x60] sm:$0xff]
        %v2469 = vld [vmem:[#allocation17 + $0x68] sm:$0xff]
        %v2470 = vld [vmem:[#allocation17 + $0x70] sm:$0xff]
        %v2471 = vld [vmem:[#allocation17 + $0x78] sm:$0xff]
        %v2472 = vld [vmem:[#allocation17 + $0x80] sm:$0xff]
        %v2473 = vld [vmem:[#allocation17 + $0x88] sm:$0xff]
        %v2474 = vld [vmem:[#allocation17 + $0x90] sm:$0xff]
        %v2475 = vld [vmem:[#allocation17 + $0x98] sm:$0xff]
        %v2476 = vld [vmem:[#allocation17 + $0xa0] sm:$0xff]
        %v2477 = vld [vmem:[#allocation17 + $0xa8] sm:$0xff]
        %v2478 = vld [vmem:[#allocation17 + $0xb0] sm:$0xff]
        %v2479 = vld [vmem:[#allocation17 + $0xb8] sm:$0xff]
        %v2480 = vld [vmem:[#allocation17 + $0xc0] sm:$0xff]
        %v2481 = vld [vmem:[#allocation17 + $0xc8] sm:$0xff]
        %v2482 = vld [vmem:[#allocation17 + $0xd0] sm:$0xff]
        %v2483 = vld [vmem:[#allocation17 + $0xd8] sm:$0xff]
        %v2484 = vld [vmem:[#allocation17 + $0xe0] sm:$0xff]
        %v2485 = vld [vmem:[#allocation17 + $0xe8] sm:$0xff]
        %v2486 = vld [vmem:[#allocation17 + $0xf0] sm:$0xff]
        %v2487 = vld [vmem:[#allocation17 + $0xf8] sm:$0xff]
        %v2488 = vld [vmem:[#allocation17 + $0x100] sm:$0xff]
        %v2489 = vld [vmem:[#allocation17 + $0x108] sm:$0xff]
        %v2490 = vld [vmem:[#allocation17 + $0x110] sm:$0xff]
        %v2491 = vld [vmem:[#allocation17 + $0x118] sm:$0xff]
        %v2492 = vld [vmem:[#allocation17 + $0x120] sm:$0xff]
        %v2493 = vld [vmem:[#allocation17 + $0x128] sm:$0xff]
        %v2494 = vld [vmem:[#allocation17 + $0x130] sm:$0xff]
        %v2495 = vld [vmem:[#allocation17 + $0x138] sm:$0xff]
        %v2496 = vld [vmem:[#allocation17 + $0x140] sm:$0xff]
        %v2497 = vld [vmem:[#allocation17 + $0x148] sm:$0xff]
        %v2498 = vld [vmem:[#allocation17 + $0x150] sm:$0xff]
        %v2499 = vld [vmem:[#allocation17 + $0x158] sm:$0xff]
        %v2500 = vld [vmem:[#allocation17 + $0x160] sm:$0xff]
        %v2501 = vld [vmem:[#allocation17 + $0x168] sm:$0xff]
        %v2502 = vld [vmem:[#allocation17 + $0x170] sm:$0xff]
        %v2503 = vld [vmem:[#allocation17 + $0x178] sm:$0xff]
        %v2504 = vld [vmem:[#allocation17 + $0x180] sm:$0xff]
        %v2505 = vld [vmem:[#allocation17 + $0x188] sm:$0xff]
        %v2506 = vld [vmem:[#allocation17 + $0x190] sm:$0xff]
        %v2507 = vld [vmem:[#allocation17 + $0x198] sm:$0xff]
        %v2508 = vld [vmem:[#allocation17 + $0x1a0] sm:$0xff]
        %v2509 = vld [vmem:[#allocation17 + $0x1a8] sm:$0xff]
        %v2510 = vld [vmem:[#allocation17 + $0x1b0] sm:$0xff]
        %v2511 = vld [vmem:[#allocation17 + $0x1b8] sm:$0xff]
        %v2512 = vld [vmem:[#allocation17 + $0x1c0] sm:$0xff]
        %v2513 = vld [vmem:[#allocation17 + $0x1c8] sm:$0xff]
        %v2514 = vld [vmem:[#allocation17 + $0x1d0] sm:$0xff]
        %v2515 = vld [vmem:[#allocation17 + $0x1d8] sm:$0xff]
        %v2516 = vld [vmem:[#allocation17 + $0x1e0] sm:$0xff]
        %v2517 = vld [vmem:[#allocation17 + $0x1e8] sm:$0xff]
        %v2518 = vld [vmem:[#allocation17 + $0x1f0] sm:$0xff]
        %v2519 = vld [vmem:[#allocation17 + $0x1f8] sm:$0xff]
        %v2520 = vld [vmem:[#allocation17 + $0x200] sm:$0xff]
        %v2521 = vld [vmem:[#allocation17 + $0x208] sm:$0xff]
        %v2522 = vld [vmem:[#allocation17 + $0x210] sm:$0xff]
        %v2523 = vld [vmem:[#allocation17 + $0x218] sm:$0xff]
        %v2524 = vld [vmem:[#allocation17 + $0x220] sm:$0xff]
        %v2525 = vld [vmem:[#allocation17 + $0x228] sm:$0xff]
        %v2526 = vld [vmem:[#allocation17 + $0x230] sm:$0xff]
        %v2527 = vld [vmem:[#allocation17 + $0x238] sm:$0xff]
        %v2528 = vld [vmem:[#allocation17 + $0x240] sm:$0xff]
        %v2529 = vld [vmem:[#allocation17 + $0x248] sm:$0xff]
        %v2530 = vld [vmem:[#allocation17 + $0x250] sm:$0xff]
        %v2531 = vld [vmem:[#allocation17 + $0x258] sm:$0xff]
        %v2532 = vld [vmem:[#allocation17 + $0x260] sm:$0xff]
        %v2533 = vld [vmem:[#allocation17 + $0x268] sm:$0xff]
        %v2534 = vld [vmem:[#allocation17 + $0x270] sm:$0xff]
        %v2535 = vld [vmem:[#allocation17 + $0x278] sm:$0xff]
        %v2536 = vld [vmem:[#allocation17 + $0x280] sm:$0xff]
        %v2537 = vld [vmem:[#allocation17 + $0x288] sm:$0xff]
        %v2538 = vld [vmem:[#allocation17 + $0x290] sm:$0xff]
        %v2539 = vld [vmem:[#allocation17 + $0x298] sm:$0xff]
        %v2540 = vld [vmem:[#allocation17 + $0x2a0] sm:$0xff]
        %v2541 = vld [vmem:[#allocation17 + $0x2a8] sm:$0xff]
        %v2542 = vld [vmem:[#allocation17 + $0x2b0] sm:$0xff]
        %v2543 = vld [vmem:[#allocation17 + $0x2b8] sm:$0xff]
        %v2544 = vld [vmem:[#allocation17 + $0x2c0] sm:$0xff]
        %v2545 = vld [vmem:[#allocation17 + $0x2c8] sm:$0xff]
        %v2546 = vld [vmem:[#allocation17 + $0x2d0] sm:$0xff]
        %v2547 = vld [vmem:[#allocation17 + $0x2d8] sm:$0xff]
        %v2548 = vld [vmem:[#allocation17 + $0x2e0] sm:$0xff]
        %v2549 = vld [vmem:[#allocation17 + $0x2e8] sm:$0xff]
        %v2550 = vld [vmem:[#allocation17 + $0x2f0] sm:$0xff]
        %v2551 = vld [vmem:[#allocation17 + $0x2f8] sm:$0xff]
        %v2552 = vld [vmem:[#allocation17 + $0x300] sm:$0xff]
        %v2553 = vld [vmem:[#allocation17 + $0x308] sm:$0xff]
        %v2554 = vld [vmem:[#allocation17 + $0x310] sm:$0xff]
        %v2555 = vld [vmem:[#allocation17 + $0x318] sm:$0xff]
        %v2556 = vld [vmem:[#allocation17 + $0x320] sm:$0xff]
        %v2557 = vld [vmem:[#allocation17 + $0x328] sm:$0xff]
        %v2558 = vld [vmem:[#allocation17 + $0x330] sm:$0xff]
        %v2559 = vld [vmem:[#allocation17 + $0x338] sm:$0xff]
        %v2560 = vld [vmem:[#allocation17 + $0x340] sm:$0xff]
        %v2561 = vld [vmem:[#allocation17 + $0x348] sm:$0xff]
        %v2562 = vld [vmem:[#allocation17 + $0x350] sm:$0xff]
        %v2563 = vld [vmem:[#allocation17 + $0x358] sm:$0xff]
        %v2564 = vld [vmem:[#allocation17 + $0x360] sm:$0xff]
        %v2565 = vld [vmem:[#allocation17 + $0x368] sm:$0xff]
        %v2566 = vld [vmem:[#allocation17 + $0x370] sm:$0xff]
        %v2567 = vld [vmem:[#allocation17 + $0x378] sm:$0xff]
        %v2568 = vld [vmem:[#allocation17 + $0x380] sm:$0xff]
        %v2569 = vld [vmem:[#allocation17 + $0x388] sm:$0xff]
        %v2570 = vld [vmem:[#allocation17 + $0x390] sm:$0xff]
        %v2571 = vld [vmem:[#allocation17 + $0x398] sm:$0xff]
        %v2572 = vld [vmem:[#allocation17 + $0x3a0] sm:$0xff]
        %v2573 = vld [vmem:[#allocation17 + $0x3a8] sm:$0xff]
        %v2574 = vld [vmem:[#allocation17 + $0x3b0] sm:$0xff]
        %v2575 = vld [vmem:[#allocation17 + $0x3b8] sm:$0xff]
        %v2576 = vld [vmem:[#allocation17 + $0x3c0] sm:$0xff]
        %v2577 = vld [vmem:[#allocation17 + $0x3c8] sm:$0xff]
        %v2578 = vld [vmem:[#allocation17 + $0x3d0] sm:$0xff]
        %v2579 = vld [vmem:[#allocation17 + $0x3d8] sm:$0xff]
        %v2580 = vld [vmem:[#allocation17 + $0x3e0] sm:$0xff]
        %v2581 = vld [vmem:[#allocation17 + $0x3e8] sm:$0xff]
        %v2582 = vld [vmem:[#allocation17 + $0x3f0] sm:$0xff]
        %v2583 = vld [vmem:[#allocation17 + $0x3f8] sm:$0xff]
        %v2584 = vld [vmem:[#allocation17 + $0x400] sm:$0xff]
        %v2585 = vld [vmem:[#allocation17 + $0x408] sm:$0xff]
        %v2586 = vld [vmem:[#allocation17 + $0x410] sm:$0xff]
        %v2587 = vld [vmem:[#allocation17 + $0x418] sm:$0xff]
        %v2588 = vld [vmem:[#allocation17 + $0x420] sm:$0xff]
        %v2589 = vld [vmem:[#allocation17 + $0x428] sm:$0xff]
        %v2590 = vld [vmem:[#allocation17 + $0x430] sm:$0xff]
        %v2591 = vld [vmem:[#allocation17 + $0x438] sm:$0xff]
        %v2592 = vld [vmem:[#allocation17 + $0x440] sm:$0xff]
        %v2593 = vld [vmem:[#allocation17 + $0x448] sm:$0xff]
        %v2594 = vld [vmem:[#allocation17 + $0x450] sm:$0xff]
        %v2595 = vld [vmem:[#allocation17 + $0x458] sm:$0xff]
        %v2596 = vld [vmem:[#allocation17 + $0x460] sm:$0xff]
        %v2597 = vld [vmem:[#allocation17 + $0x468] sm:$0xff]
        %v2598 = vld [vmem:[#allocation17 + $0x470] sm:$0xff]
        %v2599 = vld [vmem:[#allocation17 + $0x478] sm:$0xff]
        %v2600 = vld [vmem:[#allocation17 + $0x480] sm:$0xff]
        %v2601 = vld [vmem:[#allocation17 + $0x488] sm:$0xff]
        %v2602 = vld [vmem:[#allocation17 + $0x490] sm:$0xff]
        %v2603 = vld [vmem:[#allocation17 + $0x498] sm:$0xff]
        %v2604 = vld [vmem:[#allocation17 + $0x4a0] sm:$0xff]
        %v2605 = vld [vmem:[#allocation17 + $0x4a8] sm:$0xff]
        %v2606 = vld [vmem:[#allocation17 + $0x4b0] sm:$0xff]
        %v2607 = vld [vmem:[#allocation17 + $0x4b8] sm:$0xff]
        %v2608 = vld [vmem:[#allocation17 + $0x4c0] sm:$0xff]
        %v2609 = vld [vmem:[#allocation17 + $0x4c8] sm:$0xff]
        %v2610 = vld [vmem:[#allocation17 + $0x4d0] sm:$0xff]
        %v2611 = vld [vmem:[#allocation17 + $0x4d8] sm:$0xff]
        %v2612 = vld [vmem:[#allocation17 + $0x4e0] sm:$0xff]
        %v2613 = vld [vmem:[#allocation17 + $0x4e8] sm:$0xff]
        %v2614 = vld [vmem:[#allocation17 + $0x4f0] sm:$0xff]
        %v2615 = vld [vmem:[#allocation17 + $0x4f8] sm:$0xff]
        %v2616 = vld [vmem:[#allocation17 + $0x500] sm:$0xff]
        %v2617 = vld [vmem:[#allocation17 + $0x508] sm:$0xff]
        %v2618 = vld [vmem:[#allocation17 + $0x510] sm:$0xff]
        %v2619 = vld [vmem:[#allocation17 + $0x518] sm:$0xff]
        %v2620 = vld [vmem:[#allocation17 + $0x520] sm:$0xff]
        %v2621 = vld [vmem:[#allocation17 + $0x528] sm:$0xff]
        %v2622 = vld [vmem:[#allocation17 + $0x530] sm:$0xff]
        %v2623 = vld [vmem:[#allocation17 + $0x538] sm:$0xff]
        %v2624 = vld [vmem:[#allocation17 + $0x540] sm:$0xff]
        %v2625 = vld [vmem:[#allocation17 + $0x548] sm:$0xff]
        %v2626 = vld [vmem:[#allocation17 + $0x550] sm:$0xff]
        %v2627 = vld [vmem:[#allocation17 + $0x558] sm:$0xff]
        %v2628 = vld [vmem:[#allocation17 + $0x560] sm:$0xff]
        %v2629 = vld [vmem:[#allocation17 + $0x568] sm:$0xff]
        %v2630 = vld [vmem:[#allocation17 + $0x570] sm:$0xff]
        %v2631 = vld [vmem:[#allocation17 + $0x578] sm:$0xff]
        %v2632 = vld [vmem:[#allocation17 + $0x580] sm:$0xff]
        %v2633 = vld [vmem:[#allocation17 + $0x588] sm:$0xff]
        %v2634 = vld [vmem:[#allocation17 + $0x590] sm:$0xff]
        %v2635 = vld [vmem:[#allocation17 + $0x598] sm:$0xff]
        %v2636 = vld [vmem:[#allocation17 + $0x5a0] sm:$0xff]
        %v2637 = vld [vmem:[#allocation17 + $0x5a8] sm:$0xff]
        %v2638 = vld [vmem:[#allocation17 + $0x5b0] sm:$0xff]
        %v2639 = vld [vmem:[#allocation17 + $0x5b8] sm:$0xff]
        %v2640 = vld [vmem:[#allocation17 + $0x5c0] sm:$0xff]
        %v2641 = vld [vmem:[#allocation17 + $0x5c8] sm:$0xff]
        %v2642 = vld [vmem:[#allocation17 + $0x5d0] sm:$0xff]
        %v2643 = vld [vmem:[#allocation17 + $0x5d8] sm:$0xff]
        %v2644 = vld [vmem:[#allocation17 + $0x5e0] sm:$0xff]
        %v2645 = vld [vmem:[#allocation17 + $0x5e8] sm:$0xff]
        %v2646 = vld [vmem:[#allocation17 + $0x5f0] sm:$0xff]
        %v2647 = vld [vmem:[#allocation17 + $0x5f8] sm:$0xff]
        %v2648 = vld [vmem:[#allocation17 + $0x600] sm:$0xff]
        %v2649 = vld [vmem:[#allocation17 + $0x608] sm:$0xff]
        %v2650 = vld [vmem:[#allocation17 + $0x610] sm:$0xff]
        %v2651 = vld [vmem:[#allocation17 + $0x618] sm:$0xff]
        %v2652 = vld [vmem:[#allocation17 + $0x620] sm:$0xff]
        %v2653 = vld [vmem:[#allocation17 + $0x628] sm:$0xff]
        %v2654 = vld [vmem:[#allocation17 + $0x630] sm:$0xff]
        %v2655 = vld [vmem:[#allocation17 + $0x638] sm:$0xff]
        %v2656 = vld [vmem:[#allocation17 + $0x640] sm:$0xff]
        %v2657 = vld [vmem:[#allocation17 + $0x648] sm:$0xff]
        %v2658 = vld [vmem:[#allocation17 + $0x650] sm:$0xff]
        %v2659 = vld [vmem:[#allocation17 + $0x658] sm:$0xff]
        %v2660 = vld [vmem:[#allocation17 + $0x660] sm:$0xff]
        %v2661 = vld [vmem:[#allocation17 + $0x668] sm:$0xff]
        %v2662 = vld [vmem:[#allocation17 + $0x670] sm:$0xff]
        %v2663 = vld [vmem:[#allocation17 + $0x678] sm:$0xff]
        %v2664 = vld [vmem:[#allocation17 + $0x680] sm:$0xff]
        %v2665 = vld [vmem:[#allocation17 + $0x688] sm:$0xff]
        %v2666 = vld [vmem:[#allocation17 + $0x690] sm:$0xff]
        %v2667 = vld [vmem:[#allocation17 + $0x698] sm:$0xff]
        %v2668 = vld [vmem:[#allocation17 + $0x6a0] sm:$0xff]
        %v2669 = vld [vmem:[#allocation17 + $0x6a8] sm:$0xff]
        %v2670 = vld [vmem:[#allocation17 + $0x6b0] sm:$0xff]
        %v2671 = vld [vmem:[#allocation17 + $0x6b8] sm:$0xff]
        %v2672 = vld [vmem:[#allocation17 + $0x6c0] sm:$0xff]
        %v2673 = vld [vmem:[#allocation17 + $0x6c8] sm:$0xff]
        %v2674 = vld [vmem:[#allocation17 + $0x6d0] sm:$0xff]
        %v2675 = vld [vmem:[#allocation17 + $0x6d8] sm:$0xff]
        %v2676 = vld [vmem:[#allocation17 + $0x6e0] sm:$0xff]
        %v2677 = vld [vmem:[#allocation17 + $0x6e8] sm:$0xff]
        %v2678 = vld [vmem:[#allocation17 + $0x6f0] sm:$0xff]
        %v2679 = vld [vmem:[#allocation17 + $0x6f8] sm:$0xff]
        %v2680 = vld [vmem:[#allocation17 + $0x700] sm:$0xff]
        %v2681 = vld [vmem:[#allocation17 + $0x708] sm:$0xff]
        %v2682 = vld [vmem:[#allocation17 + $0x710] sm:$0xff]
        %v2683 = vld [vmem:[#allocation17 + $0x718] sm:$0xff]
        %v2684 = vld [vmem:[#allocation17 + $0x720] sm:$0xff]
        %v2685 = vld [vmem:[#allocation17 + $0x728] sm:$0xff]
        %v2686 = vld [vmem:[#allocation17 + $0x730] sm:$0xff]
        %v2687 = vld [vmem:[#allocation17 + $0x738] sm:$0xff]
        %v2688 = vld [vmem:[#allocation17 + $0x740] sm:$0xff]
        %v2689 = vld [vmem:[#allocation17 + $0x748] sm:$0xff]
        %v2690 = vld [vmem:[#allocation17 + $0x750] sm:$0xff]
        %v2691 = vld [vmem:[#allocation17 + $0x758] sm:$0xff]
        %v2692 = vld [vmem:[#allocation17 + $0x760] sm:$0xff]
        %v2693 = vld [vmem:[#allocation17 + $0x768] sm:$0xff]
        %v2694 = vld [vmem:[#allocation17 + $0x770] sm:$0xff]
        %v2695 = vld [vmem:[#allocation17 + $0x778] sm:$0xff]
        %v2696 = vld [vmem:[#allocation17 + $0x780] sm:$0xff]
        %v2697 = vld [vmem:[#allocation17 + $0x788] sm:$0xff]
        %v2698 = vld [vmem:[#allocation17 + $0x790] sm:$0xff]
        %v2699 = vld [vmem:[#allocation17 + $0x798] sm:$0xff]
        %v2700 = vld [vmem:[#allocation17 + $0x7a0] sm:$0xff]
        %v2701 = vld [vmem:[#allocation17 + $0x7a8] sm:$0xff]
        %v2702 = vld [vmem:[#allocation17 + $0x7b0] sm:$0xff]
        %v2703 = vld [vmem:[#allocation17 + $0x7b8] sm:$0xff]
        %v2704 = vld [vmem:[#allocation17 + $0x7c0] sm:$0xff]
        %v2705 = vld [vmem:[#allocation17 + $0x7c8] sm:$0xff]
        %v2706 = vld [vmem:[#allocation17 + $0x7d0] sm:$0xff]
        %v2707 = vld [vmem:[#allocation17 + $0x7d8] sm:$0xff]
        %v2708 = vld [vmem:[#allocation17 + $0x7e0] sm:$0xff]
        %v2709 = vld [vmem:[#allocation17 + $0x7e8] sm:$0xff]
        %v2710 = vld [vmem:[#allocation17 + $0x7f0] sm:$0xff]
        %v2711 = vld [vmem:[#allocation17 + $0x7f8] sm:$0xff]
        %2712 = vmatpush.msra.mxu0 %v2516
        %2713 = vmatpush.msra.mxu0 %v2512
        %2714 = vmatpush.msra.mxu0 %v2508
        %2715 = vmatpush.msra.mxu0 %v2504
        %2716 = vmatpush.msra.mxu0 %v2500
        %2717 = vmatpush.msra.mxu0 %v2496
        %2718 = vmatpush.msra.mxu0 %v2492
        %2719 = vmatpush.msra.mxu0 %v2488
        %2720 = vmatpush.msra.mxu0 %v2484
        %2721 = vmatpush.msra.mxu0 %v2480
        %2722 = vmatpush.msra.mxu0 %v2476
        %2723 = vmatpush.msra.mxu0 %v2472
        %2724 = vmatpush.msra.mxu0 %v2468
        %2725 = vmatpush.msra.mxu0 %v2464
        %2726 = vmatpush.msra.mxu0 %v2460
        %2727 = vmatpush.msra.mxu0 %v2456
        %2728 = vmatmul.f32.gmra.mxu0 %v2452
        %v2729 = vpop.f32.mrf.mxu0
        %v2730 = vadd.f32 0.0, %v2729
        %2731 = vdwg.mxu0
        %2732 = vmatpush.msra.mxu0 %v2580
        %2733 = vmatpush.msra.mxu0 %v2576
        %2734 = vmatpush.msra.mxu0 %v2572
        %2735 = vmatpush.msra.mxu0 %v2568
        %2736 = vmatpush.msra.mxu0 %v2564
        %2737 = vmatpush.msra.mxu0 %v2560
        %2738 = vmatpush.msra.mxu0 %v2556
        %2739 = vmatpush.msra.mxu0 %v2552
        %2740 = vmatpush.msra.mxu0 %v2548
        %2741 = vmatpush.msra.mxu0 %v2544
        %2742 = vmatpush.msra.mxu0 %v2540
        %2743 = vmatpush.msra.mxu0 %v2536
        %2744 = vmatpush.msra.mxu0 %v2532
        %2745 = vmatpush.msra.mxu0 %v2528
        %2746 = vmatpush.msra.mxu0 %v2524
        %2747 = vmatpush.msra.mxu0 %v2520
        %2748 = vmatmul.f32.gmra.mxu0 %v2453
        %v2749 = vpop.f32.mrf.mxu0
        %v2750 = vadd.f32 %v2730, %v2749
        %2751 = vdwg.mxu0
        %2752 = vmatpush.msra.mxu0 %v2644
        %2753 = vmatpush.msra.mxu0 %v2640
        %2754 = vmatpush.msra.mxu0 %v2636
        %2755 = vmatpush.msra.mxu0 %v2632
        %2756 = vmatpush.msra.mxu0 %v2628
        %2757 = vmatpush.msra.mxu0 %v2624
        %2758 = vmatpush.msra.mxu0 %v2620
        %2759 = vmatpush.msra.mxu0 %v2616
        %2760 = vmatpush.msra.mxu0 %v2612
        %2761 = vmatpush.msra.mxu0 %v2608
        %2762 = vmatpush.msra.mxu0 %v2604
        %2763 = vmatpush.msra.mxu0 %v2600
        %2764 = vmatpush.msra.mxu0 %v2596
        %2765 = vmatpush.msra.mxu0 %v2592
        %2766 = vmatpush.msra.mxu0 %v2588
        %2767 = vmatpush.msra.mxu0 %v2584
        %2768 = vmatmul.f32.gmra.mxu0 %v2454
        %v2769 = vpop.f32.mrf.mxu0
        %v2770 = vadd.f32 %v2750, %v2769
        %2771 = vdwg.mxu0
        %2772 = vmatpush.msra.mxu0 %v2708
        %2773 = vmatpush.msra.mxu0 %v2704
        %2774 = vmatpush.msra.mxu0 %v2700
        %2775 = vmatpush.msra.mxu0 %v2696
        %2776 = vmatpush.msra.mxu0 %v2692
        %2777 = vmatpush.msra.mxu0 %v2688
        %2778 = vmatpush.msra.mxu0 %v2684
        %2779 = vmatpush.msra.mxu0 %v2680
        %2780 = vmatpush.msra.mxu0 %v2676
        %2781 = vmatpush.msra.mxu0 %v2672
        %2782 = vmatpush.msra.mxu0 %v2668
        %2783 = vmatpush.msra.mxu0 %v2664
        %2784 = vmatpush.msra.mxu0 %v2660
        %2785 = vmatpush.msra.mxu0 %v2656
        %2786 = vmatpush.msra.mxu0 %v2652
        %2787 = vmatpush.msra.mxu0 %v2648
        %2788 = vmatmul.f32.gmra.mxu0 %v2455
        %v2789 = vpop.f32.mrf.mxu0
        %v2790 = vadd.f32 %v2770, %v2789
        %2791 = vdwg.mxu0
        %2792 = vmatpush.msra.mxu0 %v2517
        %2793 = vmatpush.msra.mxu0 %v2513
        %2794 = vmatpush.msra.mxu0 %v2509
        %2795 = vmatpush.msra.mxu0 %v2505
        %2796 = vmatpush.msra.mxu0 %v2501
        %2797 = vmatpush.msra.mxu0 %v2497
        %2798 = vmatpush.msra.mxu0 %v2493
        %2799 = vmatpush.msra.mxu0 %v2489
        %2800 = vmatpush.msra.mxu0 %v2485
        %2801 = vmatpush.msra.mxu0 %v2481
        %2802 = vmatpush.msra.mxu0 %v2477
        %2803 = vmatpush.msra.mxu0 %v2473
        %2804 = vmatpush.msra.mxu0 %v2469
        %2805 = vmatpush.msra.mxu0 %v2465
        %2806 = vmatpush.msra.mxu0 %v2461
        %2807 = vmatpush.msra.mxu0 %v2457
        %2808 = vmatmul.f32.gmra.mxu0 %v2452
        %v2809 = vpop.f32.mrf.mxu0
        %v2810 = vadd.f32 0.0, %v2809
        %2811 = vdwg.mxu0
        %2812 = vmatpush.msra.mxu0 %v2581
        %2813 = vmatpush.msra.mxu0 %v2577
        %2814 = vmatpush.msra.mxu0 %v2573
        %2815 = vmatpush.msra.mxu0 %v2569
        %2816 = vmatpush.msra.mxu0 %v2565
        %2817 = vmatpush.msra.mxu0 %v2561
        %2818 = vmatpush.msra.mxu0 %v2557
        %2819 = vmatpush.msra.mxu0 %v2553
        %2820 = vmatpush.msra.mxu0 %v2549
        %2821 = vmatpush.msra.mxu0 %v2545
        %2822 = vmatpush.msra.mxu0 %v2541
        %2823 = vmatpush.msra.mxu0 %v2537
        %2824 = vmatpush.msra.mxu0 %v2533
        %2825 = vmatpush.msra.mxu0 %v2529
        %2826 = vmatpush.msra.mxu0 %v2525
        %2827 = vmatpush.msra.mxu0 %v2521
        %2828 = vmatmul.f32.gmra.mxu0 %v2453
        %v2829 = vpop.f32.mrf.mxu0
        %v2830 = vadd.f32 %v2810, %v2829
        %2831 = vdwg.mxu0
        %2832 = vmatpush.msra.mxu0 %v2645
        %2833 = vmatpush.msra.mxu0 %v2641
        %2834 = vmatpush.msra.mxu0 %v2637
        %2835 = vmatpush.msra.mxu0 %v2633
        %2836 = vmatpush.msra.mxu0 %v2629
        %2837 = vmatpush.msra.mxu0 %v2625
        %2838 = vmatpush.msra.mxu0 %v2621
        %2839 = vmatpush.msra.mxu0 %v2617
        %2840 = vmatpush.msra.mxu0 %v2613
        %2841 = vmatpush.msra.mxu0 %v2609
        %2842 = vmatpush.msra.mxu0 %v2605
        %2843 = vmatpush.msra.mxu0 %v2601
        %2844 = vmatpush.msra.mxu0 %v2597
        %2845 = vmatpush.msra.mxu0 %v2593
        %2846 = vmatpush.msra.mxu0 %v2589
        %2847 = vmatpush.msra.mxu0 %v2585
        %2848 = vmatmul.f32.gmra.mxu0 %v2454
        %v2849 = vpop.f32.mrf.mxu0
        %v2850 = vadd.f32 %v2830, %v2849
        %2851 = vdwg.mxu0
        %2852 = vmatpush.msra.mxu0 %v2709
        %2853 = vmatpush.msra.mxu0 %v2705
        %2854 = vmatpush.msra.mxu0 %v2701
        %2855 = vmatpush.msra.mxu0 %v2697
        %2856 = vmatpush.msra.mxu0 %v2693
        %2857 = vmatpush.msra.mxu0 %v2689
        %2858 = vmatpush.msra.mxu0 %v2685
        %2859 = vmatpush.msra.mxu0 %v2681
        %2860 = vmatpush.msra.mxu0 %v2677
        %2861 = vmatpush.msra.mxu0 %v2673
        %2862 = vmatpush.msra.mxu0 %v2669
        %2863 = vmatpush.msra.mxu0 %v2665
        %2864 = vmatpush.msra.mxu0 %v2661
        %2865 = vmatpush.msra.mxu0 %v2657
        %2866 = vmatpush.msra.mxu0 %v2653
        %2867 = vmatpush.msra.mxu0 %v2649
        %2868 = vmatmul.f32.gmra.mxu0 %v2455
        %v2869 = vpop.f32.mrf.mxu0
        %v2870 = vadd.f32 %v2850, %v2869
        %2871 = vdwg.mxu0
        %2872 = vmatpush.msra.mxu0 %v2518
        %2873 = vmatpush.msra.mxu0 %v2514
        %2874 = vmatpush.msra.mxu0 %v2510
        %2875 = vmatpush.msra.mxu0 %v2506
        %2876 = vmatpush.msra.mxu0 %v2502
        %2877 = vmatpush.msra.mxu0 %v2498
        %2878 = vmatpush.msra.mxu0 %v2494
        %2879 = vmatpush.msra.mxu0 %v2490
        %2880 = vmatpush.msra.mxu0 %v2486
        %2881 = vmatpush.msra.mxu0 %v2482
        %2882 = vmatpush.msra.mxu0 %v2478
        %2883 = vmatpush.msra.mxu0 %v2474
        %2884 = vmatpush.msra.mxu0 %v2470
        %2885 = vmatpush.msra.mxu0 %v2466
        %2886 = vmatpush.msra.mxu0 %v2462
        %2887 = vmatpush.msra.mxu0 %v2458
        %2888 = vmatmul.f32.gmra.mxu0 %v2452
        %v2889 = vpop.f32.mrf.mxu0
        %v2890 = vadd.f32 0.0, %v2889
        %2891 = vdwg.mxu0
        %2892 = vmatpush.msra.mxu0 %v2582
        %2893 = vmatpush.msra.mxu0 %v2578
        %2894 = vmatpush.msra.mxu0 %v2574
        %2895 = vmatpush.msra.mxu0 %v2570
        %2896 = vmatpush.msra.mxu0 %v2566
        %2897 = vmatpush.msra.mxu0 %v2562
        %2898 = vmatpush.msra.mxu0 %v2558
        %2899 = vmatpush.msra.mxu0 %v2554
        %2900 = vmatpush.msra.mxu0 %v2550
        %2901 = vmatpush.msra.mxu0 %v2546
        %2902 = vmatpush.msra.mxu0 %v2542
        %2903 = vmatpush.msra.mxu0 %v2538
        %2904 = vmatpush.msra.mxu0 %v2534
        %2905 = vmatpush.msra.mxu0 %v2530
        %2906 = vmatpush.msra.mxu0 %v2526
        %2907 = vmatpush.msra.mxu0 %v2522
        %2908 = vmatmul.f32.gmra.mxu0 %v2453
        %v2909 = vpop.f32.mrf.mxu0
        %v2910 = vadd.f32 %v2890, %v2909
        %2911 = vdwg.mxu0
        %2912 = vmatpush.msra.mxu0 %v2646
        %2913 = vmatpush.msra.mxu0 %v2642
        %2914 = vmatpush.msra.mxu0 %v2638
        %2915 = vmatpush.msra.mxu0 %v2634
        %2916 = vmatpush.msra.mxu0 %v2630
        %2917 = vmatpush.msra.mxu0 %v2626
        %2918 = vmatpush.msra.mxu0 %v2622
        %2919 = vmatpush.msra.mxu0 %v2618
        %2920 = vmatpush.msra.mxu0 %v2614
        %2921 = vmatpush.msra.mxu0 %v2610
        %2922 = vmatpush.msra.mxu0 %v2606
        %2923 = vmatpush.msra.mxu0 %v2602
        %2924 = vmatpush.msra.mxu0 %v2598
        %2925 = vmatpush.msra.mxu0 %v2594
        %2926 = vmatpush.msra.mxu0 %v2590
        %2927 = vmatpush.msra.mxu0 %v2586
        %2928 = vmatmul.f32.gmra.mxu0 %v2454
        %v2929 = vpop.f32.mrf.mxu0
        %v2930 = vadd.f32 %v2910, %v2929
        %2931 = vdwg.mxu0
        %2932 = vmatpush.msra.mxu0 %v2710
        %2933 = vmatpush.msra.mxu0 %v2706
        %2934 = vmatpush.msra.mxu0 %v2702
        %2935 = vmatpush.msra.mxu0 %v2698
        %2936 = vmatpush.msra.mxu0 %v2694
        %2937 = vmatpush.msra.mxu0 %v2690
        %2938 = vmatpush.msra.mxu0 %v2686
        %2939 = vmatpush.msra.mxu0 %v2682
        %2940 = vmatpush.msra.mxu0 %v2678
        %2941 = vmatpush.msra.mxu0 %v2674
        %2942 = vmatpush.msra.mxu0 %v2670
        %2943 = vmatpush.msra.mxu0 %v2666
        %2944 = vmatpush.msra.mxu0 %v2662
        %2945 = vmatpush.msra.mxu0 %v2658
        %2946 = vmatpush.msra.mxu0 %v2654
        %2947 = vmatpush.msra.mxu0 %v2650
        %2948 = vmatmul.f32.gmra.mxu0 %v2455
        %v2949 = vpop.f32.mrf.mxu0
        %v2950 = vadd.f32 %v2930, %v2949
        %2951 = vdwg.mxu0
        %2952 = vmatpush.msra.mxu0 %v2519
        %2953 = vmatpush.msra.mxu0 %v2515
        %2954 = vmatpush.msra.mxu0 %v2511
        %2955 = vmatpush.msra.mxu0 %v2507
        %2956 = vmatpush.msra.mxu0 %v2503
        %2957 = vmatpush.msra.mxu0 %v2499
        %2958 = vmatpush.msra.mxu0 %v2495
        %2959 = vmatpush.msra.mxu0 %v2491
        %2960 = vmatpush.msra.mxu0 %v2487
        %2961 = vmatpush.msra.mxu0 %v2483
        %2962 = vmatpush.msra.mxu0 %v2479
        %2963 = vmatpush.msra.mxu0 %v2475
        %2964 = vmatpush.msra.mxu0 %v2471
        %2965 = vmatpush.msra.mxu0 %v2467
        %2966 = vmatpush.msra.mxu0 %v2463
        %2967 = vmatpush.msra.mxu0 %v2459
        %2968 = vmatmul.f32.gmra.mxu0 %v2452
        %v2969 = vpop.f32.mrf.mxu0
        %v2970 = vadd.f32 0.0, %v2969
        %2971 = vdwg.mxu0
        %2972 = vmatpush.msra.mxu0 %v2583
        %2973 = vmatpush.msra.mxu0 %v2579
        %2974 = vmatpush.msra.mxu0 %v2575
        %2975 = vmatpush.msra.mxu0 %v2571
        %2976 = vmatpush.msra.mxu0 %v2567
        %2977 = vmatpush.msra.mxu0 %v2563
        %2978 = vmatpush.msra.mxu0 %v2559
        %2979 = vmatpush.msra.mxu0 %v2555
        %2980 = vmatpush.msra.mxu0 %v2551
        %2981 = vmatpush.msra.mxu0 %v2547
        %2982 = vmatpush.msra.mxu0 %v2543
        %2983 = vmatpush.msra.mxu0 %v2539
        %2984 = vmatpush.msra.mxu0 %v2535
        %2985 = vmatpush.msra.mxu0 %v2531
        %2986 = vmatpush.msra.mxu0 %v2527
        %2987 = vmatpush.msra.mxu0 %v2523
        %2988 = vmatmul.f32.gmra.mxu0 %v2453
        %v2989 = vpop.f32.mrf.mxu0
        %v2990 = vadd.f32 %v2970, %v2989
        %2991 = vdwg.mxu0
        %2992 = vmatpush.msra.mxu0 %v2647
        %2993 = vmatpush.msra.mxu0 %v2643
        %2994 = vmatpush.msra.mxu0 %v2639
        %2995 = vmatpush.msra.mxu0 %v2635
        %2996 = vmatpush.msra.mxu0 %v2631
        %2997 = vmatpush.msra.mxu0 %v2627
        %2998 = vmatpush.msra.mxu0 %v2623
        %2999 = vmatpush.msra.mxu0 %v2619
        %3000 = vmatpush.msra.mxu0 %v2615
        %3001 = vmatpush.msra.mxu0 %v2611
        %3002 = vmatpush.msra.mxu0 %v2607
        %3003 = vmatpush.msra.mxu0 %v2603
        %3004 = vmatpush.msra.mxu0 %v2599
        %3005 = vmatpush.msra.mxu0 %v2595
        %3006 = vmatpush.msra.mxu0 %v2591
        %3007 = vmatpush.msra.mxu0 %v2587
        %3008 = vmatmul.f32.gmra.mxu0 %v2454
        %v3009 = vpop.f32.mrf.mxu0
        %v3010 = vadd.f32 %v2990, %v3009
        %3011 = vdwg.mxu0
        %3012 = vmatpush.msra.mxu0 %v2711
        %3013 = vmatpush.msra.mxu0 %v2707
        %3014 = vmatpush.msra.mxu0 %v2703
        %3015 = vmatpush.msra.mxu0 %v2699
        %3016 = vmatpush.msra.mxu0 %v2695
        %3017 = vmatpush.msra.mxu0 %v2691
        %3018 = vmatpush.msra.mxu0 %v2687
        %3019 = vmatpush.msra.mxu0 %v2683
        %3020 = vmatpush.msra.mxu0 %v2679
        %3021 = vmatpush.msra.mxu0 %v2675
        %3022 = vmatpush.msra.mxu0 %v2671
        %3023 = vmatpush.msra.mxu0 %v2667
        %3024 = vmatpush.msra.mxu0 %v2663
        %3025 = vmatpush.msra.mxu0 %v2659
        %3026 = vmatpush.msra.mxu0 %v2655
        %3027 = vmatpush.msra.mxu0 %v2651
        %3028 = vmatmul.f32.gmra.mxu0 %v2455
        %v3029 = vpop.f32.mrf.mxu0
        %v3030 = vadd.f32 %v3010, %v3029
        %3031 = vdwg.mxu0
        %v3032 = vmul.f32 %v2790, %v2790
        %v3033 = vmul.f32 %v2870, %v2870
        %v3034 = vmul.f32 %v2950, %v2950
        %v3035 = vmul.f32 %v3030, %v3030
        %v3040 = vrot.slane %v3032, 7
        %v3041 = vrot.slane %v3033, 7
        %v3042 = vrot.slane %v3034, 7
        %v3043 = vrot.slane %v3035, 7
        %v3048 = vsub.f32 %v2790, %v3040
        %v3049 = vsub.f32 %v2870, %v3041
        %v3050 = vsub.f32 %v2950, %v3042
        %v3051 = vsub.f32 %v3030, %v3043
        %v3052 = vperm.slane %v2790, 0
        %v3053 = vperm.slane %v2870, 0
        %v3054 = vperm.slane %v2950, 0
        %v3055 = vperm.slane %v3030, 0
        %v3056 = vsub.f32 %v2338, %v3052
        %v3057 = vsub.f32 %v2358, %v3053
        %v3058 = vsub.f32 %v2378, %v3054
        %v3059 = vsub.f32 %v2398, %v3055
        %v3060 = vadd.f32 %v3048, 1e-05
        %v3061 = vadd.f32 %v3049, 1e-05
        %v3062 = vadd.f32 %v3050, 1e-05
        %v3063 = vadd.f32 %v3051, 1e-05
        %v3064 = vrsqrt.pop %v3060
        %v3065 = vmul.f32 %v3064, %v3060
        %v3066 = vmul.f32 %v3065, %v3064
        %v3067 = vmul.f32 0.5, %v3066
        %v3068 = vsub.f32 1.5, %v3067
        %v3069 = vmul.f32 %v3064, %v3068
        %vm3070 = vweird.f32 %v3060
        %vm3071 = vweird.f32 %v3064
        %vm3072 = vmor %vm3070, %vm3071
        %v3073 = vsel %vm3072, %v3064, %v3069
        %v3074 = vrsqrt.pop %v3061
        %v3075 = vmul.f32 %v3074, %v3061
        %v3076 = vmul.f32 %v3075, %v3074
        %v3077 = vmul.f32 0.5, %v3076
        %v3078 = vsub.f32 1.5, %v3077
        %v3079 = vmul.f32 %v3074, %v3078
        %vm3080 = vweird.f32 %v3061
        %vm3081 = vweird.f32 %v3074
        %vm3082 = vmor %vm3080, %vm3081
        %v3083 = vsel %vm3082, %v3074, %v3079
        %v3084 = vrsqrt.pop %v3062
        %v3085 = vmul.f32 %v3084, %v3062
        %v3086 = vmul.f32 %v3085, %v3084
        %v3087 = vmul.f32 0.5, %v3086
        %v3088 = vsub.f32 1.5, %v3087
        %v3089 = vmul.f32 %v3084, %v3088
        %vm3090 = vweird.f32 %v3062
        %vm3091 = vweird.f32 %v3084
        %vm3092 = vmor %vm3090, %vm3091
        %v3093 = vsel %vm3092, %v3084, %v3089
        %v3094 = vrsqrt.pop %v3063
        %v3095 = vmul.f32 %v3094, %v3063
        %v3096 = vmul.f32 %v3095, %v3094
        %v3097 = vmul.f32 0.5, %v3096
        %v3098 = vsub.f32 1.5, %v3097
        %v3099 = vmul.f32 %v3094, %v3098
        %vm3100 = vweird.f32 %v3063
        %vm3101 = vweird.f32 %v3094
        %vm3102 = vmor %vm3100, %vm3101
        %v3103 = vsel %vm3102, %v3094, %v3099
        %v3104 = vperm.slane %v3073, 1
        %v3105 = vperm.slane %v3083, 1
        %v3106 = vperm.slane %v3093, 1
        %v3107 = vperm.slane %v3103, 1
        %v3108 = vmul.f32 %v3056, %v3104
        %v3109 = vmul.f32 %v3057, %v3105
        %v3110 = vmul.f32 %v3058, %v3106
        %v3111 = vmul.f32 %v3059, %v3107
        %v3112 = vld [vmem:[#allocation19] sm:$0xf]
        %v3114 = vperm.slane %v3112, 0
        %v3115 = vperm.slane %v3112, 1
        %v3116 = vperm.slane %v3112, 2
        %v3117 = vperm.slane %v3112, 3
        %v3122 = vmul.f32 %v3108, %v3114
        %v3123 = vmul.f32 %v3109, %v3115
        %v3124 = vmul.f32 %v3110, %v3116
        %v3125 = vmul.f32 %v3111, %v3117
        %v3126 = vld [vmem:[#allocation20] sm:$0xf]
        %v3128 = vperm.slane %v3126, 0
        %v3129 = vperm.slane %v3126, 1
        %v3130 = vperm.slane %v3126, 2
        %v3131 = vperm.slane %v3126, 3
        %v3136 = vadd.f32 %v3122, %v3128
        %v3137 = vadd.f32 %v3123, %v3129
        %v3138 = vadd.f32 %v3124, %v3130
        %v3139 = vadd.f32 %v3125, %v3131
        %v3140 = vadd.f32 %v3136, %v849
        %v3141 = vadd.f32 %v3137, %v850
        %v3142 = vadd.f32 %v3138, %v851
        %v3143 = vadd.f32 %v3139, %v852
        %v3144 = vmax.f32 %v3140, 0.0
        %v3145 = vmax.f32 %v3141, 0.0
        %v3146 = vmax.f32 %v3142, 0.0
        %v3147 = vmax.f32 %v3143, 0.0
        %3148 = vst [vmem:[%s651] sm:$0xff] %v3144
        %3149 = vst [vmem:[%s651 + $0x8] sm:$0xff] %v3145
        %3150 = vst [vmem:[%s651 + $0x10] sm:$0xff] %v3146
        %3151 = vst [vmem:[%s651 + $0x18] sm:$0xff] %v3147
        %p3152 = scmp.lt.s32.totalorder %s34, 1
        %s3153 = scalar_select %p3152, %s34, 1
        %s3154 = smul.addr %s3153, 4
        %s3155 = smul.addr %s3154, 8
        %s3156 = scalar_lea.vmem %s14, %s3155
        // Predicated region
        $region125: #{osblock_inin_forward.1} parent=75 // pred_check
          %p3157 = pneg %p351
        $region126: #{osblock_inin_forward.1} parent=75 // pred_check_branch
          %3159 = sbr.rel (%p3157) target = $region128
        $region127: #{osblock_inin_forward.1} parent=75 // pred_region
          _
        $region128: #{osblock_inin_forward.1} parent=75 // pred_fallthru
          _
      $region76: #{osblock_inin_forward.1} parent=5 // pred_fallthru
        _
      %p3160 = scmp.le.s32.totalorder 2, %s29
      // Predicated region
      $region129: #{osblock_inin_forward.1} parent=5 // pred_check
        %p3161 = pneg %p3160
      $region130: #{osblock_inin_forward.1} parent=5 // pred_check_branch
        %3163 = sbr.rel (%p3161) target = $region132
      $region131: #{osblock_inin_forward.1} parent=5 // pred_region
        %s3164 = ssub.s32 %s29, 2
        // Predicated region
        $region133: #{osblock_inin_forward.1} parent=131 // pred_check
          %p3165 = pneg %p357
        $region134: #{osblock_inin_forward.1} parent=131 // pred_check_branch
          %3167 = sbr.rel (%p3165) target = $region136
        $region135: #{osblock_inin_forward.1} parent=131 // pred_region
          %p3168 = scmp.lt.s32.totalorder %s35, 1
          %s3169 = scalar_select %p3168, %s35, 1
          %s3170 = smul.addr %s3169, 4
          %s3171 = smul.addr %s3170, 8
          %s3172 = scalar_lea.vmem %s14, %s3171
        $region136: #{osblock_inin_forward.1} parent=131 // pred_fallthru
          _
      $region132: #{osblock_inin_forward.1} parent=5 // pred_fallthru
        _
    $region6: #{osblock_inin_forward.1} parent=1 // loop_footer
      %s33 = sadd.s32 1, %s29
    $region7: #{osblock_inin_forward.1} parent=1 // loop_footer_branch
      %28 = sbr.rel target = $region3
    $region8: #{osblock_inin_forward.1} parent=1 // loop_exit
      _
    %3173 = vsyncpa [#allocation4], 1
    %s3174 = scalar_lea.sflag [#allocation4], 1
    %3175 = vsyncpa %s3174, 1
    %3176 = vsyncpa [#allocation6], 1
    %3177 = vsyncpa [#allocation9], 1
    %3178 = vsyncpa [#allocation12], 1
    %3179 = vsyncpa [#allocation15], 1
    %3180 = vsyncpa [#allocation18], 1
    %3181 = vsyncpa [#allocation21], 1

</llo_original>
